<compile_context>
chip_gen: v7x
topology: tpu7x:2x2x1
jax: 0.10.0
libtpu: 0.0.40
codegen_flags: <defaults>
</compile_context>

<pallas_src>
import jax
import jax.numpy as jnp
from jax import lax
from jax.experimental import pallas as pl
from jax.experimental.pallas import tpu as pltpu


# ----------------------------------------------------------------------------
# Pallas kernel
# ----------------------------------------------------------------------------
def _make_kernel(num_layers, T, BP, D, H, A, O):
    """Kernel for fixed static shapes.

    Ref order:
      x_flat (T*BP, D)                               [time-major, batch padded to BP]
      per layer: w_ih (Din,4H), w_hh (H,4H), b (1,4H)  [b = b_ih + b_hh]
      wa1 (H,A), ba1 (1,A), wa2 (A,1), ba2 (1,) [SMEM], wo (H,O), bo (1,O)
      out (BP, O)
      scratch: seq (T*BP, H)
    """

    def kernel(*refs):
        idx = 0
        x_ref = refs[idx]; idx += 1
        layer_refs = []
        for _ in range(num_layers):
            layer_refs.append((refs[idx], refs[idx + 1], refs[idx + 2]))
            idx += 3
        wa1_ref, ba1_ref, wa2_ref, ba2_ref, wo_ref, bo_ref = refs[idx:idx + 6]
        idx += 6
        out_ref = refs[idx]; idx += 1
        seq_ref = refs[idx]

        # ---------------- stacked LSTM (PyTorch gate order: i, f, g, o) -----
        for layer, (wih_ref, whh_ref, b_ref) in enumerate(layer_refs):
            src_ref = x_ref if layer == 0 else seq_ref

            # Hoisted input projection: one big MXU matmul over all time steps.
            gx = (jnp.dot(src_ref[...], wih_ref[...],
                          preferred_element_type=jnp.float32)
                  + b_ref[...])                       # (T*BP, 4H)
            whh = whh_ref[...]                        # (H, 4H)

            h = jnp.zeros((BP, H), jnp.float32)       # state lives in vregs
            c = jnp.zeros((BP, H), jnp.float32)

            # Fully unrolled serial recurrence (T is static and small); only
            # h @ W_hh + gate math sits on the critical path per step.
            for t in range(T):
                gates = gx[t * BP:(t + 1) * BP, :] + jnp.dot(
                    h, whh, preferred_element_type=jnp.float32)   # (BP, 4H)
                sig = jax.nn.sigmoid(gates)           # single EUP pass on 4H lanes
                i_g = sig[:, 0 * H:1 * H]
                f_g = sig[:, 1 * H:2 * H]
                o_g = sig[:, 3 * H:4 * H]
                g_g = jnp.tanh(gates[:, 2 * H:3 * H])
                c = f_g * c + i_g * g_g
                h = o_g * jnp.tanh(c)
                # 8-sublane-aligned store of this step's output (flat layout).
                seq_ref[t * BP:(t + 1) * BP, :] = h

        # ---------------- attention: Linear -> ReLU -> Linear ----------------
        seq = seq_ref[...]                                        # (T*BP, H), no reshape
        a1 = jnp.maximum(
            jnp.dot(seq, wa1_ref[...], preferred_element_type=jnp.float32)
            + ba1_ref[...], 0.0)                                  # (T*BP, A)
        scores = (jnp.dot(a1, wa2_ref[...], preferred_element_type=jnp.float32)
                  + ba2_ref[0])                                   # (T*BP, 1)

        # -------- softmax over time + weighted sum, chunked (no repack) ------
        m = scores[0:BP, :]
        for t in range(1, T):
            m = jnp.maximum(m, scores[t * BP:(t + 1) * BP, :])    # (BP, 1)

        denom = jnp.zeros((BP, 1), jnp.float32)
        ctx = jnp.zeros((BP, H), jnp.float32)
        for t in range(T):
            e = jnp.exp(scores[t * BP:(t + 1) * BP, :] - m)       # (BP, 1)
            denom = denom + e
            ctx = ctx + e * seq[t * BP:(t + 1) * BP, :]
        ctx = ctx / denom                                         # (BP, H)

        # ---------------- output projection (lane-dense O) -------------------
        out_ref[...] = (jnp.dot(ctx, wo_ref[...],
                                preferred_element_type=jnp.float32)
                        + bo_ref[...])

    return kernel


# ----------------------------------------------------------------------------
# Wrapper: fuse the three branches (shared weights) into ONE pallas_call
# ----------------------------------------------------------------------------
def attention_model_forward(x, x1, x2, params):
    """Mirrors AttentionModel.forward: same weights applied to x, x1, x2."""
    B, T, D = x.shape
    lstm = params["lstm"]
    num_layers = len(lstm)
    H = lstm[0][1].shape[0]
    A = params["wa1"].shape[1]
    O = params["wo"].shape[1]

    BF = 3 * B                          # fused batch
    BP = max(8, ((BF + 7) // 8) * 8)    # pad to full sublane groups

    # (3B, T, D) -> time-major (T, BP, D) with zero padding rows -> flat (T*BP, D)
    xs = jnp.concatenate([x, x1, x2], axis=0).astype(jnp.float32)
    xs = jnp.transpose(xs, (1, 0, 2))
    xs = jnp.pad(xs, ((0, 0), (0, BP - BF), (0, 0)))
    x_flat = xs.reshape(T * BP, D)

    inputs = [x_flat]
    for (wih, whh, b) in lstm:
        inputs += [wih, whh, b]
    inputs += [params["wa1"], params["ba1"], params["wa2"],
               params["ba2"].reshape(1),             # scalar bias -> SMEM
               params["wo"], params["bo"]]

    vmem = pl.BlockSpec(memory_space=pltpu.MemorySpace.VMEM)
    smem = pl.BlockSpec(memory_space=pltpu.MemorySpace.SMEM)
    in_specs = [vmem] * (1 + 3 * num_layers) + [vmem, vmem, vmem, smem, vmem, vmem]

    kernel = _make_kernel(num_layers, T, BP, D, H, A, O)

    out_full = pl.pallas_call(
        kernel,
        out_shape=jax.ShapeDtypeStruct((BP, O), jnp.float32),
        in_specs=in_specs,
        out_specs=vmem,
        scratch_shapes=[
            pltpu.VMEM((T * BP, H), jnp.float32),    # flat LSTM output sequence
        ],
    )(*inputs)

    # TODO(synk): at production shapes (large T*B*H) tile over batch via a
    # BlockSpec grid (and shard it across TCs on v7x); a grid would only add
    # serial recurrence passes at these tiny shapes, so it is omitted here.
    out = out_full[:BF]
    return out[0:B], out[B:2 * B], out[2 * B:3 * B]


# ----------------------------------------------------------------------------
# Pure-JAX reference (for correctness check)
# ----------------------------------------------------------------------------
def reference_branch(x, params):
    B, T, D = x.shape
    h_seq = x
    for (wih, whh, b) in params["lstm"]:
        H = whh.shape[0]

        def step(carry, x_t):
            h, c = carry
            gates = x_t @ wih + h @ whh + b[0]
            i = jax.nn.sigmoid(gates[:, :H])
            f = jax.nn.sigmoid(gates[:, H:2 * H])
            g = jnp.tanh(gates[:, 2 * H:3 * H])
            o = jax.nn.sigmoid(gates[:, 3 * H:])
            c = f * c + i * g
            h = o * jnp.tanh(c)
            return (h, c), h

        init = (jnp.zeros((B, H), jnp.float32), jnp.zeros((B, H), jnp.float32))
        _, ys = lax.scan(step, init, jnp.transpose(h_seq, (1, 0, 2)))
        h_seq = jnp.transpose(ys, (1, 0, 2))            # (B, T, H)

    a1 = jax.nn.relu(h_seq @ params["wa1"] + params["ba1"][0])
    scores = a1 @ params["wa2"] + params["ba2"][0]      # (B, T, 1)
    alpha = jax.nn.softmax(scores, axis=1)
    ctx = jnp.sum(alpha * h_seq, axis=1)                # (B, H)
    return ctx @ params["wo"] + params["bo"][0]


# ----------------------------------------------------------------------------
# Deterministic parameter init + demo
# ----------------------------------------------------------------------------
def init_params(key, input_dim, hidden_dim, num_layers, output_dim, attn_dim=128):
    def uni(k, shape, scale):
        return jax.random.uniform(k, shape, jnp.float32, -scale, scale)

    keys = iter(jax.random.split(key, 4 * num_layers + 8))
    s = 1.0 / jnp.sqrt(hidden_dim)

    lstm = []
    for layer in range(num_layers):
        d_in = input_dim if layer == 0 else hidden_dim
        w_ih = uni(next(keys), (d_in, 4 * hidden_dim), s)      # pre-transposed
        w_hh = uni(next(keys), (hidden_dim, 4 * hidden_dim), s)
        b_ih = uni(next(keys), (1, 4 * hidden_dim), s)
        b_hh = uni(next(keys), (1, 4 * hidden_dim), s)
        lstm.append((w_ih, w_hh, b_ih + b_hh))                 # PyTorch adds both

    params = {
        "lstm": lstm,
        "wa1": uni(next(keys), (hidden_dim, attn_dim), 1.0 / jnp.sqrt(hidden_dim)),
        "ba1": uni(next(keys), (1, attn_dim), 1.0 / jnp.sqrt(hidden_dim)),
        "wa2": uni(next(keys), (attn_dim, 1), 1.0 / jnp.sqrt(attn_dim)),
        "ba2": uni(next(keys), (1, 1), 1.0 / jnp.sqrt(attn_dim)),
        "wo": uni(next(keys), (hidden_dim, output_dim), 1.0 / jnp.sqrt(hidden_dim)),
        "bo": uni(next(keys), (1, output_dim), 1.0 / jnp.sqrt(hidden_dim)),
    }
    return params


if __name__ == "__main__":
    # Small shapes consistent with the module: channel (input_dim) = 4,
    # hidden_dim = 32, num_layers = 2, output_dim = 128, batch = 2, seq = 8.
    B, T = 2, 8
    input_dim, hidden_dim, num_layers, output_dim = 4, 32, 2, 128

    key = jax.random.PRNGKey(0)
    kp, kx, kx1, kx2 = jax.random.split(key, 4)
    params = init_params(kp, input_dim, hidden_dim, num_layers, output_dim)

    x = jax.random.normal(kx, (B, T, input_dim), jnp.float32)
    x1 = jax.random.normal(kx1, (B, T, input_dim), jnp.float32)
    x2 = jax.random.normal(kx2, (B, T, input_dim), jnp.float32)

    out0, out1, out2 = jax.block_until_ready(
        attention_model_forward(x, x1, x2, params))

    # Verify against pure-JAX reference.
    ref0 = reference_branch(x, params)
    ref1 = reference_branch(x1, params)
    ref2 = reference_branch(x2, params)
    for got, ref in ((out0, ref0), (out1, ref1), (out2, ref2)):
        assert got.shape == (B, output_dim)
        assert jnp.allclose(got, ref, rtol=5e-5, atol=5e-5), (
            float(jnp.max(jnp.abs(got - ref))))

    print("KERNEL_OK")
</pallas_src>

<mosaic_0001>
module attributes {stable_mosaic.version = 11 : i64} {
  func.func @kernel(%arg0: memref<64x4xf32, #tpu.memory_space<vmem>>, %arg1: memref<4x128xf32, #tpu.memory_space<vmem>>, %arg2: memref<32x128xf32, #tpu.memory_space<vmem>>, %arg3: memref<1x128xf32, #tpu.memory_space<vmem>>, %arg4: memref<32x128xf32, #tpu.memory_space<vmem>>, %arg5: memref<32x128xf32, #tpu.memory_space<vmem>>, %arg6: memref<1x128xf32, #tpu.memory_space<vmem>>, %arg7: memref<32x128xf32, #tpu.memory_space<vmem>>, %arg8: memref<1x128xf32, #tpu.memory_space<vmem>>, %arg9: memref<128x1xf32, #tpu.memory_space<vmem>>, %arg10: memref<1xf32, #tpu.memory_space<smem>>, %arg11: memref<32x128xf32, #tpu.memory_space<vmem>>, %arg12: memref<1x128xf32, #tpu.memory_space<vmem>>, %arg13: memref<8x128xf32, #tpu.memory_space<vmem>>, %arg14: memref<64x32xf32, #tpu.memory_space<vmem>>) attributes {dimension_semantics = [], scalar_prefetch = 0 : i64, scratch_operands = 1 : i64, tpu.core_type = #tpu.core_type<tc>} {
    %c0 = arith.constant 0 : index
    %c0_0 = arith.constant 0 : index
    %0 = vector.load %arg0[%c0, %c0_0] : memref<64x4xf32, #tpu.memory_space<vmem>>, vector<64x4xf32>
    %c0_1 = arith.constant 0 : index
    %c0_2 = arith.constant 0 : index
    %1 = vector.load %arg1[%c0_1, %c0_2] : memref<4x128xf32, #tpu.memory_space<vmem>>, vector<4x128xf32>
    %cst = arith.constant dense<0.000000e+00> : vector<64x128xf32>
    %2 = tpu.matmul %0, %1, %cst {dimension_numbers = #tpu.dot_dimension_numbers<[1], [0], [0], [1], [0, 0, 1, 1], [], []>} : vector<64x4xf32>, vector<4x128xf32>, vector<64x128xf32> -> vector<64x128xf32>
    %c0_3 = arith.constant 0 : index
    %c0_4 = arith.constant 0 : index
    %3 = vector.load %arg3[%c0_3, %c0_4] : memref<1x128xf32, #tpu.memory_space<vmem>>, vector<1x128xf32>
    %4 = vector.broadcast %3 : vector<1x128xf32> to vector<64x128xf32>
    %5 = arith.addf %2, %4 : vector<64x128xf32>
    %c0_5 = arith.constant 0 : index
    %c0_6 = arith.constant 0 : index
    %6 = vector.load %arg2[%c0_5, %c0_6] : memref<32x128xf32, #tpu.memory_space<vmem>>, vector<32x128xf32>
    %cst_7 = arith.constant 0.000000e+00 : f32
    %7 = vector.broadcast %cst_7 : f32 to vector<8x32xf32>
    %cst_8 = arith.constant 0.000000e+00 : f32
    %8 = vector.broadcast %cst_8 : f32 to vector<8x32xf32>
    %9 = vector.extract_strided_slice %5 {offsets = [0, 0], sizes = [8, 128], strides = [1, 1]} : vector<64x128xf32> to vector<8x128xf32>
    %cst_9 = arith.constant dense<0.000000e+00> : vector<8x128xf32>
    %10 = tpu.matmul %7, %6, %cst_9 {dimension_numbers = #tpu.dot_dimension_numbers<[1], [0], [0], [1], [0, 0, 1, 1], [], []>} : vector<8x32xf32>, vector<32x128xf32>, vector<8x128xf32> -> vector<8x128xf32>
    %11 = arith.addf %9, %10 : vector<8x128xf32>
    %12 = arith.negf %11 : vector<8x128xf32>
    %13 = math.exp %12 : vector<8x128xf32>
    %cst_10 = arith.constant 1.000000e+00 : f32
    %14 = vector.broadcast %cst_10 : f32 to vector<8x128xf32>
    %15 = arith.addf %14, %13 : vector<8x128xf32>
    %16 = arith.divf %14, %15 : vector<8x128xf32>
    %17 = vector.extract_strided_slice %16 {offsets = [0, 0], sizes = [8, 32], strides = [1, 1]} : vector<8x128xf32> to vector<8x32xf32>
    %18 = vector.extract_strided_slice %16 {offsets = [0, 32], sizes = [8, 32], strides = [1, 1]} : vector<8x128xf32> to vector<8x32xf32>
    %19 = vector.extract_strided_slice %16 {offsets = [0, 96], sizes = [8, 32], strides = [1, 1]} : vector<8x128xf32> to vector<8x32xf32>
    %20 = vector.extract_strided_slice %11 {offsets = [0, 64], sizes = [8, 32], strides = [1, 1]} : vector<8x128xf32> to vector<8x32xf32>
    %21 = math.tanh %20 : vector<8x32xf32>
    %22 = arith.mulf %18, %8 : vector<8x32xf32>
    %23 = arith.mulf %17, %21 : vector<8x32xf32>
    %24 = arith.addf %22, %23 : vector<8x32xf32>
    %25 = math.tanh %24 : vector<8x32xf32>
    %26 = arith.mulf %19, %25 : vector<8x32xf32>
    %c0_11 = arith.constant 0 : index
    %c0_12 = arith.constant 0 : index
    %27 = vector.load %arg14[%c0_11, %c0_12] : memref<64x32xf32, #tpu.memory_space<vmem>>, vector<8x32xf32>
    tpu.vector_store %arg14[%c0_11, %c0_12], %26 {strides = array<i32>} : memref<64x32xf32, #tpu.memory_space<vmem>>, vector<8x32xf32>,
    %28 = vector.extract_strided_slice %5 {offsets = [8, 0], sizes = [8, 128], strides = [1, 1]} : vector<64x128xf32> to vector<8x128xf32>
    %cst_13 = arith.constant dense<0.000000e+00> : vector<8x128xf32>
    %29 = tpu.matmul %26, %6, %cst_13 {dimension_numbers = #tpu.dot_dimension_numbers<[1], [0], [0], [1], [0, 0, 1, 1], [], []>} : vector<8x32xf32>, vector<32x128xf32>, vector<8x128xf32> -> vector<8x128xf32>
    %30 = arith.addf %28, %29 : vector<8x128xf32>
    %31 = arith.negf %30 : vector<8x128xf32>
    %32 = math.exp %31 : vector<8x128xf32>
    %cst_14 = arith.constant 1.000000e+00 : f32
    %33 = vector.broadcast %cst_14 : f32 to vector<8x128xf32>
    %34 = arith.addf %33, %32 : vector<8x128xf32>
    %35 = arith.divf %33, %34 : vector<8x128xf32>
    %36 = vector.extract_strided_slice %35 {offsets = [0, 0], sizes = [8, 32], strides = [1, 1]} : vector<8x128xf32> to vector<8x32xf32>
    %37 = vector.extract_strided_slice %35 {offsets = [0, 32], sizes = [8, 32], strides = [1, 1]} : vector<8x128xf32> to vector<8x32xf32>
    %38 = vector.extract_strided_slice %35 {offsets = [0, 96], sizes = [8, 32], strides = [1, 1]} : vector<8x128xf32> to vector<8x32xf32>
    %39 = vector.extract_strided_slice %30 {offsets = [0, 64], sizes = [8, 32], strides = [1, 1]} : vector<8x128xf32> to vector<8x32xf32>
    %40 = math.tanh %39 : vector<8x32xf32>
    %41 = arith.mulf %37, %24 : vector<8x32xf32>
    %42 = arith.mulf %36, %40 : vector<8x32xf32>
    %43 = arith.addf %41, %42 : vector<8x32xf32>
    %44 = math.tanh %43 : vector<8x32xf32>
    %45 = arith.mulf %38, %44 : vector<8x32xf32>
    %c8 = arith.constant 8 : index
    %c0_15 = arith.constant 0 : index
    %46 = vector.load %arg14[%c8, %c0_15] : memref<64x32xf32, #tpu.memory_space<vmem>>, vector<8x32xf32>
    tpu.vector_store %arg14[%c8, %c0_15], %45 {strides = array<i32>} : memref<64x32xf32, #tpu.memory_space<vmem>>, vector<8x32xf32>,
    %47 = vector.extract_strided_slice %5 {offsets = [16, 0], sizes = [8, 128], strides = [1, 1]} : vector<64x128xf32> to vector<8x128xf32>
    %cst_16 = arith.constant dense<0.000000e+00> : vector<8x128xf32>
    %48 = tpu.matmul %45, %6, %cst_16 {dimension_numbers = #tpu.dot_dimension_numbers<[1], [0], [0], [1], [0, 0, 1, 1], [], []>} : vector<8x32xf32>, vector<32x128xf32>, vector<8x128xf32> -> vector<8x128xf32>
    %49 = arith.addf %47, %48 : vector<8x128xf32>
    %50 = arith.negf %49 : vector<8x128xf32>
    %51 = math.exp %50 : vector<8x128xf32>
    %cst_17 = arith.constant 1.000000e+00 : f32
    %52 = vector.broadcast %cst_17 : f32 to vector<8x128xf32>
    %53 = arith.addf %52, %51 : vector<8x128xf32>
    %54 = arith.divf %52, %53 : vector<8x128xf32>
    %55 = vector.extract_strided_slice %54 {offsets = [0, 0], sizes = [8, 32], strides = [1, 1]} : vector<8x128xf32> to vector<8x32xf32>
    %56 = vector.extract_strided_slice %54 {offsets = [0, 32], sizes = [8, 32], strides = [1, 1]} : vector<8x128xf32> to vector<8x32xf32>
    %57 = vector.extract_strided_slice %54 {offsets = [0, 96], sizes = [8, 32], strides = [1, 1]} : vector<8x128xf32> to vector<8x32xf32>
    %58 = vector.extract_strided_slice %49 {offsets = [0, 64], sizes = [8, 32], strides = [1, 1]} : vector<8x128xf32> to vector<8x32xf32>
    %59 = math.tanh %58 : vector<8x32xf32>
    %60 = arith.mulf %56, %43 : vector<8x32xf32>
    %61 = arith.mulf %55, %59 : vector<8x32xf32>
    %62 = arith.addf %60, %61 : vector<8x32xf32>
    %63 = math.tanh %62 : vector<8x32xf32>
    %64 = arith.mulf %57, %63 : vector<8x32xf32>
    %c16 = arith.constant 16 : index
    %c0_18 = arith.constant 0 : index
    %65 = vector.load %arg14[%c16, %c0_18] : memref<64x32xf32, #tpu.memory_space<vmem>>, vector<8x32xf32>
    tpu.vector_store %arg14[%c16, %c0_18], %64 {strides = array<i32>} : memref<64x32xf32, #tpu.memory_space<vmem>>, vector<8x32xf32>,
    %66 = vector.extract_strided_slice %5 {offsets = [24, 0], sizes = [8, 128], strides = [1, 1]} : vector<64x128xf32> to vector<8x128xf32>
    %cst_19 = arith.constant dense<0.000000e+00> : vector<8x128xf32>
    %67 = tpu.matmul %64, %6, %cst_19 {dimension_numbers = #tpu.dot_dimension_numbers<[1], [0], [0], [1], [0, 0, 1, 1], [], []>} : vector<8x32xf32>, vector<32x128xf32>, vector<8x128xf32> -> vector<8x128xf32>
    %68 = arith.addf %66, %67 : vector<8x128xf32>
    %69 = arith.negf %68 : vector<8x128xf32>
    %70 = math.exp %69 : vector<8x128xf32>
    %cst_20 = arith.constant 1.000000e+00 : f32
    %71 = vector.broadcast %cst_20 : f32 to vector<8x128xf32>
    %72 = arith.addf %71, %70 : vector<8x128xf32>
    %73 = arith.divf %71, %72 : vector<8x128xf32>
    %74 = vector.extract_strided_slice %73 {offsets = [0, 0], sizes = [8, 32], strides = [1, 1]} : vector<8x128xf32> to vector<8x32xf32>
    %75 = vector.extract_strided_slice %73 {offsets = [0, 32], sizes = [8, 32], strides = [1, 1]} : vector<8x128xf32> to vector<8x32xf32>
    %76 = vector.extract_strided_slice %73 {offsets = [0, 96], sizes = [8, 32], strides = [1, 1]} : vector<8x128xf32> to vector<8x32xf32>
    %77 = vector.extract_strided_slice %68 {offsets = [0, 64], sizes = [8, 32], strides = [1, 1]} : vector<8x128xf32> to vector<8x32xf32>
    %78 = math.tanh %77 : vector<8x32xf32>
    %79 = arith.mulf %75, %62 : vector<8x32xf32>
    %80 = arith.mulf %74, %78 : vector<8x32xf32>
    %81 = arith.addf %79, %80 : vector<8x32xf32>
    %82 = math.tanh %81 : vector<8x32xf32>
    %83 = arith.mulf %76, %82 : vector<8x32xf32>
    %c24 = arith.constant 24 : index
    %c0_21 = arith.constant 0 : index
    %84 = vector.load %arg14[%c24, %c0_21] : memref<64x32xf32, #tpu.memory_space<vmem>>, vector<8x32xf32>
    tpu.vector_store %arg14[%c24, %c0_21], %83 {strides = array<i32>} : memref<64x32xf32, #tpu.memory_space<vmem>>, vector<8x32xf32>,
    %85 = vector.extract_strided_slice %5 {offsets = [32, 0], sizes = [8, 128], strides = [1, 1]} : vector<64x128xf32> to vector<8x128xf32>
    %cst_22 = arith.constant dense<0.000000e+00> : vector<8x128xf32>
    %86 = tpu.matmul %83, %6, %cst_22 {dimension_numbers = #tpu.dot_dimension_numbers<[1], [0], [0], [1], [0, 0, 1, 1], [], []>} : vector<8x32xf32>, vector<32x128xf32>, vector<8x128xf32> -> vector<8x128xf32>
    %87 = arith.addf %85, %86 : vector<8x128xf32>
    %88 = arith.negf %87 : vector<8x128xf32>
    %89 = math.exp %88 : vector<8x128xf32>
    %cst_23 = arith.constant 1.000000e+00 : f32
    %90 = vector.broadcast %cst_23 : f32 to vector<8x128xf32>
    %91 = arith.addf %90, %89 : vector<8x128xf32>
    %92 = arith.divf %90, %91 : vector<8x128xf32>
    %93 = vector.extract_strided_slice %92 {offsets = [0, 0], sizes = [8, 32], strides = [1, 1]} : vector<8x128xf32> to vector<8x32xf32>
    %94 = vector.extract_strided_slice %92 {offsets = [0, 32], sizes = [8, 32], strides = [1, 1]} : vector<8x128xf32> to vector<8x32xf32>
    %95 = vector.extract_strided_slice %92 {offsets = [0, 96], sizes = [8, 32], strides = [1, 1]} : vector<8x128xf32> to vector<8x32xf32>
    %96 = vector.extract_strided_slice %87 {offsets = [0, 64], sizes = [8, 32], strides = [1, 1]} : vector<8x128xf32> to vector<8x32xf32>
    %97 = math.tanh %96 : vector<8x32xf32>
    %98 = arith.mulf %94, %81 : vector<8x32xf32>
    %99 = arith.mulf %93, %97 : vector<8x32xf32>
    %100 = arith.addf %98, %99 : vector<8x32xf32>
    %101 = math.tanh %100 : vector<8x32xf32>
    %102 = arith.mulf %95, %101 : vector<8x32xf32>
    %c32 = arith.constant 32 : index
    %c0_24 = arith.constant 0 : index
    %103 = vector.load %arg14[%c32, %c0_24] : memref<64x32xf32, #tpu.memory_space<vmem>>, vector<8x32xf32>
    tpu.vector_store %arg14[%c32, %c0_24], %102 {strides = array<i32>} : memref<64x32xf32, #tpu.memory_space<vmem>>, vector<8x32xf32>,
    %104 = vector.extract_strided_slice %5 {offsets = [40, 0], sizes = [8, 128], strides = [1, 1]} : vector<64x128xf32> to vector<8x128xf32>
    %cst_25 = arith.constant dense<0.000000e+00> : vector<8x128xf32>
    %105 = tpu.matmul %102, %6, %cst_25 {dimension_numbers = #tpu.dot_dimension_numbers<[1], [0], [0], [1], [0, 0, 1, 1], [], []>} : vector<8x32xf32>, vector<32x128xf32>, vector<8x128xf32> -> vector<8x128xf32>
    %106 = arith.addf %104, %105 : vector<8x128xf32>
    %107 = arith.negf %106 : vector<8x128xf32>
    %108 = math.exp %107 : vector<8x128xf32>
    %cst_26 = arith.constant 1.000000e+00 : f32
    %109 = vector.broadcast %cst_26 : f32 to vector<8x128xf32>
    %110 = arith.addf %109, %108 : vector<8x128xf32>
    %111 = arith.divf %109, %110 : vector<8x128xf32>
    %112 = vector.extract_strided_slice %111 {offsets = [0, 0], sizes = [8, 32], strides = [1, 1]} : vector<8x128xf32> to vector<8x32xf32>
    %113 = vector.extract_strided_slice %111 {offsets = [0, 32], sizes = [8, 32], strides = [1, 1]} : vector<8x128xf32> to vector<8x32xf32>
    %114 = vector.extract_strided_slice %111 {offsets = [0, 96], sizes = [8, 32], strides = [1, 1]} : vector<8x128xf32> to vector<8x32xf32>
    %115 = vector.extract_strided_slice %106 {offsets = [0, 64], sizes = [8, 32], strides = [1, 1]} : vector<8x128xf32> to vector<8x32xf32>
    %116 = math.tanh %115 : vector<8x32xf32>
    %117 = arith.mulf %113, %100 : vector<8x32xf32>
    %118 = arith.mulf %112, %116 : vector<8x32xf32>
    %119 = arith.addf %117, %118 : vector<8x32xf32>
    %120 = math.tanh %119 : vector<8x32xf32>
    %121 = arith.mulf %114, %120 : vector<8x32xf32>
    %c40 = arith.constant 40 : index
    %c0_27 = arith.constant 0 : index
    %122 = vector.load %arg14[%c40, %c0_27] : memref<64x32xf32, #tpu.memory_space<vmem>>, vector<8x32xf32>
    tpu.vector_store %arg14[%c40, %c0_27], %121 {strides = array<i32>} : memref<64x32xf32, #tpu.memory_space<vmem>>, vector<8x32xf32>,
    %123 = vector.extract_strided_slice %5 {offsets = [48, 0], sizes = [8, 128], strides = [1, 1]} : vector<64x128xf32> to vector<8x128xf32>
    %cst_28 = arith.constant dense<0.000000e+00> : vector<8x128xf32>
    %124 = tpu.matmul %121, %6, %cst_28 {dimension_numbers = #tpu.dot_dimension_numbers<[1], [0], [0], [1], [0, 0, 1, 1], [], []>} : vector<8x32xf32>, vector<32x128xf32>, vector<8x128xf32> -> vector<8x128xf32>
    %125 = arith.addf %123, %124 : vector<8x128xf32>
    %126 = arith.negf %125 : vector<8x128xf32>
    %127 = math.exp %126 : vector<8x128xf32>
    %cst_29 = arith.constant 1.000000e+00 : f32
    %128 = vector.broadcast %cst_29 : f32 to vector<8x128xf32>
    %129 = arith.addf %128, %127 : vector<8x128xf32>
    %130 = arith.divf %128, %129 : vector<8x128xf32>
    %131 = vector.extract_strided_slice %130 {offsets = [0, 0], sizes = [8, 32], strides = [1, 1]} : vector<8x128xf32> to vector<8x32xf32>
    %132 = vector.extract_strided_slice %130 {offsets = [0, 32], sizes = [8, 32], strides = [1, 1]} : vector<8x128xf32> to vector<8x32xf32>
    %133 = vector.extract_strided_slice %130 {offsets = [0, 96], sizes = [8, 32], strides = [1, 1]} : vector<8x128xf32> to vector<8x32xf32>
    %134 = vector.extract_strided_slice %125 {offsets = [0, 64], sizes = [8, 32], strides = [1, 1]} : vector<8x128xf32> to vector<8x32xf32>
    %135 = math.tanh %134 : vector<8x32xf32>
    %136 = arith.mulf %132, %119 : vector<8x32xf32>
    %137 = arith.mulf %131, %135 : vector<8x32xf32>
    %138 = arith.addf %136, %137 : vector<8x32xf32>
    %139 = math.tanh %138 : vector<8x32xf32>
    %140 = arith.mulf %133, %139 : vector<8x32xf32>
    %c48 = arith.constant 48 : index
    %c0_30 = arith.constant 0 : index
    %141 = vector.load %arg14[%c48, %c0_30] : memref<64x32xf32, #tpu.memory_space<vmem>>, vector<8x32xf32>
    tpu.vector_store %arg14[%c48, %c0_30], %140 {strides = array<i32>} : memref<64x32xf32, #tpu.memory_space<vmem>>, vector<8x32xf32>,
    %142 = vector.extract_strided_slice %5 {offsets = [56, 0], sizes = [8, 128], strides = [1, 1]} : vector<64x128xf32> to vector<8x128xf32>
    %cst_31 = arith.constant dense<0.000000e+00> : vector<8x128xf32>
    %143 = tpu.matmul %140, %6, %cst_31 {dimension_numbers = #tpu.dot_dimension_numbers<[1], [0], [0], [1], [0, 0, 1, 1], [], []>} : vector<8x32xf32>, vector<32x128xf32>, vector<8x128xf32> -> vector<8x128xf32>
    %144 = arith.addf %142, %143 : vector<8x128xf32>
    %145 = arith.negf %144 : vector<8x128xf32>
    %146 = math.exp %145 : vector<8x128xf32>
    %cst_32 = arith.constant 1.000000e+00 : f32
    %147 = vector.broadcast %cst_32 : f32 to vector<8x128xf32>
    %148 = arith.addf %147, %146 : vector<8x128xf32>
    %149 = arith.divf %147, %148 : vector<8x128xf32>
    %150 = vector.extract_strided_slice %149 {offsets = [0, 0], sizes = [8, 32], strides = [1, 1]} : vector<8x128xf32> to vector<8x32xf32>
    %151 = vector.extract_strided_slice %149 {offsets = [0, 32], sizes = [8, 32], strides = [1, 1]} : vector<8x128xf32> to vector<8x32xf32>
    %152 = vector.extract_strided_slice %149 {offsets = [0, 96], sizes = [8, 32], strides = [1, 1]} : vector<8x128xf32> to vector<8x32xf32>
    %153 = vector.extract_strided_slice %144 {offsets = [0, 64], sizes = [8, 32], strides = [1, 1]} : vector<8x128xf32> to vector<8x32xf32>
    %154 = math.tanh %153 : vector<8x32xf32>
    %155 = arith.mulf %151, %138 : vector<8x32xf32>
    %156 = arith.mulf %150, %154 : vector<8x32xf32>
    %157 = arith.addf %155, %156 : vector<8x32xf32>
    %158 = math.tanh %157 : vector<8x32xf32>
    %159 = arith.mulf %152, %158 : vector<8x32xf32>
    %c56 = arith.constant 56 : index
    %c0_33 = arith.constant 0 : index
    %160 = vector.load %arg14[%c56, %c0_33] : memref<64x32xf32, #tpu.memory_space<vmem>>, vector<8x32xf32>
    tpu.vector_store %arg14[%c56, %c0_33], %159 {strides = array<i32>} : memref<64x32xf32, #tpu.memory_space<vmem>>, vector<8x32xf32>,
    %c0_34 = arith.constant 0 : index
    %c0_35 = arith.constant 0 : index
    %161 = vector.load %arg14[%c0_34, %c0_35] : memref<64x32xf32, #tpu.memory_space<vmem>>, vector<64x32xf32>
    %c0_36 = arith.constant 0 : index
    %c0_37 = arith.constant 0 : index
    %162 = vector.load %arg4[%c0_36, %c0_37] : memref<32x128xf32, #tpu.memory_space<vmem>>, vector<32x128xf32>
    %cst_38 = arith.constant dense<0.000000e+00> : vector<64x128xf32>
    %163 = tpu.matmul %161, %162, %cst_38 {dimension_numbers = #tpu.dot_dimension_numbers<[1], [0], [0], [1], [0, 0, 1, 1], [], []>} : vector<64x32xf32>, vector<32x128xf32>, vector<64x128xf32> -> vector<64x128xf32>
    %c0_39 = arith.constant 0 : index
    %c0_40 = arith.constant 0 : index
    %164 = vector.load %arg6[%c0_39, %c0_40] : memref<1x128xf32, #tpu.memory_space<vmem>>, vector<1x128xf32>
    %165 = vector.broadcast %164 : vector<1x128xf32> to vector<64x128xf32>
    %166 = arith.addf %163, %165 : vector<64x128xf32>
    %c0_41 = arith.constant 0 : index
    %c0_42 = arith.constant 0 : index
    %167 = vector.load %arg5[%c0_41, %c0_42] : memref<32x128xf32, #tpu.memory_space<vmem>>, vector<32x128xf32>
    %cst_43 = arith.constant 0.000000e+00 : f32
    %168 = vector.broadcast %cst_43 : f32 to vector<8x32xf32>
    %cst_44 = arith.constant 0.000000e+00 : f32
    %169 = vector.broadcast %cst_44 : f32 to vector<8x32xf32>
    %170 = vector.extract_strided_slice %166 {offsets = [0, 0], sizes = [8, 128], strides = [1, 1]} : vector<64x128xf32> to vector<8x128xf32>
    %cst_45 = arith.constant dense<0.000000e+00> : vector<8x128xf32>
    %171 = tpu.matmul %168, %167, %cst_45 {dimension_numbers = #tpu.dot_dimension_numbers<[1], [0], [0], [1], [0, 0, 1, 1], [], []>} : vector<8x32xf32>, vector<32x128xf32>, vector<8x128xf32> -> vector<8x128xf32>
    %172 = arith.addf %170, %171 : vector<8x128xf32>
    %173 = arith.negf %172 : vector<8x128xf32>
    %174 = math.exp %173 : vector<8x128xf32>
    %cst_46 = arith.constant 1.000000e+00 : f32
    %175 = vector.broadcast %cst_46 : f32 to vector<8x128xf32>
    %176 = arith.addf %175, %174 : vector<8x128xf32>
    %177 = arith.divf %175, %176 : vector<8x128xf32>
    %178 = vector.extract_strided_slice %177 {offsets = [0, 0], sizes = [8, 32], strides = [1, 1]} : vector<8x128xf32> to vector<8x32xf32>
    %179 = vector.extract_strided_slice %177 {offsets = [0, 32], sizes = [8, 32], strides = [1, 1]} : vector<8x128xf32> to vector<8x32xf32>
    %180 = vector.extract_strided_slice %177 {offsets = [0, 96], sizes = [8, 32], strides = [1, 1]} : vector<8x128xf32> to vector<8x32xf32>
    %181 = vector.extract_strided_slice %172 {offsets = [0, 64], sizes = [8, 32], strides = [1, 1]} : vector<8x128xf32> to vector<8x32xf32>
    %182 = math.tanh %181 : vector<8x32xf32>
    %183 = arith.mulf %179, %169 : vector<8x32xf32>
    %184 = arith.mulf %178, %182 : vector<8x32xf32>
    %185 = arith.addf %183, %184 : vector<8x32xf32>
    %186 = math.tanh %185 : vector<8x32xf32>
    %187 = arith.mulf %180, %186 : vector<8x32xf32>
    %c0_47 = arith.constant 0 : index
    %c0_48 = arith.constant 0 : index
    %188 = vector.load %arg14[%c0_47, %c0_48] : memref<64x32xf32, #tpu.memory_space<vmem>>, vector<8x32xf32>
    tpu.vector_store %arg14[%c0_47, %c0_48], %187 {strides = array<i32>} : memref<64x32xf32, #tpu.memory_space<vmem>>, vector<8x32xf32>,
    %189 = vector.extract_strided_slice %166 {offsets = [8, 0], sizes = [8, 128], strides = [1, 1]} : vector<64x128xf32> to vector<8x128xf32>
    %cst_49 = arith.constant dense<0.000000e+00> : vector<8x128xf32>
    %190 = tpu.matmul %187, %167, %cst_49 {dimension_numbers = #tpu.dot_dimension_numbers<[1], [0], [0], [1], [0, 0, 1, 1], [], []>} : vector<8x32xf32>, vector<32x128xf32>, vector<8x128xf32> -> vector<8x128xf32>
    %191 = arith.addf %189, %190 : vector<8x128xf32>
    %192 = arith.negf %191 : vector<8x128xf32>
    %193 = math.exp %192 : vector<8x128xf32>
    %cst_50 = arith.constant 1.000000e+00 : f32
    %194 = vector.broadcast %cst_50 : f32 to vector<8x128xf32>
    %195 = arith.addf %194, %193 : vector<8x128xf32>
    %196 = arith.divf %194, %195 : vector<8x128xf32>
    %197 = vector.extract_strided_slice %196 {offsets = [0, 0], sizes = [8, 32], strides = [1, 1]} : vector<8x128xf32> to vector<8x32xf32>
    %198 = vector.extract_strided_slice %196 {offsets = [0, 32], sizes = [8, 32], strides = [1, 1]} : vector<8x128xf32> to vector<8x32xf32>
    %199 = vector.extract_strided_slice %196 {offsets = [0, 96], sizes = [8, 32], strides = [1, 1]} : vector<8x128xf32> to vector<8x32xf32>
    %200 = vector.extract_strided_slice %191 {offsets = [0, 64], sizes = [8, 32], strides = [1, 1]} : vector<8x128xf32> to vector<8x32xf32>
    %201 = math.tanh %200 : vector<8x32xf32>
    %202 = arith.mulf %198, %185 : vector<8x32xf32>
    %203 = arith.mulf %197, %201 : vector<8x32xf32>
    %204 = arith.addf %202, %203 : vector<8x32xf32>
    %205 = math.tanh %204 : vector<8x32xf32>
    %206 = arith.mulf %199, %205 : vector<8x32xf32>
    %c8_51 = arith.constant 8 : index
    %c0_52 = arith.constant 0 : index
    %207 = vector.load %arg14[%c8_51, %c0_52] : memref<64x32xf32, #tpu.memory_space<vmem>>, vector<8x32xf32>
    tpu.vector_store %arg14[%c8_51, %c0_52], %206 {strides = array<i32>} : memref<64x32xf32, #tpu.memory_space<vmem>>, vector<8x32xf32>,
    %208 = vector.extract_strided_slice %166 {offsets = [16, 0], sizes = [8, 128], strides = [1, 1]} : vector<64x128xf32> to vector<8x128xf32>
    %cst_53 = arith.constant dense<0.000000e+00> : vector<8x128xf32>
    %209 = tpu.matmul %206, %167, %cst_53 {dimension_numbers = #tpu.dot_dimension_numbers<[1], [0], [0], [1], [0, 0, 1, 1], [], []>} : vector<8x32xf32>, vector<32x128xf32>, vector<8x128xf32> -> vector<8x128xf32>
    %210 = arith.addf %208, %209 : vector<8x128xf32>
    %211 = arith.negf %210 : vector<8x128xf32>
    %212 = math.exp %211 : vector<8x128xf32>
    %cst_54 = arith.constant 1.000000e+00 : f32
    %213 = vector.broadcast %cst_54 : f32 to vector<8x128xf32>
    %214 = arith.addf %213, %212 : vector<8x128xf32>
    %215 = arith.divf %213, %214 : vector<8x128xf32>
    %216 = vector.extract_strided_slice %215 {offsets = [0, 0], sizes = [8, 32], strides = [1, 1]} : vector<8x128xf32> to vector<8x32xf32>
    %217 = vector.extract_strided_slice %215 {offsets = [0, 32], sizes = [8, 32], strides = [1, 1]} : vector<8x128xf32> to vector<8x32xf32>
    %218 = vector.extract_strided_slice %215 {offsets = [0, 96], sizes = [8, 32], strides = [1, 1]} : vector<8x128xf32> to vector<8x32xf32>
    %219 = vector.extract_strided_slice %210 {offsets = [0, 64], sizes = [8, 32], strides = [1, 1]} : vector<8x128xf32> to vector<8x32xf32>
    %220 = math.tanh %219 : vector<8x32xf32>
    %221 = arith.mulf %217, %204 : vector<8x32xf32>
    %222 = arith.mulf %216, %220 : vector<8x32xf32>
    %223 = arith.addf %221, %222 : vector<8x32xf32>
    %224 = math.tanh %223 : vector<8x32xf32>
    %225 = arith.mulf %218, %224 : vector<8x32xf32>
    %c16_55 = arith.constant 16 : index
    %c0_56 = arith.constant 0 : index
    %226 = vector.load %arg14[%c16_55, %c0_56] : memref<64x32xf32, #tpu.memory_space<vmem>>, vector<8x32xf32>
    tpu.vector_store %arg14[%c16_55, %c0_56], %225 {strides = array<i32>} : memref<64x32xf32, #tpu.memory_space<vmem>>, vector<8x32xf32>,
    %227 = vector.extract_strided_slice %166 {offsets = [24, 0], sizes = [8, 128], strides = [1, 1]} : vector<64x128xf32> to vector<8x128xf32>
    %cst_57 = arith.constant dense<0.000000e+00> : vector<8x128xf32>
    %228 = tpu.matmul %225, %167, %cst_57 {dimension_numbers = #tpu.dot_dimension_numbers<[1], [0], [0], [1], [0, 0, 1, 1], [], []>} : vector<8x32xf32>, vector<32x128xf32>, vector<8x128xf32> -> vector<8x128xf32>
    %229 = arith.addf %227, %228 : vector<8x128xf32>
    %230 = arith.negf %229 : vector<8x128xf32>
    %231 = math.exp %230 : vector<8x128xf32>
    %cst_58 = arith.constant 1.000000e+00 : f32
    %232 = vector.broadcast %cst_58 : f32 to vector<8x128xf32>
    %233 = arith.addf %232, %231 : vector<8x128xf32>
    %234 = arith.divf %232, %233 : vector<8x128xf32>
    %235 = vector.extract_strided_slice %234 {offsets = [0, 0], sizes = [8, 32], strides = [1, 1]} : vector<8x128xf32> to vector<8x32xf32>
    %236 = vector.extract_strided_slice %234 {offsets = [0, 32], sizes = [8, 32], strides = [1, 1]} : vector<8x128xf32> to vector<8x32xf32>
    %237 = vector.extract_strided_slice %234 {offsets = [0, 96], sizes = [8, 32], strides = [1, 1]} : vector<8x128xf32> to vector<8x32xf32>
    %238 = vector.extract_strided_slice %229 {offsets = [0, 64], sizes = [8, 32], strides = [1, 1]} : vector<8x128xf32> to vector<8x32xf32>
    %239 = math.tanh %238 : vector<8x32xf32>
    %240 = arith.mulf %236, %223 : vector<8x32xf32>
    %241 = arith.mulf %235, %239 : vector<8x32xf32>
    %242 = arith.addf %240, %241 : vector<8x32xf32>
    %243 = math.tanh %242 : vector<8x32xf32>
    %244 = arith.mulf %237, %243 : vector<8x32xf32>
    %c24_59 = arith.constant 24 : index
    %c0_60 = arith.constant 0 : index
    %245 = vector.load %arg14[%c24_59, %c0_60] : memref<64x32xf32, #tpu.memory_space<vmem>>, vector<8x32xf32>
    tpu.vector_store %arg14[%c24_59, %c0_60], %244 {strides = array<i32>} : memref<64x32xf32, #tpu.memory_space<vmem>>, vector<8x32xf32>,
    %246 = vector.extract_strided_slice %166 {offsets = [32, 0], sizes = [8, 128], strides = [1, 1]} : vector<64x128xf32> to vector<8x128xf32>
    %cst_61 = arith.constant dense<0.000000e+00> : vector<8x128xf32>
    %247 = tpu.matmul %244, %167, %cst_61 {dimension_numbers = #tpu.dot_dimension_numbers<[1], [0], [0], [1], [0, 0, 1, 1], [], []>} : vector<8x32xf32>, vector<32x128xf32>, vector<8x128xf32> -> vector<8x128xf32>
    %248 = arith.addf %246, %247 : vector<8x128xf32>
    %249 = arith.negf %248 : vector<8x128xf32>
    %250 = math.exp %249 : vector<8x128xf32>
    %cst_62 = arith.constant 1.000000e+00 : f32
    %251 = vector.broadcast %cst_62 : f32 to vector<8x128xf32>
    %252 = arith.addf %251, %250 : vector<8x128xf32>
    %253 = arith.divf %251, %252 : vector<8x128xf32>
    %254 = vector.extract_strided_slice %253 {offsets = [0, 0], sizes = [8, 32], strides = [1, 1]} : vector<8x128xf32> to vector<8x32xf32>
    %255 = vector.extract_strided_slice %253 {offsets = [0, 32], sizes = [8, 32], strides = [1, 1]} : vector<8x128xf32> to vector<8x32xf32>
    %256 = vector.extract_strided_slice %253 {offsets = [0, 96], sizes = [8, 32], strides = [1, 1]} : vector<8x128xf32> to vector<8x32xf32>
    %257 = vector.extract_strided_slice %248 {offsets = [0, 64], sizes = [8, 32], strides = [1, 1]} : vector<8x128xf32> to vector<8x32xf32>
    %258 = math.tanh %257 : vector<8x32xf32>
    %259 = arith.mulf %255, %242 : vector<8x32xf32>
    %260 = arith.mulf %254, %258 : vector<8x32xf32>
    %261 = arith.addf %259, %260 : vector<8x32xf32>
    %262 = math.tanh %261 : vector<8x32xf32>
    %263 = arith.mulf %256, %262 : vector<8x32xf32>
    %c32_63 = arith.constant 32 : index
    %c0_64 = arith.constant 0 : index
    %264 = vector.load %arg14[%c32_63, %c0_64] : memref<64x32xf32, #tpu.memory_space<vmem>>, vector<8x32xf32>
    tpu.vector_store %arg14[%c32_63, %c0_64], %263 {strides = array<i32>} : memref<64x32xf32, #tpu.memory_space<vmem>>, vector<8x32xf32>,
    %265 = vector.extract_strided_slice %166 {offsets = [40, 0], sizes = [8, 128], strides = [1, 1]} : vector<64x128xf32> to vector<8x128xf32>
    %cst_65 = arith.constant dense<0.000000e+00> : vector<8x128xf32>
    %266 = tpu.matmul %263, %167, %cst_65 {dimension_numbers = #tpu.dot_dimension_numbers<[1], [0], [0], [1], [0, 0, 1, 1], [], []>} : vector<8x32xf32>, vector<32x128xf32>, vector<8x128xf32> -> vector<8x128xf32>
    %267 = arith.addf %265, %266 : vector<8x128xf32>
    %268 = arith.negf %267 : vector<8x128xf32>
    %269 = math.exp %268 : vector<8x128xf32>
    %cst_66 = arith.constant 1.000000e+00 : f32
    %270 = vector.broadcast %cst_66 : f32 to vector<8x128xf32>
    %271 = arith.addf %270, %269 : vector<8x128xf32>
    %272 = arith.divf %270, %271 : vector<8x128xf32>
    %273 = vector.extract_strided_slice %272 {offsets = [0, 0], sizes = [8, 32], strides = [1, 1]} : vector<8x128xf32> to vector<8x32xf32>
    %274 = vector.extract_strided_slice %272 {offsets = [0, 32], sizes = [8, 32], strides = [1, 1]} : vector<8x128xf32> to vector<8x32xf32>
    %275 = vector.extract_strided_slice %272 {offsets = [0, 96], sizes = [8, 32], strides = [1, 1]} : vector<8x128xf32> to vector<8x32xf32>
    %276 = vector.extract_strided_slice %267 {offsets = [0, 64], sizes = [8, 32], strides = [1, 1]} : vector<8x128xf32> to vector<8x32xf32>
    %277 = math.tanh %276 : vector<8x32xf32>
    %278 = arith.mulf %274, %261 : vector<8x32xf32>
    %279 = arith.mulf %273, %277 : vector<8x32xf32>
    %280 = arith.addf %278, %279 : vector<8x32xf32>
    %281 = math.tanh %280 : vector<8x32xf32>
    %282 = arith.mulf %275, %281 : vector<8x32xf32>
    %c40_67 = arith.constant 40 : index
    %c0_68 = arith.constant 0 : index
    %283 = vector.load %arg14[%c40_67, %c0_68] : memref<64x32xf32, #tpu.memory_space<vmem>>, vector<8x32xf32>
    tpu.vector_store %arg14[%c40_67, %c0_68], %282 {strides = array<i32>} : memref<64x32xf32, #tpu.memory_space<vmem>>, vector<8x32xf32>,
    %284 = vector.extract_strided_slice %166 {offsets = [48, 0], sizes = [8, 128], strides = [1, 1]} : vector<64x128xf32> to vector<8x128xf32>
    %cst_69 = arith.constant dense<0.000000e+00> : vector<8x128xf32>
    %285 = tpu.matmul %282, %167, %cst_69 {dimension_numbers = #tpu.dot_dimension_numbers<[1], [0], [0], [1], [0, 0, 1, 1], [], []>} : vector<8x32xf32>, vector<32x128xf32>, vector<8x128xf32> -> vector<8x128xf32>
    %286 = arith.addf %284, %285 : vector<8x128xf32>
    %287 = arith.negf %286 : vector<8x128xf32>
    %288 = math.exp %287 : vector<8x128xf32>
    %cst_70 = arith.constant 1.000000e+00 : f32
    %289 = vector.broadcast %cst_70 : f32 to vector<8x128xf32>
    %290 = arith.addf %289, %288 : vector<8x128xf32>
    %291 = arith.divf %289, %290 : vector<8x128xf32>
    %292 = vector.extract_strided_slice %291 {offsets = [0, 0], sizes = [8, 32], strides = [1, 1]} : vector<8x128xf32> to vector<8x32xf32>
    %293 = vector.extract_strided_slice %291 {offsets = [0, 32], sizes = [8, 32], strides = [1, 1]} : vector<8x128xf32> to vector<8x32xf32>
    %294 = vector.extract_strided_slice %291 {offsets = [0, 96], sizes = [8, 32], strides = [1, 1]} : vector<8x128xf32> to vector<8x32xf32>
    %295 = vector.extract_strided_slice %286 {offsets = [0, 64], sizes = [8, 32], strides = [1, 1]} : vector<8x128xf32> to vector<8x32xf32>
    %296 = math.tanh %295 : vector<8x32xf32>
    %297 = arith.mulf %293, %280 : vector<8x32xf32>
    %298 = arith.mulf %292, %296 : vector<8x32xf32>
    %299 = arith.addf %297, %298 : vector<8x32xf32>
    %300 = math.tanh %299 : vector<8x32xf32>
    %301 = arith.mulf %294, %300 : vector<8x32xf32>
    %c48_71 = arith.constant 48 : index
    %c0_72 = arith.constant 0 : index
    %302 = vector.load %arg14[%c48_71, %c0_72] : memref<64x32xf32, #tpu.memory_space<vmem>>, vector<8x32xf32>
    tpu.vector_store %arg14[%c48_71, %c0_72], %301 {strides = array<i32>} : memref<64x32xf32, #tpu.memory_space<vmem>>, vector<8x32xf32>,
    %303 = vector.extract_strided_slice %166 {offsets = [56, 0], sizes = [8, 128], strides = [1, 1]} : vector<64x128xf32> to vector<8x128xf32>
    %cst_73 = arith.constant dense<0.000000e+00> : vector<8x128xf32>
    %304 = tpu.matmul %301, %167, %cst_73 {dimension_numbers = #tpu.dot_dimension_numbers<[1], [0], [0], [1], [0, 0, 1, 1], [], []>} : vector<8x32xf32>, vector<32x128xf32>, vector<8x128xf32> -> vector<8x128xf32>
    %305 = arith.addf %303, %304 : vector<8x128xf32>
    %306 = arith.negf %305 : vector<8x128xf32>
    %307 = math.exp %306 : vector<8x128xf32>
    %cst_74 = arith.constant 1.000000e+00 : f32
    %308 = vector.broadcast %cst_74 : f32 to vector<8x128xf32>
    %309 = arith.addf %308, %307 : vector<8x128xf32>
    %310 = arith.divf %308, %309 : vector<8x128xf32>
    %311 = vector.extract_strided_slice %310 {offsets = [0, 0], sizes = [8, 32], strides = [1, 1]} : vector<8x128xf32> to vector<8x32xf32>
    %312 = vector.extract_strided_slice %310 {offsets = [0, 32], sizes = [8, 32], strides = [1, 1]} : vector<8x128xf32> to vector<8x32xf32>
    %313 = vector.extract_strided_slice %310 {offsets = [0, 96], sizes = [8, 32], strides = [1, 1]} : vector<8x128xf32> to vector<8x32xf32>
    %314 = vector.extract_strided_slice %305 {offsets = [0, 64], sizes = [8, 32], strides = [1, 1]} : vector<8x128xf32> to vector<8x32xf32>
    %315 = math.tanh %314 : vector<8x32xf32>
    %316 = arith.mulf %312, %299 : vector<8x32xf32>
    %317 = arith.mulf %311, %315 : vector<8x32xf32>
    %318 = arith.addf %316, %317 : vector<8x32xf32>
    %319 = math.tanh %318 : vector<8x32xf32>
    %320 = arith.mulf %313, %319 : vector<8x32xf32>
    %c56_75 = arith.constant 56 : index
    %c0_76 = arith.constant 0 : index
    %321 = vector.load %arg14[%c56_75, %c0_76] : memref<64x32xf32, #tpu.memory_space<vmem>>, vector<8x32xf32>
    tpu.vector_store %arg14[%c56_75, %c0_76], %320 {strides = array<i32>} : memref<64x32xf32, #tpu.memory_space<vmem>>, vector<8x32xf32>,
    %c0_77 = arith.constant 0 : index
    %c0_78 = arith.constant 0 : index
    %322 = vector.load %arg14[%c0_77, %c0_78] : memref<64x32xf32, #tpu.memory_space<vmem>>, vector<64x32xf32>
    %c0_79 = arith.constant 0 : index
    %c0_80 = arith.constant 0 : index
    %323 = vector.load %arg7[%c0_79, %c0_80] : memref<32x128xf32, #tpu.memory_space<vmem>>, vector<32x128xf32>
    %cst_81 = arith.constant dense<0.000000e+00> : vector<64x128xf32>
    %324 = tpu.matmul %322, %323, %cst_81 {dimension_numbers = #tpu.dot_dimension_numbers<[1], [0], [0], [1], [0, 0, 1, 1], [], []>} : vector<64x32xf32>, vector<32x128xf32>, vector<64x128xf32> -> vector<64x128xf32>
    %c0_82 = arith.constant 0 : index
    %c0_83 = arith.constant 0 : index
    %325 = vector.load %arg8[%c0_82, %c0_83] : memref<1x128xf32, #tpu.memory_space<vmem>>, vector<1x128xf32>
    %326 = vector.broadcast %325 : vector<1x128xf32> to vector<64x128xf32>
    %327 = arith.addf %324, %326 : vector<64x128xf32>
    %cst_84 = arith.constant 0.000000e+00 : f32
    %328 = vector.broadcast %cst_84 : f32 to vector<64x128xf32>
    %329 = arith.maximumf %327, %328 : vector<64x128xf32>
    %c0_85 = arith.constant 0 : index
    %c0_86 = arith.constant 0 : index
    %330 = vector.load %arg9[%c0_85, %c0_86] : memref<128x1xf32, #tpu.memory_space<vmem>>, vector<128x1xf32>
    %cst_87 = arith.constant dense<0.000000e+00> : vector<64x1xf32>
    %331 = tpu.matmul %329, %330, %cst_87 {dimension_numbers = #tpu.dot_dimension_numbers<[1], [0], [0], [1], [0, 0, 1, 1], [], []>} : vector<64x128xf32>, vector<128x1xf32>, vector<64x1xf32> -> vector<64x1xf32>
    %c0_88 = arith.constant 0 : index
    %332 = memref.load %arg10[%c0_88] : memref<1xf32, #tpu.memory_space<smem>>
    %333 = vector.broadcast %332 : f32 to vector<64x1xf32>
    %334 = arith.addf %331, %333 : vector<64x1xf32>
    %335 = vector.extract_strided_slice %334 {offsets = [0, 0], sizes = [8, 1], strides = [1, 1]} : vector<64x1xf32> to vector<8x1xf32>
    %336 = vector.extract_strided_slice %334 {offsets = [8, 0], sizes = [8, 1], strides = [1, 1]} : vector<64x1xf32> to vector<8x1xf32>
    %337 = arith.maximumf %335, %336 : vector<8x1xf32>
    %338 = vector.extract_strided_slice %334 {offsets = [16, 0], sizes = [8, 1], strides = [1, 1]} : vector<64x1xf32> to vector<8x1xf32>
    %339 = arith.maximumf %337, %338 : vector<8x1xf32>
    %340 = vector.extract_strided_slice %334 {offsets = [24, 0], sizes = [8, 1], strides = [1, 1]} : vector<64x1xf32> to vector<8x1xf32>
    %341 = arith.maximumf %339, %340 : vector<8x1xf32>
    %342 = vector.extract_strided_slice %334 {offsets = [32, 0], sizes = [8, 1], strides = [1, 1]} : vector<64x1xf32> to vector<8x1xf32>
    %343 = arith.maximumf %341, %342 : vector<8x1xf32>
    %344 = vector.extract_strided_slice %334 {offsets = [40, 0], sizes = [8, 1], strides = [1, 1]} : vector<64x1xf32> to vector<8x1xf32>
    %345 = arith.maximumf %343, %344 : vector<8x1xf32>
    %346 = vector.extract_strided_slice %334 {offsets = [48, 0], sizes = [8, 1], strides = [1, 1]} : vector<64x1xf32> to vector<8x1xf32>
    %347 = arith.maximumf %345, %346 : vector<8x1xf32>
    %348 = vector.extract_strided_slice %334 {offsets = [56, 0], sizes = [8, 1], strides = [1, 1]} : vector<64x1xf32> to vector<8x1xf32>
    %349 = arith.maximumf %347, %348 : vector<8x1xf32>
    %cst_89 = arith.constant 0.000000e+00 : f32
    %350 = vector.broadcast %cst_89 : f32 to vector<8x1xf32>
    %cst_90 = arith.constant 0.000000e+00 : f32
    %351 = vector.broadcast %cst_90 : f32 to vector<8x32xf32>
    %352 = vector.extract_strided_slice %334 {offsets = [0, 0], sizes = [8, 1], strides = [1, 1]} : vector<64x1xf32> to vector<8x1xf32>
    %353 = arith.subf %352, %349 : vector<8x1xf32>
    %354 = math.exp %353 : vector<8x1xf32>
    %355 = arith.addf %350, %354 : vector<8x1xf32>
    %356 = vector.extract_strided_slice %322 {offsets = [0, 0], sizes = [8, 32], strides = [1, 1]} : vector<64x32xf32> to vector<8x32xf32>
    %357 = vector.broadcast %354 : vector<8x1xf32> to vector<8x32xf32>
    %358 = arith.mulf %357, %356 : vector<8x32xf32>
    %359 = arith.addf %351, %358 : vector<8x32xf32>
    %360 = vector.extract_strided_slice %334 {offsets = [8, 0], sizes = [8, 1], strides = [1, 1]} : vector<64x1xf32> to vector<8x1xf32>
    %361 = arith.subf %360, %349 : vector<8x1xf32>
    %362 = math.exp %361 : vector<8x1xf32>
    %363 = arith.addf %355, %362 : vector<8x1xf32>
    %364 = vector.extract_strided_slice %322 {offsets = [8, 0], sizes = [8, 32], strides = [1, 1]} : vector<64x32xf32> to vector<8x32xf32>
    %365 = vector.broadcast %362 : vector<8x1xf32> to vector<8x32xf32>
    %366 = arith.mulf %365, %364 : vector<8x32xf32>
    %367 = arith.addf %359, %366 : vector<8x32xf32>
    %368 = vector.extract_strided_slice %334 {offsets = [16, 0], sizes = [8, 1], strides = [1, 1]} : vector<64x1xf32> to vector<8x1xf32>
    %369 = arith.subf %368, %349 : vector<8x1xf32>
    %370 = math.exp %369 : vector<8x1xf32>
    %371 = arith.addf %363, %370 : vector<8x1xf32>
    %372 = vector.extract_strided_slice %322 {offsets = [16, 0], sizes = [8, 32], strides = [1, 1]} : vector<64x32xf32> to vector<8x32xf32>
    %373 = vector.broadcast %370 : vector<8x1xf32> to vector<8x32xf32>
    %374 = arith.mulf %373, %372 : vector<8x32xf32>
    %375 = arith.addf %367, %374 : vector<8x32xf32>
    %376 = vector.extract_strided_slice %334 {offsets = [24, 0], sizes = [8, 1], strides = [1, 1]} : vector<64x1xf32> to vector<8x1xf32>
    %377 = arith.subf %376, %349 : vector<8x1xf32>
    %378 = math.exp %377 : vector<8x1xf32>
    %379 = arith.addf %371, %378 : vector<8x1xf32>
    %380 = vector.extract_strided_slice %322 {offsets = [24, 0], sizes = [8, 32], strides = [1, 1]} : vector<64x32xf32> to vector<8x32xf32>
    %381 = vector.broadcast %378 : vector<8x1xf32> to vector<8x32xf32>
    %382 = arith.mulf %381, %380 : vector<8x32xf32>
    %383 = arith.addf %375, %382 : vector<8x32xf32>
    %384 = vector.extract_strided_slice %334 {offsets = [32, 0], sizes = [8, 1], strides = [1, 1]} : vector<64x1xf32> to vector<8x1xf32>
    %385 = arith.subf %384, %349 : vector<8x1xf32>
    %386 = math.exp %385 : vector<8x1xf32>
    %387 = arith.addf %379, %386 : vector<8x1xf32>
    %388 = vector.extract_strided_slice %322 {offsets = [32, 0], sizes = [8, 32], strides = [1, 1]} : vector<64x32xf32> to vector<8x32xf32>
    %389 = vector.broadcast %386 : vector<8x1xf32> to vector<8x32xf32>
    %390 = arith.mulf %389, %388 : vector<8x32xf32>
    %391 = arith.addf %383, %390 : vector<8x32xf32>
    %392 = vector.extract_strided_slice %334 {offsets = [40, 0], sizes = [8, 1], strides = [1, 1]} : vector<64x1xf32> to vector<8x1xf32>
    %393 = arith.subf %392, %349 : vector<8x1xf32>
    %394 = math.exp %393 : vector<8x1xf32>
    %395 = arith.addf %387, %394 : vector<8x1xf32>
    %396 = vector.extract_strided_slice %322 {offsets = [40, 0], sizes = [8, 32], strides = [1, 1]} : vector<64x32xf32> to vector<8x32xf32>
    %397 = vector.broadcast %394 : vector<8x1xf32> to vector<8x32xf32>
    %398 = arith.mulf %397, %396 : vector<8x32xf32>
    %399 = arith.addf %391, %398 : vector<8x32xf32>
    %400 = vector.extract_strided_slice %334 {offsets = [48, 0], sizes = [8, 1], strides = [1, 1]} : vector<64x1xf32> to vector<8x1xf32>
    %401 = arith.subf %400, %349 : vector<8x1xf32>
    %402 = math.exp %401 : vector<8x1xf32>
    %403 = arith.addf %395, %402 : vector<8x1xf32>
    %404 = vector.extract_strided_slice %322 {offsets = [48, 0], sizes = [8, 32], strides = [1, 1]} : vector<64x32xf32> to vector<8x32xf32>
    %405 = vector.broadcast %402 : vector<8x1xf32> to vector<8x32xf32>
    %406 = arith.mulf %405, %404 : vector<8x32xf32>
    %407 = arith.addf %399, %406 : vector<8x32xf32>
    %408 = vector.extract_strided_slice %334 {offsets = [56, 0], sizes = [8, 1], strides = [1, 1]} : vector<64x1xf32> to vector<8x1xf32>
    %409 = arith.subf %408, %349 : vector<8x1xf32>
    %410 = math.exp %409 : vector<8x1xf32>
    %411 = arith.addf %403, %410 : vector<8x1xf32>
    %412 = vector.extract_strided_slice %322 {offsets = [56, 0], sizes = [8, 32], strides = [1, 1]} : vector<64x32xf32> to vector<8x32xf32>
    %413 = vector.broadcast %410 : vector<8x1xf32> to vector<8x32xf32>
    %414 = arith.mulf %413, %412 : vector<8x32xf32>
    %415 = arith.addf %407, %414 : vector<8x32xf32>
    %416 = vector.broadcast %411 : vector<8x1xf32> to vector<8x32xf32>
    %417 = arith.divf %415, %416 : vector<8x32xf32>
    %c0_91 = arith.constant 0 : index
    %c0_92 = arith.constant 0 : index
    %418 = vector.load %arg11[%c0_91, %c0_92] : memref<32x128xf32, #tpu.memory_space<vmem>>, vector<32x128xf32>
    %cst_93 = arith.constant dense<0.000000e+00> : vector<8x128xf32>
    %419 = tpu.matmul %417, %418, %cst_93 {dimension_numbers = #tpu.dot_dimension_numbers<[1], [0], [0], [1], [0, 0, 1, 1], [], []>} : vector<8x32xf32>, vector<32x128xf32>, vector<8x128xf32> -> vector<8x128xf32>
    %c0_94 = arith.constant 0 : index
    %c0_95 = arith.constant 0 : index
    %420 = vector.load %arg12[%c0_94, %c0_95] : memref<1x128xf32, #tpu.memory_space<vmem>>, vector<1x128xf32>
    %421 = vector.broadcast %420 : vector<1x128xf32> to vector<8x128xf32>
    %422 = arith.addf %419, %421 : vector<8x128xf32>
    %c0_96 = arith.constant 0 : index
    %c0_97 = arith.constant 0 : index
    %423 = vector.load %arg13[%c0_96, %c0_97] : memref<8x128xf32, #tpu.memory_space<vmem>>, vector<8x128xf32>
    tpu.vector_store %arg13[%c0_96, %c0_97], %422 {strides = array<i32>} : memref<8x128xf32, #tpu.memory_space<vmem>>, vector<8x128xf32>,
    return
  }
}

</mosaic_0001>

<llo_original>
// kernel: tpu_custom_call.1
$region0: #{tpu_custom_call.1}
  #allocation0 [shape = 'u32[]', space=smem, size = 0x4, offset = 0x4, fixed_abs, tag = 'smem constant byte address 0x4 - core index']
  #allocation1 [shape = 'u32[144,128]{1,0:T(1,128)}', space=vmem, size = 0x12000, scoped, tag = 'internal scratch']
  #allocation2 [shape = 'f32[64,32]{1,0:T(8,128)}', space=vmem, size = 0x8000, scoped, tag = 'scratch operand']
  #allocation3 [shape = 'f32[1]{0:T(128)S(6)}', space=smem, size = 0x200, scoped, tag = 'scoped memory for tpu_custom_call.1']
  %s0 = inlined_call_operand.vmem [shape: f32[64,4], index: 0, kind: input, shape index: {}]
  %s1 = inlined_call_operand.vmem [shape: f32[4,128], index: 1, kind: input, shape index: {}]
  %s2 = inlined_call_operand.vmem [shape: f32[32,128], index: 2, kind: input, shape index: {}]
  %s3 = inlined_call_operand.vmem [shape: f32[1,128], index: 3, kind: input, shape index: {}]
  %s4 = inlined_call_operand.vmem [shape: f32[32,128], index: 4, kind: input, shape index: {}]
  %s5 = inlined_call_operand.vmem [shape: f32[32,128], index: 5, kind: input, shape index: {}]
  %s6 = inlined_call_operand.vmem [shape: f32[1,128], index: 6, kind: input, shape index: {}]
  %s7 = inlined_call_operand.vmem [shape: f32[32,128], index: 7, kind: input, shape index: {}]
  %s8 = inlined_call_operand.vmem [shape: f32[1,128], index: 8, kind: input, shape index: {}]
  %s9 = inlined_call_operand.vmem [shape: f32[128,1], index: 9, kind: input, shape index: {}]
  %s10 = inlined_call_operand.<no memory space> [shape: f32[1], index: 10, kind: input, shape index: {}]
  %s11 = inlined_call_operand.vmem [shape: f32[32,128], index: 11, kind: input, shape index: {}]
  %s12 = inlined_call_operand.vmem [shape: f32[1,128], index: 12, kind: input, shape index: {}]
  %s13 = inlined_call_operand.hbm [shape: f32[8,128], index: 13, kind: output, shape index: {}]
  %s14 = sld [smem:[#allocation0]]
  $region62: #{tpu_custom_call.1} parent=0
    _
  %s16 = ssub.s32 1, %s14
  %s17 = scalar_select 0, %s16, %s14
  %18 = sst [smem:[#allocation3]] %s10
  $region1: #{tpu_custom_call.1} parent=0
    #allocation4 [shape = 'u8[4096]{0}', space=vmem, size = 0x1000, scoped, tag = 'output window, operand 0, single buffered']
    #allocation5 [shape = 's32[1]{0}', space=sflag, size = 0x4, scoped, tag = 'scoped memory for tpu_custom_call.1']
    %19 = vsyncpa [#allocation5], 0
    // Predicated region
    $region2: #{tpu_custom_call.1} parent=1 // pred_check
      _
    $region3: #{tpu_custom_call.1} parent=1 // pred_check_branch
      %21 = sbr.rel (0) target = $region5
    $region4: #{tpu_custom_call.1} parent=1 // pred_region
      _
    $region5: #{tpu_custom_call.1} parent=1 // pred_fallthru
      _
    // Predicated region
    $region6: #{tpu_custom_call.1} parent=1 // pred_check
      _
    $region7: #{tpu_custom_call.1} parent=1 // pred_check_branch
      %23 = sbr.rel (0) target = $region9
    $region8: #{tpu_custom_call.1} parent=1 // pred_region
      _
    $region9: #{tpu_custom_call.1} parent=1 // pred_fallthru
      _
    // Predicated region
    $region10: #{tpu_custom_call.1} parent=1 // pred_check
      _
    $region11: #{tpu_custom_call.1} parent=1 // pred_check_branch
      %25 = sbr.rel (0) target = $region13
    $region12: #{tpu_custom_call.1} parent=1 // pred_region
      _
    $region13: #{tpu_custom_call.1} parent=1 // pred_fallthru
      _
    // Predicated region
    $region14: #{tpu_custom_call.1} parent=1 // pred_check
      _
    $region15: #{tpu_custom_call.1} parent=1 // pred_check_branch
      %27 = sbr.rel (0) target = $region17
    $region16: #{tpu_custom_call.1} parent=1 // pred_region
      _
    $region17: #{tpu_custom_call.1} parent=1 // pred_fallthru
      _
    // Predicated region
    $region18: #{tpu_custom_call.1} parent=1 // pred_check
      _
    $region19: #{tpu_custom_call.1} parent=1 // pred_check_branch
      %29 = sbr.rel (0) target = $region21
    $region20: #{tpu_custom_call.1} parent=1 // pred_region
      _
    $region21: #{tpu_custom_call.1} parent=1 // pred_fallthru
      _
    // Predicated region
    $region22: #{tpu_custom_call.1} parent=1 // pred_check
      _
    $region23: #{tpu_custom_call.1} parent=1 // pred_check_branch
      %31 = sbr.rel (0) target = $region25
    $region24: #{tpu_custom_call.1} parent=1 // pred_region
      _
    $region25: #{tpu_custom_call.1} parent=1 // pred_fallthru
      _
    // Predicated region
    $region26: #{tpu_custom_call.1} parent=1 // pred_check
      _
    $region27: #{tpu_custom_call.1} parent=1 // pred_check_branch
      %33 = sbr.rel (0) target = $region29
    $region28: #{tpu_custom_call.1} parent=1 // pred_region
      _
    $region29: #{tpu_custom_call.1} parent=1 // pred_fallthru
      _
    // Predicated region
    $region30: #{tpu_custom_call.1} parent=1 // pred_check
      _
    $region31: #{tpu_custom_call.1} parent=1 // pred_check_branch
      %35 = sbr.rel (0) target = $region33
    $region32: #{tpu_custom_call.1} parent=1 // pred_region
      _
    $region33: #{tpu_custom_call.1} parent=1 // pred_fallthru
      _
    // Predicated region
    $region34: #{tpu_custom_call.1} parent=1 // pred_check
      _
    $region35: #{tpu_custom_call.1} parent=1 // pred_check_branch
      %37 = sbr.rel (0) target = $region37
    $region36: #{tpu_custom_call.1} parent=1 // pred_region
      _
    $region37: #{tpu_custom_call.1} parent=1 // pred_fallthru
      _
    // Predicated region
    $region38: #{tpu_custom_call.1} parent=1 // pred_check
      _
    $region39: #{tpu_custom_call.1} parent=1 // pred_check_branch
      %39 = sbr.rel (0) target = $region41
    $region40: #{tpu_custom_call.1} parent=1 // pred_region
      _
    $region41: #{tpu_custom_call.1} parent=1 // pred_fallthru
      _
    // Predicated region
    $region42: #{tpu_custom_call.1} parent=1 // pred_check
      _
    $region43: #{tpu_custom_call.1} parent=1 // pred_check_branch
      %41 = sbr.rel (0) target = $region45
    $region44: #{tpu_custom_call.1} parent=1 // pred_region
      _
    $region45: #{tpu_custom_call.1} parent=1 // pred_fallthru
      _
    // Predicated region
    $region46: #{tpu_custom_call.1} parent=1 // pred_check
      _
    $region47: #{tpu_custom_call.1} parent=1 // pred_check_branch
      %43 = sbr.rel (0) target = $region49
    $region48: #{tpu_custom_call.1} parent=1 // pred_region
      _
    $region49: #{tpu_custom_call.1} parent=1 // pred_fallthru
      _
    // Predicated region
    $region50: #{tpu_custom_call.1} parent=1 // pred_check
      _
    $region51: #{tpu_custom_call.1} parent=1 // pred_check_branch
      %45 = sbr.rel (0) target = $region53
    $region52: #{tpu_custom_call.1} parent=1 // pred_region
      _
    $region53: #{tpu_custom_call.1} parent=1 // pred_fallthru
      _
    %v46 = vld [vmem:[%s0] sm:$0xff]
    %v47 = vld [vmem:[%s0 + $0x8] sm:$0xff]
    %v48 = vld [vmem:[%s0 + $0x10] sm:$0xff]
    %v49 = vld [vmem:[%s0 + $0x18] sm:$0xff]
    %v50 = vld [vmem:[%s0 + $0x20] sm:$0xff]
    %v51 = vld [vmem:[%s0 + $0x28] sm:$0xff]
    %v52 = vld [vmem:[%s0 + $0x30] sm:$0xff]
    %v53 = vld [vmem:[%s0 + $0x38] sm:$0xff]
    %v54 = vld [vmem:[%s1] sm:$0xf]
    %v55 = vld [vmem:[%s3] sm:$0x1]
    %v57 = vlaneseq
    %v58 = vshrl.u32 %v57, 7
    %v59 = vsub.s32 0, %v58
    %v60 = vrot.slane %v55, %v59
    %vm62 = vcmask 31744
    %v64 = vsel %vm62, %v46, 0
    %v67 = vsel %vm62, %v47, 0
    %v70 = vsel %vm62, %v48, 0
    %v73 = vsel %vm62, %v49, 0
    %v76 = vsel %vm62, %v50, 0
    %v79 = vsel %vm62, %v51, 0
    %v82 = vsel %vm62, %v52, 0
    %v85 = vsel %vm62, %v53, 0
    %vm87 = vcmask 1043456
    %v89 = vsel %vm87, %v54, 0
    %91 = vmatprep.subr.mxu0 0.0
    %92 = vmatpush1.msra.mxu0 %v89
    %93 = vmatprep.subr.mxu0 0.0
    %94 = vmatpush1.msra.mxu0 0.0
    %95 = vmatprep.subr.mxu0 0.0
    %96 = vmatpush1.msra.mxu0 0.0
    %97 = vmatprep.subr.mxu0 0.0
    %98 = vmatpush1.msra.mxu0 0.0
    %99 = vmatprep.subr.mxu0 0.0
    %100 = vmatpush1.msra.mxu0 0.0
    %101 = vmatprep.subr.mxu0 0.0
    %102 = vmatpush1.msra.mxu0 0.0
    %103 = vmatprep.subr.mxu0 0.0
    %104 = vmatpush1.msra.mxu0 0.0
    %105 = vmatprep.subr.mxu0 0.0
    %106 = vmatpush1.msra.mxu0 0.0
    %107 = vmatprep.subr.mxu0 0.0
    %108 = vmatpush1.msra.mxu0 0.0
    %109 = vmatprep.subr.mxu0 0.0
    %110 = vmatpush1.msra.mxu0 0.0
    %111 = vmatprep.subr.mxu0 0.0
    %112 = vmatpush1.msra.mxu0 0.0
    %113 = vmatprep.subr.mxu0 0.0
    %114 = vmatpush1.msra.mxu0 0.0
    %115 = vmatprep.subr.mxu0 0.0
    %116 = vmatpush1.msra.mxu0 0.0
    %117 = vmatprep.subr.mxu0 0.0
    %118 = vmatpush1.msra.mxu0 0.0
    %119 = vmatprep.subr.mxu0 0.0
    %120 = vmatpush1.msra.mxu0 0.0
    %121 = vmatprep.subr.mxu0 0.0
    %122 = vmatpush1.msra.mxu0 0.0
    %123 = vmatprep.subr.mxu0 0.0
    %124 = vmatpush1.msra.mxu0 0.0
    %125 = vmatprep.subr.mxu0 0.0
    %126 = vmatpush1.msra.mxu0 0.0
    %127 = vmatprep.subr.mxu0 0.0
    %128 = vmatpush1.msra.mxu0 0.0
    %129 = vmatprep.subr.mxu0 0.0
    %130 = vmatpush1.msra.mxu0 0.0
    %131 = vmatprep.subr.mxu0 0.0
    %132 = vmatpush1.msra.mxu0 0.0
    %133 = vmatprep.subr.mxu0 0.0
    %134 = vmatpush1.msra.mxu0 0.0
    %135 = vmatprep.subr.mxu0 0.0
    %136 = vmatpush1.msra.mxu0 0.0
    %137 = vmatprep.subr.mxu0 0.0
    %138 = vmatpush1.msra.mxu0 0.0
    %139 = vmatprep.subr.mxu0 0.0
    %140 = vmatpush1.msra.mxu0 0.0
    %141 = vmatprep.subr.mxu0 0.0
    %142 = vmatpush1.msra.mxu0 0.0
    %143 = vmatprep.subr.mxu0 0.0
    %144 = vmatpush1.msra.mxu0 0.0
    %145 = vmatprep.subr.mxu0 0.0
    %146 = vmatpush1.msra.mxu0 0.0
    %147 = vmatprep.subr.mxu0 0.0
    %148 = vmatpush1.msra.mxu0 0.0
    %149 = vmatprep.subr.mxu0 0.0
    %150 = vmatpush1.msra.mxu0 0.0
    %151 = vmatprep.subr.mxu0 0.0
    %152 = vmatpush1.msra.mxu0 0.0
    %153 = vmatprep.subr.mxu0 0.0
    %154 = vmatpush1.msra.mxu0 0.0
    %155 = vmatprep.mubr.f32.mxu0 0.0
    %156 = vmatmul.mubr.f32.gmra.mrb[0].mxu0 %v64
    %v157 = vpop.f32.mrb[0].mxu0
    %v158 = vadd.f32 %v60, %v157
    %v159 = vpop.f32.mrb[0].mxu0
    %160 = vmatprep.mubr.f32.mxu0 0.0
    %161 = vmatmul.mubr.f32.gmra.mrb[0].mxu0 %v67
    %v162 = vpop.f32.mrb[0].mxu0
    %v163 = vadd.f32 %v60, %v162
    %v164 = vpop.f32.mrb[0].mxu0
    %165 = vmatprep.mubr.f32.mxu0 0.0
    %166 = vmatmul.mubr.f32.gmra.mrb[0].mxu0 %v70
    %v167 = vpop.f32.mrb[0].mxu0
    %v168 = vadd.f32 %v60, %v167
    %v169 = vpop.f32.mrb[0].mxu0
    %170 = vmatprep.mubr.f32.mxu0 0.0
    %171 = vmatmul.mubr.f32.gmra.mrb[0].mxu0 %v73
    %v172 = vpop.f32.mrb[0].mxu0
    %v173 = vadd.f32 %v60, %v172
    %v174 = vpop.f32.mrb[0].mxu0
    %175 = vmatprep.mubr.f32.mxu0 0.0
    %176 = vmatmul.mubr.f32.gmra.mrb[0].mxu0 %v76
    %v177 = vpop.f32.mrb[0].mxu0
    %v178 = vadd.f32 %v60, %v177
    %v179 = vpop.f32.mrb[0].mxu0
    %180 = vmatprep.mubr.f32.mxu0 0.0
    %181 = vmatmul.mubr.f32.gmra.mrb[0].mxu0 %v79
    %v182 = vpop.f32.mrb[0].mxu0
    %v183 = vadd.f32 %v60, %v182
    %v184 = vpop.f32.mrb[0].mxu0
    %185 = vmatprep.mubr.f32.mxu0 0.0
    %186 = vmatmul.mubr.f32.gmra.mrb[0].mxu0 %v82
    %v187 = vpop.f32.mrb[0].mxu0
    %v188 = vadd.f32 %v60, %v187
    %v189 = vpop.f32.mrb[0].mxu0
    %190 = vmatprep.mubr.f32.mxu0 0.0
    %191 = vmatmul.mubr.f32.gmra.mrb[0].mxu0 %v85
    %v192 = vpop.f32.mrb[0].mxu0
    %v193 = vadd.f32 %v60, %v192
    %v194 = vpop.f32.mrb[0].mxu0
    %195 = vdwg.mxu0
    %v196 = vld [vmem:[%s2] sm:$0xff]
    %v197 = vld [vmem:[%s2 + $0x8] sm:$0xff]
    %v198 = vld [vmem:[%s2 + $0x10] sm:$0xff]
    %v199 = vld [vmem:[%s2 + $0x18] sm:$0xff]
    %vm200 = vcmask 261120
    %v202 = vsel %vm200, 0.0, 0
    %204 = vmatprep.subr.mxu0 0.0
    %205 = vmatpush1.msra.mxu0 %v196
    %206 = vmatprep.subr.mxu0 0.0
    %207 = vmatpush1.msra.mxu0 %v197
    %208 = vmatprep.subr.mxu0 0.0
    %209 = vmatpush1.msra.mxu0 %v198
    %210 = vmatprep.subr.mxu0 0.0
    %211 = vmatpush1.msra.mxu0 %v199
    %212 = vmatprep.subr.mxu0 0.0
    %213 = vmatpush1.msra.mxu0 0.0
    %214 = vmatprep.subr.mxu0 0.0
    %215 = vmatpush1.msra.mxu0 0.0
    %216 = vmatprep.subr.mxu0 0.0
    %217 = vmatpush1.msra.mxu0 0.0
    %218 = vmatprep.subr.mxu0 0.0
    %219 = vmatpush1.msra.mxu0 0.0
    %220 = vmatprep.subr.mxu0 0.0
    %221 = vmatpush1.msra.mxu0 0.0
    %222 = vmatprep.subr.mxu0 0.0
    %223 = vmatpush1.msra.mxu0 0.0
    %224 = vmatprep.subr.mxu0 0.0
    %225 = vmatpush1.msra.mxu0 0.0
    %226 = vmatprep.subr.mxu0 0.0
    %227 = vmatpush1.msra.mxu0 0.0
    %228 = vmatprep.subr.mxu0 0.0
    %229 = vmatpush1.msra.mxu0 0.0
    %230 = vmatprep.subr.mxu0 0.0
    %231 = vmatpush1.msra.mxu0 0.0
    %232 = vmatprep.subr.mxu0 0.0
    %233 = vmatpush1.msra.mxu0 0.0
    %234 = vmatprep.subr.mxu0 0.0
    %235 = vmatpush1.msra.mxu0 0.0
    %236 = vmatprep.subr.mxu0 0.0
    %237 = vmatpush1.msra.mxu0 0.0
    %238 = vmatprep.subr.mxu0 0.0
    %239 = vmatpush1.msra.mxu0 0.0
    %240 = vmatprep.subr.mxu0 0.0
    %241 = vmatpush1.msra.mxu0 0.0
    %242 = vmatprep.subr.mxu0 0.0
    %243 = vmatpush1.msra.mxu0 0.0
    %244 = vmatprep.subr.mxu0 0.0
    %245 = vmatpush1.msra.mxu0 0.0
    %246 = vmatprep.subr.mxu0 0.0
    %247 = vmatpush1.msra.mxu0 0.0
    %248 = vmatprep.subr.mxu0 0.0
    %249 = vmatpush1.msra.mxu0 0.0
    %250 = vmatprep.subr.mxu0 0.0
    %251 = vmatpush1.msra.mxu0 0.0
    %252 = vmatprep.subr.mxu0 0.0
    %253 = vmatpush1.msra.mxu0 0.0
    %254 = vmatprep.subr.mxu0 0.0
    %255 = vmatpush1.msra.mxu0 0.0
    %256 = vmatprep.subr.mxu0 0.0
    %257 = vmatpush1.msra.mxu0 0.0
    %258 = vmatprep.subr.mxu0 0.0
    %259 = vmatpush1.msra.mxu0 0.0
    %260 = vmatprep.subr.mxu0 0.0
    %261 = vmatpush1.msra.mxu0 0.0
    %262 = vmatprep.subr.mxu0 0.0
    %263 = vmatpush1.msra.mxu0 0.0
    %264 = vmatprep.subr.mxu0 0.0
    %265 = vmatpush1.msra.mxu0 0.0
    %266 = vmatprep.subr.mxu0 0.0
    %267 = vmatpush1.msra.mxu0 0.0
    %268 = vmatprep.mubr.f32.mxu0 0.0
    %269 = vmatmul.mubr.f32.gmra.mrb[0].mxu0 %v202
    %v270 = vpop.f32.mrb[0].mxu0
    %v271 = vadd.f32 0.0, %v270
    %v272 = vpop.f32.mrb[0].mxu0
    %273 = vdwg.mxu0
    %v274 = vadd.f32 %v158, %v271
    %v275 = vxor.u32 %v274, 2147483648
    %v276 = vmul.f32 %v275, 1.442695
    %v277 = vpow.pop %v276
    %v278 = vadd.f32 %v277, 1.0
    %v279 = vrcp.pop %v278
    %v280 = vmul.f32 1.0, %v279
    %v281 = vtanh.pop %v274
    %v282 = vmul.f32 %v280, 0.0
    %284 = vrot.lane.b32.xlu0 %v281, 64
    %v285 = vpop.permute.xlu0 %284
    %v287 = vmul.f32 %v280, %v285
    %289 = vrot.lane.b32.xlu0 %v287, 32
    %v290 = vpop.permute.xlu0 %289
    %v292 = vadd.f32 %v282, %v290
    %v293 = vtanh.pop %v292
    %295 = vrot.lane.b32.xlu0 %v293, 64
    %v296 = vpop.permute.xlu0 %295
    %v298 = vmul.f32 %v280, %v296
    %300 = vrot.lane.b32.xlu0 %v298, 32
    %v301 = vpop.permute.xlu0 %300
    %303 = vst.msk [vmem:[#allocation2] sm:$0xff] %vm200, %v301
    %v304 = vsel %vm200, %v301, 0
    %306 = vmatprep.subr.mxu0 0.0
    %307 = vmatpush1.msra.mxu0 %v196
    %308 = vmatprep.subr.mxu0 0.0
    %309 = vmatpush1.msra.mxu0 %v197
    %310 = vmatprep.subr.mxu0 0.0
    %311 = vmatpush1.msra.mxu0 %v198
    %312 = vmatprep.subr.mxu0 0.0
    %313 = vmatpush1.msra.mxu0 %v199
    %314 = vmatprep.subr.mxu0 0.0
    %315 = vmatpush1.msra.mxu0 0.0
    %316 = vmatprep.subr.mxu0 0.0
    %317 = vmatpush1.msra.mxu0 0.0
    %318 = vmatprep.subr.mxu0 0.0
    %319 = vmatpush1.msra.mxu0 0.0
    %320 = vmatprep.subr.mxu0 0.0
    %321 = vmatpush1.msra.mxu0 0.0
    %322 = vmatprep.subr.mxu0 0.0
    %323 = vmatpush1.msra.mxu0 0.0
    %324 = vmatprep.subr.mxu0 0.0
    %325 = vmatpush1.msra.mxu0 0.0
    %326 = vmatprep.subr.mxu0 0.0
    %327 = vmatpush1.msra.mxu0 0.0
    %328 = vmatprep.subr.mxu0 0.0
    %329 = vmatpush1.msra.mxu0 0.0
    %330 = vmatprep.subr.mxu0 0.0
    %331 = vmatpush1.msra.mxu0 0.0
    %332 = vmatprep.subr.mxu0 0.0
    %333 = vmatpush1.msra.mxu0 0.0
    %334 = vmatprep.subr.mxu0 0.0
    %335 = vmatpush1.msra.mxu0 0.0
    %336 = vmatprep.subr.mxu0 0.0
    %337 = vmatpush1.msra.mxu0 0.0
    %338 = vmatprep.subr.mxu0 0.0
    %339 = vmatpush1.msra.mxu0 0.0
    %340 = vmatprep.subr.mxu0 0.0
    %341 = vmatpush1.msra.mxu0 0.0
    %342 = vmatprep.subr.mxu0 0.0
    %343 = vmatpush1.msra.mxu0 0.0
    %344 = vmatprep.subr.mxu0 0.0
    %345 = vmatpush1.msra.mxu0 0.0
    %346 = vmatprep.subr.mxu0 0.0
    %347 = vmatpush1.msra.mxu0 0.0
    %348 = vmatprep.subr.mxu0 0.0
    %349 = vmatpush1.msra.mxu0 0.0
    %350 = vmatprep.subr.mxu0 0.0
    %351 = vmatpush1.msra.mxu0 0.0
    %352 = vmatprep.subr.mxu0 0.0
    %353 = vmatpush1.msra.mxu0 0.0
    %354 = vmatprep.subr.mxu0 0.0
    %355 = vmatpush1.msra.mxu0 0.0
    %356 = vmatprep.subr.mxu0 0.0
    %357 = vmatpush1.msra.mxu0 0.0
    %358 = vmatprep.subr.mxu0 0.0
    %359 = vmatpush1.msra.mxu0 0.0
    %360 = vmatprep.subr.mxu0 0.0
    %361 = vmatpush1.msra.mxu0 0.0
    %362 = vmatprep.subr.mxu0 0.0
    %363 = vmatpush1.msra.mxu0 0.0
    %364 = vmatprep.subr.mxu0 0.0
    %365 = vmatpush1.msra.mxu0 0.0
    %366 = vmatprep.subr.mxu0 0.0
    %367 = vmatpush1.msra.mxu0 0.0
    %368 = vmatprep.subr.mxu0 0.0
    %369 = vmatpush1.msra.mxu0 0.0
    %370 = vmatprep.mubr.f32.mxu0 0.0
    %371 = vmatmul.mubr.f32.gmra.mrb[0].mxu0 %v304
    %v372 = vpop.f32.mrb[0].mxu0
    %v373 = vadd.f32 0.0, %v372
    %v374 = vpop.f32.mrb[0].mxu0
    %375 = vdwg.mxu0
    %v376 = vadd.f32 %v163, %v373
    %v377 = vxor.u32 %v376, 2147483648
    %v378 = vmul.f32 %v377, 1.442695
    %v379 = vpow.pop %v378
    %v380 = vadd.f32 %v379, 1.0
    %v381 = vrcp.pop %v380
    %v382 = vmul.f32 1.0, %v381
    %v383 = vtanh.pop %v376
    %v384 = vmul.f32 %v382, %v292
    %386 = vrot.lane.b32.xlu0 %v383, 64
    %v387 = vpop.permute.xlu0 %386
    %v389 = vmul.f32 %v382, %v387
    %391 = vrot.lane.b32.xlu0 %v389, 32
    %v392 = vpop.permute.xlu0 %391
    %v394 = vadd.f32 %v384, %v392
    %v395 = vtanh.pop %v394
    %397 = vrot.lane.b32.xlu0 %v395, 64
    %v398 = vpop.permute.xlu0 %397
    %v400 = vmul.f32 %v382, %v398
    %402 = vrot.lane.b32.xlu0 %v400, 32
    %v403 = vpop.permute.xlu0 %402
    %405 = vst.msk [vmem:[#allocation2 + $0x8] sm:$0xff] %vm200, %v403
    %v406 = vsel %vm200, %v403, 0
    %408 = vmatprep.subr.mxu0 0.0
    %409 = vmatpush1.msra.mxu0 %v196
    %410 = vmatprep.subr.mxu0 0.0
    %411 = vmatpush1.msra.mxu0 %v197
    %412 = vmatprep.subr.mxu0 0.0
    %413 = vmatpush1.msra.mxu0 %v198
    %414 = vmatprep.subr.mxu0 0.0
    %415 = vmatpush1.msra.mxu0 %v199
    %416 = vmatprep.subr.mxu0 0.0
    %417 = vmatpush1.msra.mxu0 0.0
    %418 = vmatprep.subr.mxu0 0.0
    %419 = vmatpush1.msra.mxu0 0.0
    %420 = vmatprep.subr.mxu0 0.0
    %421 = vmatpush1.msra.mxu0 0.0
    %422 = vmatprep.subr.mxu0 0.0
    %423 = vmatpush1.msra.mxu0 0.0
    %424 = vmatprep.subr.mxu0 0.0
    %425 = vmatpush1.msra.mxu0 0.0
    %426 = vmatprep.subr.mxu0 0.0
    %427 = vmatpush1.msra.mxu0 0.0
    %428 = vmatprep.subr.mxu0 0.0
    %429 = vmatpush1.msra.mxu0 0.0
    %430 = vmatprep.subr.mxu0 0.0
    %431 = vmatpush1.msra.mxu0 0.0
    %432 = vmatprep.subr.mxu0 0.0
    %433 = vmatpush1.msra.mxu0 0.0
    %434 = vmatprep.subr.mxu0 0.0
    %435 = vmatpush1.msra.mxu0 0.0
    %436 = vmatprep.subr.mxu0 0.0
    %437 = vmatpush1.msra.mxu0 0.0
    %438 = vmatprep.subr.mxu0 0.0
    %439 = vmatpush1.msra.mxu0 0.0
    %440 = vmatprep.subr.mxu0 0.0
    %441 = vmatpush1.msra.mxu0 0.0
    %442 = vmatprep.subr.mxu0 0.0
    %443 = vmatpush1.msra.mxu0 0.0
    %444 = vmatprep.subr.mxu0 0.0
    %445 = vmatpush1.msra.mxu0 0.0
    %446 = vmatprep.subr.mxu0 0.0
    %447 = vmatpush1.msra.mxu0 0.0
    %448 = vmatprep.subr.mxu0 0.0
    %449 = vmatpush1.msra.mxu0 0.0
    %450 = vmatprep.subr.mxu0 0.0
    %451 = vmatpush1.msra.mxu0 0.0
    %452 = vmatprep.subr.mxu0 0.0
    %453 = vmatpush1.msra.mxu0 0.0
    %454 = vmatprep.subr.mxu0 0.0
    %455 = vmatpush1.msra.mxu0 0.0
    %456 = vmatprep.subr.mxu0 0.0
    %457 = vmatpush1.msra.mxu0 0.0
    %458 = vmatprep.subr.mxu0 0.0
    %459 = vmatpush1.msra.mxu0 0.0
    %460 = vmatprep.subr.mxu0 0.0
    %461 = vmatpush1.msra.mxu0 0.0
    %462 = vmatprep.subr.mxu0 0.0
    %463 = vmatpush1.msra.mxu0 0.0
    %464 = vmatprep.subr.mxu0 0.0
    %465 = vmatpush1.msra.mxu0 0.0
    %466 = vmatprep.subr.mxu0 0.0
    %467 = vmatpush1.msra.mxu0 0.0
    %468 = vmatprep.subr.mxu0 0.0
    %469 = vmatpush1.msra.mxu0 0.0
    %470 = vmatprep.subr.mxu0 0.0
    %471 = vmatpush1.msra.mxu0 0.0
    %472 = vmatprep.mubr.f32.mxu0 0.0
    %473 = vmatmul.mubr.f32.gmra.mrb[0].mxu0 %v406
    %v474 = vpop.f32.mrb[0].mxu0
    %v475 = vadd.f32 0.0, %v474
    %v476 = vpop.f32.mrb[0].mxu0
    %477 = vdwg.mxu0
    %v478 = vadd.f32 %v168, %v475
    %v479 = vxor.u32 %v478, 2147483648
    %v480 = vmul.f32 %v479, 1.442695
    %v481 = vpow.pop %v480
    %v482 = vadd.f32 %v481, 1.0
    %v483 = vrcp.pop %v482
    %v484 = vmul.f32 1.0, %v483
    %v485 = vtanh.pop %v478
    %v486 = vmul.f32 %v484, %v394
    %488 = vrot.lane.b32.xlu0 %v485, 64
    %v489 = vpop.permute.xlu0 %488
    %v491 = vmul.f32 %v484, %v489
    %493 = vrot.lane.b32.xlu0 %v491, 32
    %v494 = vpop.permute.xlu0 %493
    %v496 = vadd.f32 %v486, %v494
    %v497 = vtanh.pop %v496
    %499 = vrot.lane.b32.xlu0 %v497, 64
    %v500 = vpop.permute.xlu0 %499
    %v502 = vmul.f32 %v484, %v500
    %504 = vrot.lane.b32.xlu0 %v502, 32
    %v505 = vpop.permute.xlu0 %504
    %507 = vst.msk [vmem:[#allocation2 + $0x10] sm:$0xff] %vm200, %v505
    %v508 = vsel %vm200, %v505, 0
    %510 = vmatprep.subr.mxu0 0.0
    %511 = vmatpush1.msra.mxu0 %v196
    %512 = vmatprep.subr.mxu0 0.0
    %513 = vmatpush1.msra.mxu0 %v197
    %514 = vmatprep.subr.mxu0 0.0
    %515 = vmatpush1.msra.mxu0 %v198
    %516 = vmatprep.subr.mxu0 0.0
    %517 = vmatpush1.msra.mxu0 %v199
    %518 = vmatprep.subr.mxu0 0.0
    %519 = vmatpush1.msra.mxu0 0.0
    %520 = vmatprep.subr.mxu0 0.0
    %521 = vmatpush1.msra.mxu0 0.0
    %522 = vmatprep.subr.mxu0 0.0
    %523 = vmatpush1.msra.mxu0 0.0
    %524 = vmatprep.subr.mxu0 0.0
    %525 = vmatpush1.msra.mxu0 0.0
    %526 = vmatprep.subr.mxu0 0.0
    %527 = vmatpush1.msra.mxu0 0.0
    %528 = vmatprep.subr.mxu0 0.0
    %529 = vmatpush1.msra.mxu0 0.0
    %530 = vmatprep.subr.mxu0 0.0
    %531 = vmatpush1.msra.mxu0 0.0
    %532 = vmatprep.subr.mxu0 0.0
    %533 = vmatpush1.msra.mxu0 0.0
    %534 = vmatprep.subr.mxu0 0.0
    %535 = vmatpush1.msra.mxu0 0.0
    %536 = vmatprep.subr.mxu0 0.0
    %537 = vmatpush1.msra.mxu0 0.0
    %538 = vmatprep.subr.mxu0 0.0
    %539 = vmatpush1.msra.mxu0 0.0
    %540 = vmatprep.subr.mxu0 0.0
    %541 = vmatpush1.msra.mxu0 0.0
    %542 = vmatprep.subr.mxu0 0.0
    %543 = vmatpush1.msra.mxu0 0.0
    %544 = vmatprep.subr.mxu0 0.0
    %545 = vmatpush1.msra.mxu0 0.0
    %546 = vmatprep.subr.mxu0 0.0
    %547 = vmatpush1.msra.mxu0 0.0
    %548 = vmatprep.subr.mxu0 0.0
    %549 = vmatpush1.msra.mxu0 0.0
    %550 = vmatprep.subr.mxu0 0.0
    %551 = vmatpush1.msra.mxu0 0.0
    %552 = vmatprep.subr.mxu0 0.0
    %553 = vmatpush1.msra.mxu0 0.0
    %554 = vmatprep.subr.mxu0 0.0
    %555 = vmatpush1.msra.mxu0 0.0
    %556 = vmatprep.subr.mxu0 0.0
    %557 = vmatpush1.msra.mxu0 0.0
    %558 = vmatprep.subr.mxu0 0.0
    %559 = vmatpush1.msra.mxu0 0.0
    %560 = vmatprep.subr.mxu0 0.0
    %561 = vmatpush1.msra.mxu0 0.0
    %562 = vmatprep.subr.mxu0 0.0
    %563 = vmatpush1.msra.mxu0 0.0
    %564 = vmatprep.subr.mxu0 0.0
    %565 = vmatpush1.msra.mxu0 0.0
    %566 = vmatprep.subr.mxu0 0.0
    %567 = vmatpush1.msra.mxu0 0.0
    %568 = vmatprep.subr.mxu0 0.0
    %569 = vmatpush1.msra.mxu0 0.0
    %570 = vmatprep.subr.mxu0 0.0
    %571 = vmatpush1.msra.mxu0 0.0
    %572 = vmatprep.subr.mxu0 0.0
    %573 = vmatpush1.msra.mxu0 0.0
    %574 = vmatprep.mubr.f32.mxu0 0.0
    %575 = vmatmul.mubr.f32.gmra.mrb[0].mxu0 %v508
    %v576 = vpop.f32.mrb[0].mxu0
    %v577 = vadd.f32 0.0, %v576
    %v578 = vpop.f32.mrb[0].mxu0
    %579 = vdwg.mxu0
    %v580 = vadd.f32 %v173, %v577
    %v581 = vxor.u32 %v580, 2147483648
    %v582 = vmul.f32 %v581, 1.442695
    %v583 = vpow.pop %v582
    %v584 = vadd.f32 %v583, 1.0
    %v585 = vrcp.pop %v584
    %v586 = vmul.f32 1.0, %v585
    %v587 = vtanh.pop %v580
    %v588 = vmul.f32 %v586, %v496
    %590 = vrot.lane.b32.xlu0 %v587, 64
    %v591 = vpop.permute.xlu0 %590
    %v593 = vmul.f32 %v586, %v591
    %595 = vrot.lane.b32.xlu0 %v593, 32
    %v596 = vpop.permute.xlu0 %595
    %v598 = vadd.f32 %v588, %v596
    %v599 = vtanh.pop %v598
    %601 = vrot.lane.b32.xlu0 %v599, 64
    %v602 = vpop.permute.xlu0 %601
    %v604 = vmul.f32 %v586, %v602
    %606 = vrot.lane.b32.xlu0 %v604, 32
    %v607 = vpop.permute.xlu0 %606
    %609 = vst.msk [vmem:[#allocation2 + $0x18] sm:$0xff] %vm200, %v607
    %v610 = vsel %vm200, %v607, 0
    %612 = vmatprep.subr.mxu0 0.0
    %613 = vmatpush1.msra.mxu0 %v196
    %614 = vmatprep.subr.mxu0 0.0
    %615 = vmatpush1.msra.mxu0 %v197
    %616 = vmatprep.subr.mxu0 0.0
    %617 = vmatpush1.msra.mxu0 %v198
    %618 = vmatprep.subr.mxu0 0.0
    %619 = vmatpush1.msra.mxu0 %v199
    %620 = vmatprep.subr.mxu0 0.0
    %621 = vmatpush1.msra.mxu0 0.0
    %622 = vmatprep.subr.mxu0 0.0
    %623 = vmatpush1.msra.mxu0 0.0
    %624 = vmatprep.subr.mxu0 0.0
    %625 = vmatpush1.msra.mxu0 0.0
    %626 = vmatprep.subr.mxu0 0.0
    %627 = vmatpush1.msra.mxu0 0.0
    %628 = vmatprep.subr.mxu0 0.0
    %629 = vmatpush1.msra.mxu0 0.0
    %630 = vmatprep.subr.mxu0 0.0
    %631 = vmatpush1.msra.mxu0 0.0
    %632 = vmatprep.subr.mxu0 0.0
    %633 = vmatpush1.msra.mxu0 0.0
    %634 = vmatprep.subr.mxu0 0.0
    %635 = vmatpush1.msra.mxu0 0.0
    %636 = vmatprep.subr.mxu0 0.0
    %637 = vmatpush1.msra.mxu0 0.0
    %638 = vmatprep.subr.mxu0 0.0
    %639 = vmatpush1.msra.mxu0 0.0
    %640 = vmatprep.subr.mxu0 0.0
    %641 = vmatpush1.msra.mxu0 0.0
    %642 = vmatprep.subr.mxu0 0.0
    %643 = vmatpush1.msra.mxu0 0.0
    %644 = vmatprep.subr.mxu0 0.0
    %645 = vmatpush1.msra.mxu0 0.0
    %646 = vmatprep.subr.mxu0 0.0
    %647 = vmatpush1.msra.mxu0 0.0
    %648 = vmatprep.subr.mxu0 0.0
    %649 = vmatpush1.msra.mxu0 0.0
    %650 = vmatprep.subr.mxu0 0.0
    %651 = vmatpush1.msra.mxu0 0.0
    %652 = vmatprep.subr.mxu0 0.0
    %653 = vmatpush1.msra.mxu0 0.0
    %654 = vmatprep.subr.mxu0 0.0
    %655 = vmatpush1.msra.mxu0 0.0
    %656 = vmatprep.subr.mxu0 0.0
    %657 = vmatpush1.msra.mxu0 0.0
    %658 = vmatprep.subr.mxu0 0.0
    %659 = vmatpush1.msra.mxu0 0.0
    %660 = vmatprep.subr.mxu0 0.0
    %661 = vmatpush1.msra.mxu0 0.0
    %662 = vmatprep.subr.mxu0 0.0
    %663 = vmatpush1.msra.mxu0 0.0
    %664 = vmatprep.subr.mxu0 0.0
    %665 = vmatpush1.msra.mxu0 0.0
    %666 = vmatprep.subr.mxu0 0.0
    %667 = vmatpush1.msra.mxu0 0.0
    %668 = vmatprep.subr.mxu0 0.0
    %669 = vmatpush1.msra.mxu0 0.0
    %670 = vmatprep.subr.mxu0 0.0
    %671 = vmatpush1.msra.mxu0 0.0
    %672 = vmatprep.subr.mxu0 0.0
    %673 = vmatpush1.msra.mxu0 0.0
    %674 = vmatprep.subr.mxu0 0.0
    %675 = vmatpush1.msra.mxu0 0.0
    %676 = vmatprep.mubr.f32.mxu0 0.0
    %677 = vmatmul.mubr.f32.gmra.mrb[0].mxu0 %v610
    %v678 = vpop.f32.mrb[0].mxu0
    %v679 = vadd.f32 0.0, %v678
    %v680 = vpop.f32.mrb[0].mxu0
    %681 = vdwg.mxu0
    %v682 = vadd.f32 %v178, %v679
    %v683 = vxor.u32 %v682, 2147483648
    %v684 = vmul.f32 %v683, 1.442695
    %v685 = vpow.pop %v684
    %v686 = vadd.f32 %v685, 1.0
    %v687 = vrcp.pop %v686
    %v688 = vmul.f32 1.0, %v687
    %v689 = vtanh.pop %v682
    %v690 = vmul.f32 %v688, %v598
    %692 = vrot.lane.b32.xlu0 %v689, 64
    %v693 = vpop.permute.xlu0 %692
    %v695 = vmul.f32 %v688, %v693
    %697 = vrot.lane.b32.xlu0 %v695, 32
    %v698 = vpop.permute.xlu0 %697
    %v700 = vadd.f32 %v690, %v698
    %v701 = vtanh.pop %v700
    %703 = vrot.lane.b32.xlu0 %v701, 64
    %v704 = vpop.permute.xlu0 %703
    %v706 = vmul.f32 %v688, %v704
    %708 = vrot.lane.b32.xlu0 %v706, 32
    %v709 = vpop.permute.xlu0 %708
    %711 = vst.msk [vmem:[#allocation2 + $0x20] sm:$0xff] %vm200, %v709
    %v712 = vsel %vm200, %v709, 0
    %714 = vmatprep.subr.mxu0 0.0
    %715 = vmatpush1.msra.mxu0 %v196
    %716 = vmatprep.subr.mxu0 0.0
    %717 = vmatpush1.msra.mxu0 %v197
    %718 = vmatprep.subr.mxu0 0.0
    %719 = vmatpush1.msra.mxu0 %v198
    %720 = vmatprep.subr.mxu0 0.0
    %721 = vmatpush1.msra.mxu0 %v199
    %722 = vmatprep.subr.mxu0 0.0
    %723 = vmatpush1.msra.mxu0 0.0
    %724 = vmatprep.subr.mxu0 0.0
    %725 = vmatpush1.msra.mxu0 0.0
    %726 = vmatprep.subr.mxu0 0.0
    %727 = vmatpush1.msra.mxu0 0.0
    %728 = vmatprep.subr.mxu0 0.0
    %729 = vmatpush1.msra.mxu0 0.0
    %730 = vmatprep.subr.mxu0 0.0
    %731 = vmatpush1.msra.mxu0 0.0
    %732 = vmatprep.subr.mxu0 0.0
    %733 = vmatpush1.msra.mxu0 0.0
    %734 = vmatprep.subr.mxu0 0.0
    %735 = vmatpush1.msra.mxu0 0.0
    %736 = vmatprep.subr.mxu0 0.0
    %737 = vmatpush1.msra.mxu0 0.0
    %738 = vmatprep.subr.mxu0 0.0
    %739 = vmatpush1.msra.mxu0 0.0
    %740 = vmatprep.subr.mxu0 0.0
    %741 = vmatpush1.msra.mxu0 0.0
    %742 = vmatprep.subr.mxu0 0.0
    %743 = vmatpush1.msra.mxu0 0.0
    %744 = vmatprep.subr.mxu0 0.0
    %745 = vmatpush1.msra.mxu0 0.0
    %746 = vmatprep.subr.mxu0 0.0
    %747 = vmatpush1.msra.mxu0 0.0
    %748 = vmatprep.subr.mxu0 0.0
    %749 = vmatpush1.msra.mxu0 0.0
    %750 = vmatprep.subr.mxu0 0.0
    %751 = vmatpush1.msra.mxu0 0.0
    %752 = vmatprep.subr.mxu0 0.0
    %753 = vmatpush1.msra.mxu0 0.0
    %754 = vmatprep.subr.mxu0 0.0
    %755 = vmatpush1.msra.mxu0 0.0
    %756 = vmatprep.subr.mxu0 0.0
    %757 = vmatpush1.msra.mxu0 0.0
    %758 = vmatprep.subr.mxu0 0.0
    %759 = vmatpush1.msra.mxu0 0.0
    %760 = vmatprep.subr.mxu0 0.0
    %761 = vmatpush1.msra.mxu0 0.0
    %762 = vmatprep.subr.mxu0 0.0
    %763 = vmatpush1.msra.mxu0 0.0
    %764 = vmatprep.subr.mxu0 0.0
    %765 = vmatpush1.msra.mxu0 0.0
    %766 = vmatprep.subr.mxu0 0.0
    %767 = vmatpush1.msra.mxu0 0.0
    %768 = vmatprep.subr.mxu0 0.0
    %769 = vmatpush1.msra.mxu0 0.0
    %770 = vmatprep.subr.mxu0 0.0
    %771 = vmatpush1.msra.mxu0 0.0
    %772 = vmatprep.subr.mxu0 0.0
    %773 = vmatpush1.msra.mxu0 0.0
    %774 = vmatprep.subr.mxu0 0.0
    %775 = vmatpush1.msra.mxu0 0.0
    %776 = vmatprep.subr.mxu0 0.0
    %777 = vmatpush1.msra.mxu0 0.0
    %778 = vmatprep.mubr.f32.mxu0 0.0
    %779 = vmatmul.mubr.f32.gmra.mrb[0].mxu0 %v712
    %v780 = vpop.f32.mrb[0].mxu0
    %v781 = vadd.f32 0.0, %v780
    %v782 = vpop.f32.mrb[0].mxu0
    %783 = vdwg.mxu0
    %v784 = vadd.f32 %v183, %v781
    %v785 = vxor.u32 %v784, 2147483648
    %v786 = vmul.f32 %v785, 1.442695
    %v787 = vpow.pop %v786
    %v788 = vadd.f32 %v787, 1.0
    %v789 = vrcp.pop %v788
    %v790 = vmul.f32 1.0, %v789
    %v791 = vtanh.pop %v784
    %v792 = vmul.f32 %v790, %v700
    %794 = vrot.lane.b32.xlu0 %v791, 64
    %v795 = vpop.permute.xlu0 %794
    %v797 = vmul.f32 %v790, %v795
    %799 = vrot.lane.b32.xlu0 %v797, 32
    %v800 = vpop.permute.xlu0 %799
    %v802 = vadd.f32 %v792, %v800
    %v803 = vtanh.pop %v802
    %805 = vrot.lane.b32.xlu0 %v803, 64
    %v806 = vpop.permute.xlu0 %805
    %v808 = vmul.f32 %v790, %v806
    %810 = vrot.lane.b32.xlu0 %v808, 32
    %v811 = vpop.permute.xlu0 %810
    %813 = vst.msk [vmem:[#allocation2 + $0x28] sm:$0xff] %vm200, %v811
    %v814 = vsel %vm200, %v811, 0
    %816 = vmatprep.subr.mxu0 0.0
    %817 = vmatpush1.msra.mxu0 %v196
    %818 = vmatprep.subr.mxu0 0.0
    %819 = vmatpush1.msra.mxu0 %v197
    %820 = vmatprep.subr.mxu0 0.0
    %821 = vmatpush1.msra.mxu0 %v198
    %822 = vmatprep.subr.mxu0 0.0
    %823 = vmatpush1.msra.mxu0 %v199
    %824 = vmatprep.subr.mxu0 0.0
    %825 = vmatpush1.msra.mxu0 0.0
    %826 = vmatprep.subr.mxu0 0.0
    %827 = vmatpush1.msra.mxu0 0.0
    %828 = vmatprep.subr.mxu0 0.0
    %829 = vmatpush1.msra.mxu0 0.0
    %830 = vmatprep.subr.mxu0 0.0
    %831 = vmatpush1.msra.mxu0 0.0
    %832 = vmatprep.subr.mxu0 0.0
    %833 = vmatpush1.msra.mxu0 0.0
    %834 = vmatprep.subr.mxu0 0.0
    %835 = vmatpush1.msra.mxu0 0.0
    %836 = vmatprep.subr.mxu0 0.0
    %837 = vmatpush1.msra.mxu0 0.0
    %838 = vmatprep.subr.mxu0 0.0
    %839 = vmatpush1.msra.mxu0 0.0
    %840 = vmatprep.subr.mxu0 0.0
    %841 = vmatpush1.msra.mxu0 0.0
    %842 = vmatprep.subr.mxu0 0.0
    %843 = vmatpush1.msra.mxu0 0.0
    %844 = vmatprep.subr.mxu0 0.0
    %845 = vmatpush1.msra.mxu0 0.0
    %846 = vmatprep.subr.mxu0 0.0
    %847 = vmatpush1.msra.mxu0 0.0
    %848 = vmatprep.subr.mxu0 0.0
    %849 = vmatpush1.msra.mxu0 0.0
    %850 = vmatprep.subr.mxu0 0.0
    %851 = vmatpush1.msra.mxu0 0.0
    %852 = vmatprep.subr.mxu0 0.0
    %853 = vmatpush1.msra.mxu0 0.0
    %854 = vmatprep.subr.mxu0 0.0
    %855 = vmatpush1.msra.mxu0 0.0
    %856 = vmatprep.subr.mxu0 0.0
    %857 = vmatpush1.msra.mxu0 0.0
    %858 = vmatprep.subr.mxu0 0.0
    %859 = vmatpush1.msra.mxu0 0.0
    %860 = vmatprep.subr.mxu0 0.0
    %861 = vmatpush1.msra.mxu0 0.0
    %862 = vmatprep.subr.mxu0 0.0
    %863 = vmatpush1.msra.mxu0 0.0
    %864 = vmatprep.subr.mxu0 0.0
    %865 = vmatpush1.msra.mxu0 0.0
    %866 = vmatprep.subr.mxu0 0.0
    %867 = vmatpush1.msra.mxu0 0.0
    %868 = vmatprep.subr.mxu0 0.0
    %869 = vmatpush1.msra.mxu0 0.0
    %870 = vmatprep.subr.mxu0 0.0
    %871 = vmatpush1.msra.mxu0 0.0
    %872 = vmatprep.subr.mxu0 0.0
    %873 = vmatpush1.msra.mxu0 0.0
    %874 = vmatprep.subr.mxu0 0.0
    %875 = vmatpush1.msra.mxu0 0.0
    %876 = vmatprep.subr.mxu0 0.0
    %877 = vmatpush1.msra.mxu0 0.0
    %878 = vmatprep.subr.mxu0 0.0
    %879 = vmatpush1.msra.mxu0 0.0
    %880 = vmatprep.mubr.f32.mxu0 0.0
    %881 = vmatmul.mubr.f32.gmra.mrb[0].mxu0 %v814
    %v882 = vpop.f32.mrb[0].mxu0
    %v883 = vadd.f32 0.0, %v882
    %v884 = vpop.f32.mrb[0].mxu0
    %885 = vdwg.mxu0
    %v886 = vadd.f32 %v188, %v883
    %v887 = vxor.u32 %v886, 2147483648
    %v888 = vmul.f32 %v887, 1.442695
    %v889 = vpow.pop %v888
    %v890 = vadd.f32 %v889, 1.0
    %v891 = vrcp.pop %v890
    %v892 = vmul.f32 1.0, %v891
    %v893 = vtanh.pop %v886
    %v894 = vmul.f32 %v892, %v802
    %896 = vrot.lane.b32.xlu0 %v893, 64
    %v897 = vpop.permute.xlu0 %896
    %v899 = vmul.f32 %v892, %v897
    %901 = vrot.lane.b32.xlu0 %v899, 32
    %v902 = vpop.permute.xlu0 %901
    %v904 = vadd.f32 %v894, %v902
    %v905 = vtanh.pop %v904
    %907 = vrot.lane.b32.xlu0 %v905, 64
    %v908 = vpop.permute.xlu0 %907
    %v910 = vmul.f32 %v892, %v908
    %912 = vrot.lane.b32.xlu0 %v910, 32
    %v913 = vpop.permute.xlu0 %912
    %915 = vst.msk [vmem:[#allocation2 + $0x30] sm:$0xff] %vm200, %v913
    %v916 = vsel %vm200, %v913, 0
    %918 = vmatprep.subr.mxu0 0.0
    %919 = vmatpush1.msra.mxu0 %v196
    %920 = vmatprep.subr.mxu0 0.0
    %921 = vmatpush1.msra.mxu0 %v197
    %922 = vmatprep.subr.mxu0 0.0
    %923 = vmatpush1.msra.mxu0 %v198
    %924 = vmatprep.subr.mxu0 0.0
    %925 = vmatpush1.msra.mxu0 %v199
    %926 = vmatprep.subr.mxu0 0.0
    %927 = vmatpush1.msra.mxu0 0.0
    %928 = vmatprep.subr.mxu0 0.0
    %929 = vmatpush1.msra.mxu0 0.0
    %930 = vmatprep.subr.mxu0 0.0
    %931 = vmatpush1.msra.mxu0 0.0
    %932 = vmatprep.subr.mxu0 0.0
    %933 = vmatpush1.msra.mxu0 0.0
    %934 = vmatprep.subr.mxu0 0.0
    %935 = vmatpush1.msra.mxu0 0.0
    %936 = vmatprep.subr.mxu0 0.0
    %937 = vmatpush1.msra.mxu0 0.0
    %938 = vmatprep.subr.mxu0 0.0
    %939 = vmatpush1.msra.mxu0 0.0
    %940 = vmatprep.subr.mxu0 0.0
    %941 = vmatpush1.msra.mxu0 0.0
    %942 = vmatprep.subr.mxu0 0.0
    %943 = vmatpush1.msra.mxu0 0.0
    %944 = vmatprep.subr.mxu0 0.0
    %945 = vmatpush1.msra.mxu0 0.0
    %946 = vmatprep.subr.mxu0 0.0
    %947 = vmatpush1.msra.mxu0 0.0
    %948 = vmatprep.subr.mxu0 0.0
    %949 = vmatpush1.msra.mxu0 0.0
    %950 = vmatprep.subr.mxu0 0.0
    %951 = vmatpush1.msra.mxu0 0.0
    %952 = vmatprep.subr.mxu0 0.0
    %953 = vmatpush1.msra.mxu0 0.0
    %954 = vmatprep.subr.mxu0 0.0
    %955 = vmatpush1.msra.mxu0 0.0
    %956 = vmatprep.subr.mxu0 0.0
    %957 = vmatpush1.msra.mxu0 0.0
    %958 = vmatprep.subr.mxu0 0.0
    %959 = vmatpush1.msra.mxu0 0.0
    %960 = vmatprep.subr.mxu0 0.0
    %961 = vmatpush1.msra.mxu0 0.0
    %962 = vmatprep.subr.mxu0 0.0
    %963 = vmatpush1.msra.mxu0 0.0
    %964 = vmatprep.subr.mxu0 0.0
    %965 = vmatpush1.msra.mxu0 0.0
    %966 = vmatprep.subr.mxu0 0.0
    %967 = vmatpush1.msra.mxu0 0.0
    %968 = vmatprep.subr.mxu0 0.0
    %969 = vmatpush1.msra.mxu0 0.0
    %970 = vmatprep.subr.mxu0 0.0
    %971 = vmatpush1.msra.mxu0 0.0
    %972 = vmatprep.subr.mxu0 0.0
    %973 = vmatpush1.msra.mxu0 0.0
    %974 = vmatprep.subr.mxu0 0.0
    %975 = vmatpush1.msra.mxu0 0.0
    %976 = vmatprep.subr.mxu0 0.0
    %977 = vmatpush1.msra.mxu0 0.0
    %978 = vmatprep.subr.mxu0 0.0
    %979 = vmatpush1.msra.mxu0 0.0
    %980 = vmatprep.subr.mxu0 0.0
    %981 = vmatpush1.msra.mxu0 0.0
    %982 = vmatprep.mubr.f32.mxu0 0.0
    %983 = vmatmul.mubr.f32.gmra.mrb[0].mxu0 %v916
    %v984 = vpop.f32.mrb[0].mxu0
    %v985 = vadd.f32 0.0, %v984
    %v986 = vpop.f32.mrb[0].mxu0
    %987 = vdwg.mxu0
    %v988 = vadd.f32 %v193, %v985
    %v989 = vxor.u32 %v988, 2147483648
    %v990 = vmul.f32 %v989, 1.442695
    %v991 = vpow.pop %v990
    %v992 = vadd.f32 %v991, 1.0
    %v993 = vrcp.pop %v992
    %v994 = vmul.f32 1.0, %v993
    %v995 = vtanh.pop %v988
    %v996 = vmul.f32 %v994, %v904
    %998 = vrot.lane.b32.xlu0 %v995, 64
    %v999 = vpop.permute.xlu0 %998
    %v1001 = vmul.f32 %v994, %v999
    %1003 = vrot.lane.b32.xlu0 %v1001, 32
    %v1004 = vpop.permute.xlu0 %1003
    %v1006 = vadd.f32 %v996, %v1004
    %v1007 = vtanh.pop %v1006
    %1009 = vrot.lane.b32.xlu0 %v1007, 64
    %v1010 = vpop.permute.xlu0 %1009
    %v1012 = vmul.f32 %v994, %v1010
    %1014 = vrot.lane.b32.xlu0 %v1012, 32
    %v1015 = vpop.permute.xlu0 %1014
    %1017 = vst.msk [vmem:[#allocation2 + $0x38] sm:$0xff] %vm200, %v1015
    %v1018 = vld [vmem:[#allocation2] sm:$0xff]
    %v1019 = vld [vmem:[#allocation2 + $0x8] sm:$0xff]
    %v1020 = vld [vmem:[#allocation2 + $0x10] sm:$0xff]
    %v1021 = vld [vmem:[#allocation2 + $0x18] sm:$0xff]
    %v1022 = vld [vmem:[#allocation2 + $0x20] sm:$0xff]
    %v1023 = vld [vmem:[#allocation2 + $0x28] sm:$0xff]
    %v1024 = vld [vmem:[#allocation2 + $0x30] sm:$0xff]
    %v1025 = vld [vmem:[#allocation2 + $0x38] sm:$0xff]
    %v1026 = vld [vmem:[%s4] sm:$0xff]
    %v1027 = vld [vmem:[%s4 + $0x8] sm:$0xff]
    %v1028 = vld [vmem:[%s4 + $0x10] sm:$0xff]
    %v1029 = vld [vmem:[%s4 + $0x18] sm:$0xff]
    %v1030 = vld [vmem:[%s6] sm:$0x1]
    %v1032 = vlaneseq
    %v1033 = vshrl.u32 %v1032, 7
    %v1034 = vsub.s32 0, %v1033
    %v1035 = vrot.slane %v1030, %v1034
    %v1038 = vsel %vm200, %v1018, 0
    %v1041 = vsel %vm200, %v1019, 0
    %v1044 = vsel %vm200, %v1020, 0
    %v1047 = vsel %vm200, %v1021, 0
    %v1050 = vsel %vm200, %v1022, 0
    %v1053 = vsel %vm200, %v1023, 0
    %v1056 = vsel %vm200, %v1024, 0
    %v1059 = vsel %vm200, %v1025, 0
    %1061 = vmatprep.subr.mxu0 0.0
    %1062 = vmatpush1.msra.mxu0 %v1026
    %1063 = vmatprep.subr.mxu0 0.0
    %1064 = vmatpush1.msra.mxu0 %v1027
    %1065 = vmatprep.subr.mxu0 0.0
    %1066 = vmatpush1.msra.mxu0 %v1028
    %1067 = vmatprep.subr.mxu0 0.0
    %1068 = vmatpush1.msra.mxu0 %v1029
    %1069 = vmatprep.subr.mxu0 0.0
    %1070 = vmatpush1.msra.mxu0 0.0
    %1071 = vmatprep.subr.mxu0 0.0
    %1072 = vmatpush1.msra.mxu0 0.0
    %1073 = vmatprep.subr.mxu0 0.0
    %1074 = vmatpush1.msra.mxu0 0.0
    %1075 = vmatprep.subr.mxu0 0.0
    %1076 = vmatpush1.msra.mxu0 0.0
    %1077 = vmatprep.subr.mxu0 0.0
    %1078 = vmatpush1.msra.mxu0 0.0
    %1079 = vmatprep.subr.mxu0 0.0
    %1080 = vmatpush1.msra.mxu0 0.0
    %1081 = vmatprep.subr.mxu0 0.0
    %1082 = vmatpush1.msra.mxu0 0.0
    %1083 = vmatprep.subr.mxu0 0.0
    %1084 = vmatpush1.msra.mxu0 0.0
    %1085 = vmatprep.subr.mxu0 0.0
    %1086 = vmatpush1.msra.mxu0 0.0
    %1087 = vmatprep.subr.mxu0 0.0
    %1088 = vmatpush1.msra.mxu0 0.0
    %1089 = vmatprep.subr.mxu0 0.0
    %1090 = vmatpush1.msra.mxu0 0.0
    %1091 = vmatprep.subr.mxu0 0.0
    %1092 = vmatpush1.msra.mxu0 0.0
    %1093 = vmatprep.subr.mxu0 0.0
    %1094 = vmatpush1.msra.mxu0 0.0
    %1095 = vmatprep.subr.mxu0 0.0
    %1096 = vmatpush1.msra.mxu0 0.0
    %1097 = vmatprep.subr.mxu0 0.0
    %1098 = vmatpush1.msra.mxu0 0.0
    %1099 = vmatprep.subr.mxu0 0.0
    %1100 = vmatpush1.msra.mxu0 0.0
    %1101 = vmatprep.subr.mxu0 0.0
    %1102 = vmatpush1.msra.mxu0 0.0
    %1103 = vmatprep.subr.mxu0 0.0
    %1104 = vmatpush1.msra.mxu0 0.0
    %1105 = vmatprep.subr.mxu0 0.0
    %1106 = vmatpush1.msra.mxu0 0.0
    %1107 = vmatprep.subr.mxu0 0.0
    %1108 = vmatpush1.msra.mxu0 0.0
    %1109 = vmatprep.subr.mxu0 0.0
    %1110 = vmatpush1.msra.mxu0 0.0
    %1111 = vmatprep.subr.mxu0 0.0
    %1112 = vmatpush1.msra.mxu0 0.0
    %1113 = vmatprep.subr.mxu0 0.0
    %1114 = vmatpush1.msra.mxu0 0.0
    %1115 = vmatprep.subr.mxu0 0.0
    %1116 = vmatpush1.msra.mxu0 0.0
    %1117 = vmatprep.subr.mxu0 0.0
    %1118 = vmatpush1.msra.mxu0 0.0
    %1119 = vmatprep.subr.mxu0 0.0
    %1120 = vmatpush1.msra.mxu0 0.0
    %1121 = vmatprep.subr.mxu0 0.0
    %1122 = vmatpush1.msra.mxu0 0.0
    %1123 = vmatprep.subr.mxu0 0.0
    %1124 = vmatpush1.msra.mxu0 0.0
    %1125 = vmatprep.mubr.f32.mxu0 0.0
    %1126 = vmatmul.mubr.f32.gmra.mrb[0].mxu0 %v1038
    %v1127 = vpop.f32.mrb[0].mxu0
    %v1128 = vadd.f32 %v1035, %v1127
    %v1129 = vpop.f32.mrb[0].mxu0
    %1130 = vmatprep.mubr.f32.mxu0 0.0
    %1131 = vmatmul.mubr.f32.gmra.mrb[0].mxu0 %v1041
    %v1132 = vpop.f32.mrb[0].mxu0
    %v1133 = vadd.f32 %v1035, %v1132
    %v1134 = vpop.f32.mrb[0].mxu0
    %1135 = vmatprep.mubr.f32.mxu0 0.0
    %1136 = vmatmul.mubr.f32.gmra.mrb[0].mxu0 %v1044
    %v1137 = vpop.f32.mrb[0].mxu0
    %v1138 = vadd.f32 %v1035, %v1137
    %v1139 = vpop.f32.mrb[0].mxu0
    %1140 = vmatprep.mubr.f32.mxu0 0.0
    %1141 = vmatmul.mubr.f32.gmra.mrb[0].mxu0 %v1047
    %v1142 = vpop.f32.mrb[0].mxu0
    %v1143 = vadd.f32 %v1035, %v1142
    %v1144 = vpop.f32.mrb[0].mxu0
    %1145 = vmatprep.mubr.f32.mxu0 0.0
    %1146 = vmatmul.mubr.f32.gmra.mrb[0].mxu0 %v1050
    %v1147 = vpop.f32.mrb[0].mxu0
    %v1148 = vadd.f32 %v1035, %v1147
    %v1149 = vpop.f32.mrb[0].mxu0
    %1150 = vmatprep.mubr.f32.mxu0 0.0
    %1151 = vmatmul.mubr.f32.gmra.mrb[0].mxu0 %v1053
    %v1152 = vpop.f32.mrb[0].mxu0
    %v1153 = vadd.f32 %v1035, %v1152
    %v1154 = vpop.f32.mrb[0].mxu0
    %1155 = vmatprep.mubr.f32.mxu0 0.0
    %1156 = vmatmul.mubr.f32.gmra.mrb[0].mxu0 %v1056
    %v1157 = vpop.f32.mrb[0].mxu0
    %v1158 = vadd.f32 %v1035, %v1157
    %v1159 = vpop.f32.mrb[0].mxu0
    %1160 = vmatprep.mubr.f32.mxu0 0.0
    %1161 = vmatmul.mubr.f32.gmra.mrb[0].mxu0 %v1059
    %v1162 = vpop.f32.mrb[0].mxu0
    %v1163 = vadd.f32 %v1035, %v1162
    %v1164 = vpop.f32.mrb[0].mxu0
    %1165 = vdwg.mxu0
    %v1166 = vld [vmem:[%s5] sm:$0xff]
    %v1167 = vld [vmem:[%s5 + $0x8] sm:$0xff]
    %v1168 = vld [vmem:[%s5 + $0x10] sm:$0xff]
    %v1169 = vld [vmem:[%s5 + $0x18] sm:$0xff]
    %1170 = vmatprep.subr.mxu0 0.0
    %1171 = vmatpush1.msra.mxu0 %v1166
    %1172 = vmatprep.subr.mxu0 0.0
    %1173 = vmatpush1.msra.mxu0 %v1167
    %1174 = vmatprep.subr.mxu0 0.0
    %1175 = vmatpush1.msra.mxu0 %v1168
    %1176 = vmatprep.subr.mxu0 0.0
    %1177 = vmatpush1.msra.mxu0 %v1169
    %1178 = vmatprep.subr.mxu0 0.0
    %1179 = vmatpush1.msra.mxu0 0.0
    %1180 = vmatprep.subr.mxu0 0.0
    %1181 = vmatpush1.msra.mxu0 0.0
    %1182 = vmatprep.subr.mxu0 0.0
    %1183 = vmatpush1.msra.mxu0 0.0
    %1184 = vmatprep.subr.mxu0 0.0
    %1185 = vmatpush1.msra.mxu0 0.0
    %1186 = vmatprep.subr.mxu0 0.0
    %1187 = vmatpush1.msra.mxu0 0.0
    %1188 = vmatprep.subr.mxu0 0.0
    %1189 = vmatpush1.msra.mxu0 0.0
    %1190 = vmatprep.subr.mxu0 0.0
    %1191 = vmatpush1.msra.mxu0 0.0
    %1192 = vmatprep.subr.mxu0 0.0
    %1193 = vmatpush1.msra.mxu0 0.0
    %1194 = vmatprep.subr.mxu0 0.0
    %1195 = vmatpush1.msra.mxu0 0.0
    %1196 = vmatprep.subr.mxu0 0.0
    %1197 = vmatpush1.msra.mxu0 0.0
    %1198 = vmatprep.subr.mxu0 0.0
    %1199 = vmatpush1.msra.mxu0 0.0
    %1200 = vmatprep.subr.mxu0 0.0
    %1201 = vmatpush1.msra.mxu0 0.0
    %1202 = vmatprep.subr.mxu0 0.0
    %1203 = vmatpush1.msra.mxu0 0.0
    %1204 = vmatprep.subr.mxu0 0.0
    %1205 = vmatpush1.msra.mxu0 0.0
    %1206 = vmatprep.subr.mxu0 0.0
    %1207 = vmatpush1.msra.mxu0 0.0
    %1208 = vmatprep.subr.mxu0 0.0
    %1209 = vmatpush1.msra.mxu0 0.0
    %1210 = vmatprep.subr.mxu0 0.0
    %1211 = vmatpush1.msra.mxu0 0.0
    %1212 = vmatprep.subr.mxu0 0.0
    %1213 = vmatpush1.msra.mxu0 0.0
    %1214 = vmatprep.subr.mxu0 0.0
    %1215 = vmatpush1.msra.mxu0 0.0
    %1216 = vmatprep.subr.mxu0 0.0
    %1217 = vmatpush1.msra.mxu0 0.0
    %1218 = vmatprep.subr.mxu0 0.0
    %1219 = vmatpush1.msra.mxu0 0.0
    %1220 = vmatprep.subr.mxu0 0.0
    %1221 = vmatpush1.msra.mxu0 0.0
    %1222 = vmatprep.subr.mxu0 0.0
    %1223 = vmatpush1.msra.mxu0 0.0
    %1224 = vmatprep.subr.mxu0 0.0
    %1225 = vmatpush1.msra.mxu0 0.0
    %1226 = vmatprep.subr.mxu0 0.0
    %1227 = vmatpush1.msra.mxu0 0.0
    %1228 = vmatprep.subr.mxu0 0.0
    %1229 = vmatpush1.msra.mxu0 0.0
    %1230 = vmatprep.subr.mxu0 0.0
    %1231 = vmatpush1.msra.mxu0 0.0
    %1232 = vmatprep.subr.mxu0 0.0
    %1233 = vmatpush1.msra.mxu0 0.0
    %1234 = vmatprep.mubr.f32.mxu0 0.0
    %1235 = vmatmul.mubr.f32.gmra.mrb[0].mxu0 %v202
    %v1236 = vpop.f32.mrb[0].mxu0
    %v1237 = vadd.f32 0.0, %v1236
    %v1238 = vpop.f32.mrb[0].mxu0
    %1239 = vdwg.mxu0
    %v1240 = vadd.f32 %v1128, %v1237
    %v1241 = vxor.u32 %v1240, 2147483648
    %v1242 = vmul.f32 %v1241, 1.442695
    %v1243 = vpow.pop %v1242
    %v1244 = vadd.f32 %v1243, 1.0
    %v1245 = vrcp.pop %v1244
    %v1246 = vmul.f32 1.0, %v1245
    %v1247 = vtanh.pop %v1240
    %v1248 = vmul.f32 %v1246, 0.0
    %1250 = vrot.lane.b32.xlu0 %v1247, 64
    %v1251 = vpop.permute.xlu0 %1250
    %v1253 = vmul.f32 %v1246, %v1251
    %1255 = vrot.lane.b32.xlu0 %v1253, 32
    %v1256 = vpop.permute.xlu0 %1255
    %v1258 = vadd.f32 %v1248, %v1256
    %v1259 = vtanh.pop %v1258
    %1261 = vrot.lane.b32.xlu0 %v1259, 64
    %v1262 = vpop.permute.xlu0 %1261
    %v1264 = vmul.f32 %v1246, %v1262
    %1266 = vrot.lane.b32.xlu0 %v1264, 32
    %v1267 = vpop.permute.xlu0 %1266
    %1269 = vst.msk [vmem:[#allocation2] sm:$0xff] %vm200, %v1267
    %v1270 = vsel %vm200, %v1267, 0
    %1272 = vmatprep.subr.mxu0 0.0
    %1273 = vmatpush1.msra.mxu0 %v1166
    %1274 = vmatprep.subr.mxu0 0.0
    %1275 = vmatpush1.msra.mxu0 %v1167
    %1276 = vmatprep.subr.mxu0 0.0
    %1277 = vmatpush1.msra.mxu0 %v1168
    %1278 = vmatprep.subr.mxu0 0.0
    %1279 = vmatpush1.msra.mxu0 %v1169
    %1280 = vmatprep.subr.mxu0 0.0
    %1281 = vmatpush1.msra.mxu0 0.0
    %1282 = vmatprep.subr.mxu0 0.0
    %1283 = vmatpush1.msra.mxu0 0.0
    %1284 = vmatprep.subr.mxu0 0.0
    %1285 = vmatpush1.msra.mxu0 0.0
    %1286 = vmatprep.subr.mxu0 0.0
    %1287 = vmatpush1.msra.mxu0 0.0
    %1288 = vmatprep.subr.mxu0 0.0
    %1289 = vmatpush1.msra.mxu0 0.0
    %1290 = vmatprep.subr.mxu0 0.0
    %1291 = vmatpush1.msra.mxu0 0.0
    %1292 = vmatprep.subr.mxu0 0.0
    %1293 = vmatpush1.msra.mxu0 0.0
    %1294 = vmatprep.subr.mxu0 0.0
    %1295 = vmatpush1.msra.mxu0 0.0
    %1296 = vmatprep.subr.mxu0 0.0
    %1297 = vmatpush1.msra.mxu0 0.0
    %1298 = vmatprep.subr.mxu0 0.0
    %1299 = vmatpush1.msra.mxu0 0.0
    %1300 = vmatprep.subr.mxu0 0.0
    %1301 = vmatpush1.msra.mxu0 0.0
    %1302 = vmatprep.subr.mxu0 0.0
    %1303 = vmatpush1.msra.mxu0 0.0
    %1304 = vmatprep.subr.mxu0 0.0
    %1305 = vmatpush1.msra.mxu0 0.0
    %1306 = vmatprep.subr.mxu0 0.0
    %1307 = vmatpush1.msra.mxu0 0.0
    %1308 = vmatprep.subr.mxu0 0.0
    %1309 = vmatpush1.msra.mxu0 0.0
    %1310 = vmatprep.subr.mxu0 0.0
    %1311 = vmatpush1.msra.mxu0 0.0
    %1312 = vmatprep.subr.mxu0 0.0
    %1313 = vmatpush1.msra.mxu0 0.0
    %1314 = vmatprep.subr.mxu0 0.0
    %1315 = vmatpush1.msra.mxu0 0.0
    %1316 = vmatprep.subr.mxu0 0.0
    %1317 = vmatpush1.msra.mxu0 0.0
    %1318 = vmatprep.subr.mxu0 0.0
    %1319 = vmatpush1.msra.mxu0 0.0
    %1320 = vmatprep.subr.mxu0 0.0
    %1321 = vmatpush1.msra.mxu0 0.0
    %1322 = vmatprep.subr.mxu0 0.0
    %1323 = vmatpush1.msra.mxu0 0.0
    %1324 = vmatprep.subr.mxu0 0.0
    %1325 = vmatpush1.msra.mxu0 0.0
    %1326 = vmatprep.subr.mxu0 0.0
    %1327 = vmatpush1.msra.mxu0 0.0
    %1328 = vmatprep.subr.mxu0 0.0
    %1329 = vmatpush1.msra.mxu0 0.0
    %1330 = vmatprep.subr.mxu0 0.0
    %1331 = vmatpush1.msra.mxu0 0.0
    %1332 = vmatprep.subr.mxu0 0.0
    %1333 = vmatpush1.msra.mxu0 0.0
    %1334 = vmatprep.subr.mxu0 0.0
    %1335 = vmatpush1.msra.mxu0 0.0
    %1336 = vmatprep.mubr.f32.mxu0 0.0
    %1337 = vmatmul.mubr.f32.gmra.mrb[0].mxu0 %v1270
    %v1338 = vpop.f32.mrb[0].mxu0
    %v1339 = vadd.f32 0.0, %v1338
    %v1340 = vpop.f32.mrb[0].mxu0
    %1341 = vdwg.mxu0
    %v1342 = vadd.f32 %v1133, %v1339
    %v1343 = vxor.u32 %v1342, 2147483648
    %v1344 = vmul.f32 %v1343, 1.442695
    %v1345 = vpow.pop %v1344
    %v1346 = vadd.f32 %v1345, 1.0
    %v1347 = vrcp.pop %v1346
    %v1348 = vmul.f32 1.0, %v1347
    %v1349 = vtanh.pop %v1342
    %v1350 = vmul.f32 %v1348, %v1258
    %1352 = vrot.lane.b32.xlu0 %v1349, 64
    %v1353 = vpop.permute.xlu0 %1352
    %v1355 = vmul.f32 %v1348, %v1353
    %1357 = vrot.lane.b32.xlu0 %v1355, 32
    %v1358 = vpop.permute.xlu0 %1357
    %v1360 = vadd.f32 %v1350, %v1358
    %v1361 = vtanh.pop %v1360
    %1363 = vrot.lane.b32.xlu0 %v1361, 64
    %v1364 = vpop.permute.xlu0 %1363
    %v1366 = vmul.f32 %v1348, %v1364
    %1368 = vrot.lane.b32.xlu0 %v1366, 32
    %v1369 = vpop.permute.xlu0 %1368
    %1371 = vst.msk [vmem:[#allocation2 + $0x8] sm:$0xff] %vm200, %v1369
    %v1372 = vsel %vm200, %v1369, 0
    %1374 = vmatprep.subr.mxu0 0.0
    %1375 = vmatpush1.msra.mxu0 %v1166
    %1376 = vmatprep.subr.mxu0 0.0
    %1377 = vmatpush1.msra.mxu0 %v1167
    %1378 = vmatprep.subr.mxu0 0.0
    %1379 = vmatpush1.msra.mxu0 %v1168
    %1380 = vmatprep.subr.mxu0 0.0
    %1381 = vmatpush1.msra.mxu0 %v1169
    %1382 = vmatprep.subr.mxu0 0.0
    %1383 = vmatpush1.msra.mxu0 0.0
    %1384 = vmatprep.subr.mxu0 0.0
    %1385 = vmatpush1.msra.mxu0 0.0
    %1386 = vmatprep.subr.mxu0 0.0
    %1387 = vmatpush1.msra.mxu0 0.0
    %1388 = vmatprep.subr.mxu0 0.0
    %1389 = vmatpush1.msra.mxu0 0.0
    %1390 = vmatprep.subr.mxu0 0.0
    %1391 = vmatpush1.msra.mxu0 0.0
    %1392 = vmatprep.subr.mxu0 0.0
    %1393 = vmatpush1.msra.mxu0 0.0
    %1394 = vmatprep.subr.mxu0 0.0
    %1395 = vmatpush1.msra.mxu0 0.0
    %1396 = vmatprep.subr.mxu0 0.0
    %1397 = vmatpush1.msra.mxu0 0.0
    %1398 = vmatprep.subr.mxu0 0.0
    %1399 = vmatpush1.msra.mxu0 0.0
    %1400 = vmatprep.subr.mxu0 0.0
    %1401 = vmatpush1.msra.mxu0 0.0
    %1402 = vmatprep.subr.mxu0 0.0
    %1403 = vmatpush1.msra.mxu0 0.0
    %1404 = vmatprep.subr.mxu0 0.0
    %1405 = vmatpush1.msra.mxu0 0.0
    %1406 = vmatprep.subr.mxu0 0.0
    %1407 = vmatpush1.msra.mxu0 0.0
    %1408 = vmatprep.subr.mxu0 0.0
    %1409 = vmatpush1.msra.mxu0 0.0
    %1410 = vmatprep.subr.mxu0 0.0
    %1411 = vmatpush1.msra.mxu0 0.0
    %1412 = vmatprep.subr.mxu0 0.0
    %1413 = vmatpush1.msra.mxu0 0.0
    %1414 = vmatprep.subr.mxu0 0.0
    %1415 = vmatpush1.msra.mxu0 0.0
    %1416 = vmatprep.subr.mxu0 0.0
    %1417 = vmatpush1.msra.mxu0 0.0
    %1418 = vmatprep.subr.mxu0 0.0
    %1419 = vmatpush1.msra.mxu0 0.0
    %1420 = vmatprep.subr.mxu0 0.0
    %1421 = vmatpush1.msra.mxu0 0.0
    %1422 = vmatprep.subr.mxu0 0.0
    %1423 = vmatpush1.msra.mxu0 0.0
    %1424 = vmatprep.subr.mxu0 0.0
    %1425 = vmatpush1.msra.mxu0 0.0
    %1426 = vmatprep.subr.mxu0 0.0
    %1427 = vmatpush1.msra.mxu0 0.0
    %1428 = vmatprep.subr.mxu0 0.0
    %1429 = vmatpush1.msra.mxu0 0.0
    %1430 = vmatprep.subr.mxu0 0.0
    %1431 = vmatpush1.msra.mxu0 0.0
    %1432 = vmatprep.subr.mxu0 0.0
    %1433 = vmatpush1.msra.mxu0 0.0
    %1434 = vmatprep.subr.mxu0 0.0
    %1435 = vmatpush1.msra.mxu0 0.0
    %1436 = vmatprep.subr.mxu0 0.0
    %1437 = vmatpush1.msra.mxu0 0.0
    %1438 = vmatprep.mubr.f32.mxu0 0.0
    %1439 = vmatmul.mubr.f32.gmra.mrb[0].mxu0 %v1372
    %v1440 = vpop.f32.mrb[0].mxu0
    %v1441 = vadd.f32 0.0, %v1440
    %v1442 = vpop.f32.mrb[0].mxu0
    %1443 = vdwg.mxu0
    %v1444 = vadd.f32 %v1138, %v1441
    %v1445 = vxor.u32 %v1444, 2147483648
    %v1446 = vmul.f32 %v1445, 1.442695
    %v1447 = vpow.pop %v1446
    %v1448 = vadd.f32 %v1447, 1.0
    %v1449 = vrcp.pop %v1448
    %v1450 = vmul.f32 1.0, %v1449
    %v1451 = vtanh.pop %v1444
    %v1452 = vmul.f32 %v1450, %v1360
    %1454 = vrot.lane.b32.xlu0 %v1451, 64
    %v1455 = vpop.permute.xlu0 %1454
    %v1457 = vmul.f32 %v1450, %v1455
    %1459 = vrot.lane.b32.xlu0 %v1457, 32
    %v1460 = vpop.permute.xlu0 %1459
    %v1462 = vadd.f32 %v1452, %v1460
    %v1463 = vtanh.pop %v1462
    %1465 = vrot.lane.b32.xlu0 %v1463, 64
    %v1466 = vpop.permute.xlu0 %1465
    %v1468 = vmul.f32 %v1450, %v1466
    %1470 = vrot.lane.b32.xlu0 %v1468, 32
    %v1471 = vpop.permute.xlu0 %1470
    %1473 = vst.msk [vmem:[#allocation2 + $0x10] sm:$0xff] %vm200, %v1471
    %v1474 = vsel %vm200, %v1471, 0
    %1476 = vmatprep.subr.mxu0 0.0
    %1477 = vmatpush1.msra.mxu0 %v1166
    %1478 = vmatprep.subr.mxu0 0.0
    %1479 = vmatpush1.msra.mxu0 %v1167
    %1480 = vmatprep.subr.mxu0 0.0
    %1481 = vmatpush1.msra.mxu0 %v1168
    %1482 = vmatprep.subr.mxu0 0.0
    %1483 = vmatpush1.msra.mxu0 %v1169
    %1484 = vmatprep.subr.mxu0 0.0
    %1485 = vmatpush1.msra.mxu0 0.0
    %1486 = vmatprep.subr.mxu0 0.0
    %1487 = vmatpush1.msra.mxu0 0.0
    %1488 = vmatprep.subr.mxu0 0.0
    %1489 = vmatpush1.msra.mxu0 0.0
    %1490 = vmatprep.subr.mxu0 0.0
    %1491 = vmatpush1.msra.mxu0 0.0
    %1492 = vmatprep.subr.mxu0 0.0
    %1493 = vmatpush1.msra.mxu0 0.0
    %1494 = vmatprep.subr.mxu0 0.0
    %1495 = vmatpush1.msra.mxu0 0.0
    %1496 = vmatprep.subr.mxu0 0.0
    %1497 = vmatpush1.msra.mxu0 0.0
    %1498 = vmatprep.subr.mxu0 0.0
    %1499 = vmatpush1.msra.mxu0 0.0
    %1500 = vmatprep.subr.mxu0 0.0
    %1501 = vmatpush1.msra.mxu0 0.0
    %1502 = vmatprep.subr.mxu0 0.0
    %1503 = vmatpush1.msra.mxu0 0.0
    %1504 = vmatprep.subr.mxu0 0.0
    %1505 = vmatpush1.msra.mxu0 0.0
    %1506 = vmatprep.subr.mxu0 0.0
    %1507 = vmatpush1.msra.mxu0 0.0
    %1508 = vmatprep.subr.mxu0 0.0
    %1509 = vmatpush1.msra.mxu0 0.0
    %1510 = vmatprep.subr.mxu0 0.0
    %1511 = vmatpush1.msra.mxu0 0.0
    %1512 = vmatprep.subr.mxu0 0.0
    %1513 = vmatpush1.msra.mxu0 0.0
    %1514 = vmatprep.subr.mxu0 0.0
    %1515 = vmatpush1.msra.mxu0 0.0
    %1516 = vmatprep.subr.mxu0 0.0
    %1517 = vmatpush1.msra.mxu0 0.0
    %1518 = vmatprep.subr.mxu0 0.0
    %1519 = vmatpush1.msra.mxu0 0.0
    %1520 = vmatprep.subr.mxu0 0.0
    %1521 = vmatpush1.msra.mxu0 0.0
    %1522 = vmatprep.subr.mxu0 0.0
    %1523 = vmatpush1.msra.mxu0 0.0
    %1524 = vmatprep.subr.mxu0 0.0
    %1525 = vmatpush1.msra.mxu0 0.0
    %1526 = vmatprep.subr.mxu0 0.0
    %1527 = vmatpush1.msra.mxu0 0.0
    %1528 = vmatprep.subr.mxu0 0.0
    %1529 = vmatpush1.msra.mxu0 0.0
    %1530 = vmatprep.subr.mxu0 0.0
    %1531 = vmatpush1.msra.mxu0 0.0
    %1532 = vmatprep.subr.mxu0 0.0
    %1533 = vmatpush1.msra.mxu0 0.0
    %1534 = vmatprep.subr.mxu0 0.0
    %1535 = vmatpush1.msra.mxu0 0.0
    %1536 = vmatprep.subr.mxu0 0.0
    %1537 = vmatpush1.msra.mxu0 0.0
    %1538 = vmatprep.subr.mxu0 0.0
    %1539 = vmatpush1.msra.mxu0 0.0
    %1540 = vmatprep.mubr.f32.mxu0 0.0
    %1541 = vmatmul.mubr.f32.gmra.mrb[0].mxu0 %v1474
    %v1542 = vpop.f32.mrb[0].mxu0
    %v1543 = vadd.f32 0.0, %v1542
    %v1544 = vpop.f32.mrb[0].mxu0
    %1545 = vdwg.mxu0
    %v1546 = vadd.f32 %v1143, %v1543
    %v1547 = vxor.u32 %v1546, 2147483648
    %v1548 = vmul.f32 %v1547, 1.442695
    %v1549 = vpow.pop %v1548
    %v1550 = vadd.f32 %v1549, 1.0
    %v1551 = vrcp.pop %v1550
    %v1552 = vmul.f32 1.0, %v1551
    %v1553 = vtanh.pop %v1546
    %v1554 = vmul.f32 %v1552, %v1462
    %1556 = vrot.lane.b32.xlu0 %v1553, 64
    %v1557 = vpop.permute.xlu0 %1556
    %v1559 = vmul.f32 %v1552, %v1557
    %1561 = vrot.lane.b32.xlu0 %v1559, 32
    %v1562 = vpop.permute.xlu0 %1561
    %v1564 = vadd.f32 %v1554, %v1562
    %v1565 = vtanh.pop %v1564
    %1567 = vrot.lane.b32.xlu0 %v1565, 64
    %v1568 = vpop.permute.xlu0 %1567
    %v1570 = vmul.f32 %v1552, %v1568
    %1572 = vrot.lane.b32.xlu0 %v1570, 32
    %v1573 = vpop.permute.xlu0 %1572
    %1575 = vst.msk [vmem:[#allocation2 + $0x18] sm:$0xff] %vm200, %v1573
    %v1576 = vsel %vm200, %v1573, 0
    %1578 = vmatprep.subr.mxu0 0.0
    %1579 = vmatpush1.msra.mxu0 %v1166
    %1580 = vmatprep.subr.mxu0 0.0
    %1581 = vmatpush1.msra.mxu0 %v1167
    %1582 = vmatprep.subr.mxu0 0.0
    %1583 = vmatpush1.msra.mxu0 %v1168
    %1584 = vmatprep.subr.mxu0 0.0
    %1585 = vmatpush1.msra.mxu0 %v1169
    %1586 = vmatprep.subr.mxu0 0.0
    %1587 = vmatpush1.msra.mxu0 0.0
    %1588 = vmatprep.subr.mxu0 0.0
    %1589 = vmatpush1.msra.mxu0 0.0
    %1590 = vmatprep.subr.mxu0 0.0
    %1591 = vmatpush1.msra.mxu0 0.0
    %1592 = vmatprep.subr.mxu0 0.0
    %1593 = vmatpush1.msra.mxu0 0.0
    %1594 = vmatprep.subr.mxu0 0.0
    %1595 = vmatpush1.msra.mxu0 0.0
    %1596 = vmatprep.subr.mxu0 0.0
    %1597 = vmatpush1.msra.mxu0 0.0
    %1598 = vmatprep.subr.mxu0 0.0
    %1599 = vmatpush1.msra.mxu0 0.0
    %1600 = vmatprep.subr.mxu0 0.0
    %1601 = vmatpush1.msra.mxu0 0.0
    %1602 = vmatprep.subr.mxu0 0.0
    %1603 = vmatpush1.msra.mxu0 0.0
    %1604 = vmatprep.subr.mxu0 0.0
    %1605 = vmatpush1.msra.mxu0 0.0
    %1606 = vmatprep.subr.mxu0 0.0
    %1607 = vmatpush1.msra.mxu0 0.0
    %1608 = vmatprep.subr.mxu0 0.0
    %1609 = vmatpush1.msra.mxu0 0.0
    %1610 = vmatprep.subr.mxu0 0.0
    %1611 = vmatpush1.msra.mxu0 0.0
    %1612 = vmatprep.subr.mxu0 0.0
    %1613 = vmatpush1.msra.mxu0 0.0
    %1614 = vmatprep.subr.mxu0 0.0
    %1615 = vmatpush1.msra.mxu0 0.0
    %1616 = vmatprep.subr.mxu0 0.0
    %1617 = vmatpush1.msra.mxu0 0.0
    %1618 = vmatprep.subr.mxu0 0.0
    %1619 = vmatpush1.msra.mxu0 0.0
    %1620 = vmatprep.subr.mxu0 0.0
    %1621 = vmatpush1.msra.mxu0 0.0
    %1622 = vmatprep.subr.mxu0 0.0
    %1623 = vmatpush1.msra.mxu0 0.0
    %1624 = vmatprep.subr.mxu0 0.0
    %1625 = vmatpush1.msra.mxu0 0.0
    %1626 = vmatprep.subr.mxu0 0.0
    %1627 = vmatpush1.msra.mxu0 0.0
    %1628 = vmatprep.subr.mxu0 0.0
    %1629 = vmatpush1.msra.mxu0 0.0
    %1630 = vmatprep.subr.mxu0 0.0
    %1631 = vmatpush1.msra.mxu0 0.0
    %1632 = vmatprep.subr.mxu0 0.0
    %1633 = vmatpush1.msra.mxu0 0.0
    %1634 = vmatprep.subr.mxu0 0.0
    %1635 = vmatpush1.msra.mxu0 0.0
    %1636 = vmatprep.subr.mxu0 0.0
    %1637 = vmatpush1.msra.mxu0 0.0
    %1638 = vmatprep.subr.mxu0 0.0
    %1639 = vmatpush1.msra.mxu0 0.0
    %1640 = vmatprep.subr.mxu0 0.0
    %1641 = vmatpush1.msra.mxu0 0.0
    %1642 = vmatprep.mubr.f32.mxu0 0.0
    %1643 = vmatmul.mubr.f32.gmra.mrb[0].mxu0 %v1576
    %v1644 = vpop.f32.mrb[0].mxu0
    %v1645 = vadd.f32 0.0, %v1644
    %v1646 = vpop.f32.mrb[0].mxu0
    %1647 = vdwg.mxu0
    %v1648 = vadd.f32 %v1148, %v1645
    %v1649 = vxor.u32 %v1648, 2147483648
    %v1650 = vmul.f32 %v1649, 1.442695
    %v1651 = vpow.pop %v1650
    %v1652 = vadd.f32 %v1651, 1.0
    %v1653 = vrcp.pop %v1652
    %v1654 = vmul.f32 1.0, %v1653
    %v1655 = vtanh.pop %v1648
    %v1656 = vmul.f32 %v1654, %v1564
    %1658 = vrot.lane.b32.xlu0 %v1655, 64
    %v1659 = vpop.permute.xlu0 %1658
    %v1661 = vmul.f32 %v1654, %v1659
    %1663 = vrot.lane.b32.xlu0 %v1661, 32
    %v1664 = vpop.permute.xlu0 %1663
    %v1666 = vadd.f32 %v1656, %v1664
    %v1667 = vtanh.pop %v1666
    %1669 = vrot.lane.b32.xlu0 %v1667, 64
    %v1670 = vpop.permute.xlu0 %1669
    %v1672 = vmul.f32 %v1654, %v1670
    %1674 = vrot.lane.b32.xlu0 %v1672, 32
    %v1675 = vpop.permute.xlu0 %1674
    %1677 = vst.msk [vmem:[#allocation2 + $0x20] sm:$0xff] %vm200, %v1675
    %v1678 = vsel %vm200, %v1675, 0
    %1680 = vmatprep.subr.mxu0 0.0
    %1681 = vmatpush1.msra.mxu0 %v1166
    %1682 = vmatprep.subr.mxu0 0.0
    %1683 = vmatpush1.msra.mxu0 %v1167
    %1684 = vmatprep.subr.mxu0 0.0
    %1685 = vmatpush1.msra.mxu0 %v1168
    %1686 = vmatprep.subr.mxu0 0.0
    %1687 = vmatpush1.msra.mxu0 %v1169
    %1688 = vmatprep.subr.mxu0 0.0
    %1689 = vmatpush1.msra.mxu0 0.0
    %1690 = vmatprep.subr.mxu0 0.0
    %1691 = vmatpush1.msra.mxu0 0.0
    %1692 = vmatprep.subr.mxu0 0.0
    %1693 = vmatpush1.msra.mxu0 0.0
    %1694 = vmatprep.subr.mxu0 0.0
    %1695 = vmatpush1.msra.mxu0 0.0
    %1696 = vmatprep.subr.mxu0 0.0
    %1697 = vmatpush1.msra.mxu0 0.0
    %1698 = vmatprep.subr.mxu0 0.0
    %1699 = vmatpush1.msra.mxu0 0.0
    %1700 = vmatprep.subr.mxu0 0.0
    %1701 = vmatpush1.msra.mxu0 0.0
    %1702 = vmatprep.subr.mxu0 0.0
    %1703 = vmatpush1.msra.mxu0 0.0
    %1704 = vmatprep.subr.mxu0 0.0
    %1705 = vmatpush1.msra.mxu0 0.0
    %1706 = vmatprep.subr.mxu0 0.0
    %1707 = vmatpush1.msra.mxu0 0.0
    %1708 = vmatprep.subr.mxu0 0.0
    %1709 = vmatpush1.msra.mxu0 0.0
    %1710 = vmatprep.subr.mxu0 0.0
    %1711 = vmatpush1.msra.mxu0 0.0
    %1712 = vmatprep.subr.mxu0 0.0
    %1713 = vmatpush1.msra.mxu0 0.0
    %1714 = vmatprep.subr.mxu0 0.0
    %1715 = vmatpush1.msra.mxu0 0.0
    %1716 = vmatprep.subr.mxu0 0.0
    %1717 = vmatpush1.msra.mxu0 0.0
    %1718 = vmatprep.subr.mxu0 0.0
    %1719 = vmatpush1.msra.mxu0 0.0
    %1720 = vmatprep.subr.mxu0 0.0
    %1721 = vmatpush1.msra.mxu0 0.0
    %1722 = vmatprep.subr.mxu0 0.0
    %1723 = vmatpush1.msra.mxu0 0.0
    %1724 = vmatprep.subr.mxu0 0.0
    %1725 = vmatpush1.msra.mxu0 0.0
    %1726 = vmatprep.subr.mxu0 0.0
    %1727 = vmatpush1.msra.mxu0 0.0
    %1728 = vmatprep.subr.mxu0 0.0
    %1729 = vmatpush1.msra.mxu0 0.0
    %1730 = vmatprep.subr.mxu0 0.0
    %1731 = vmatpush1.msra.mxu0 0.0
    %1732 = vmatprep.subr.mxu0 0.0
    %1733 = vmatpush1.msra.mxu0 0.0
    %1734 = vmatprep.subr.mxu0 0.0
    %1735 = vmatpush1.msra.mxu0 0.0
    %1736 = vmatprep.subr.mxu0 0.0
    %1737 = vmatpush1.msra.mxu0 0.0
    %1738 = vmatprep.subr.mxu0 0.0
    %1739 = vmatpush1.msra.mxu0 0.0
    %1740 = vmatprep.subr.mxu0 0.0
    %1741 = vmatpush1.msra.mxu0 0.0
    %1742 = vmatprep.subr.mxu0 0.0
    %1743 = vmatpush1.msra.mxu0 0.0
    %1744 = vmatprep.mubr.f32.mxu0 0.0
    %1745 = vmatmul.mubr.f32.gmra.mrb[0].mxu0 %v1678
    %v1746 = vpop.f32.mrb[0].mxu0
    %v1747 = vadd.f32 0.0, %v1746
    %v1748 = vpop.f32.mrb[0].mxu0
    %1749 = vdwg.mxu0
    %v1750 = vadd.f32 %v1153, %v1747
    %v1751 = vxor.u32 %v1750, 2147483648
    %v1752 = vmul.f32 %v1751, 1.442695
    %v1753 = vpow.pop %v1752
    %v1754 = vadd.f32 %v1753, 1.0
    %v1755 = vrcp.pop %v1754
    %v1756 = vmul.f32 1.0, %v1755
    %v1757 = vtanh.pop %v1750
    %v1758 = vmul.f32 %v1756, %v1666
    %1760 = vrot.lane.b32.xlu0 %v1757, 64
    %v1761 = vpop.permute.xlu0 %1760
    %v1763 = vmul.f32 %v1756, %v1761
    %1765 = vrot.lane.b32.xlu0 %v1763, 32
    %v1766 = vpop.permute.xlu0 %1765
    %v1768 = vadd.f32 %v1758, %v1766
    %v1769 = vtanh.pop %v1768
    %1771 = vrot.lane.b32.xlu0 %v1769, 64
    %v1772 = vpop.permute.xlu0 %1771
    %v1774 = vmul.f32 %v1756, %v1772
    %1776 = vrot.lane.b32.xlu0 %v1774, 32
    %v1777 = vpop.permute.xlu0 %1776
    %1779 = vst.msk [vmem:[#allocation2 + $0x28] sm:$0xff] %vm200, %v1777
    %v1780 = vsel %vm200, %v1777, 0
    %1782 = vmatprep.subr.mxu0 0.0
    %1783 = vmatpush1.msra.mxu0 %v1166
    %1784 = vmatprep.subr.mxu0 0.0
    %1785 = vmatpush1.msra.mxu0 %v1167
    %1786 = vmatprep.subr.mxu0 0.0
    %1787 = vmatpush1.msra.mxu0 %v1168
    %1788 = vmatprep.subr.mxu0 0.0
    %1789 = vmatpush1.msra.mxu0 %v1169
    %1790 = vmatprep.subr.mxu0 0.0
    %1791 = vmatpush1.msra.mxu0 0.0
    %1792 = vmatprep.subr.mxu0 0.0
    %1793 = vmatpush1.msra.mxu0 0.0
    %1794 = vmatprep.subr.mxu0 0.0
    %1795 = vmatpush1.msra.mxu0 0.0
    %1796 = vmatprep.subr.mxu0 0.0
    %1797 = vmatpush1.msra.mxu0 0.0
    %1798 = vmatprep.subr.mxu0 0.0
    %1799 = vmatpush1.msra.mxu0 0.0
    %1800 = vmatprep.subr.mxu0 0.0
    %1801 = vmatpush1.msra.mxu0 0.0
    %1802 = vmatprep.subr.mxu0 0.0
    %1803 = vmatpush1.msra.mxu0 0.0
    %1804 = vmatprep.subr.mxu0 0.0
    %1805 = vmatpush1.msra.mxu0 0.0
    %1806 = vmatprep.subr.mxu0 0.0
    %1807 = vmatpush1.msra.mxu0 0.0
    %1808 = vmatprep.subr.mxu0 0.0
    %1809 = vmatpush1.msra.mxu0 0.0
    %1810 = vmatprep.subr.mxu0 0.0
    %1811 = vmatpush1.msra.mxu0 0.0
    %1812 = vmatprep.subr.mxu0 0.0
    %1813 = vmatpush1.msra.mxu0 0.0
    %1814 = vmatprep.subr.mxu0 0.0
    %1815 = vmatpush1.msra.mxu0 0.0
    %1816 = vmatprep.subr.mxu0 0.0
    %1817 = vmatpush1.msra.mxu0 0.0
    %1818 = vmatprep.subr.mxu0 0.0
    %1819 = vmatpush1.msra.mxu0 0.0
    %1820 = vmatprep.subr.mxu0 0.0
    %1821 = vmatpush1.msra.mxu0 0.0
    %1822 = vmatprep.subr.mxu0 0.0
    %1823 = vmatpush1.msra.mxu0 0.0
    %1824 = vmatprep.subr.mxu0 0.0
    %1825 = vmatpush1.msra.mxu0 0.0
    %1826 = vmatprep.subr.mxu0 0.0
    %1827 = vmatpush1.msra.mxu0 0.0
    %1828 = vmatprep.subr.mxu0 0.0
    %1829 = vmatpush1.msra.mxu0 0.0
    %1830 = vmatprep.subr.mxu0 0.0
    %1831 = vmatpush1.msra.mxu0 0.0
    %1832 = vmatprep.subr.mxu0 0.0
    %1833 = vmatpush1.msra.mxu0 0.0
    %1834 = vmatprep.subr.mxu0 0.0
    %1835 = vmatpush1.msra.mxu0 0.0
    %1836 = vmatprep.subr.mxu0 0.0
    %1837 = vmatpush1.msra.mxu0 0.0
    %1838 = vmatprep.subr.mxu0 0.0
    %1839 = vmatpush1.msra.mxu0 0.0
    %1840 = vmatprep.subr.mxu0 0.0
    %1841 = vmatpush1.msra.mxu0 0.0
    %1842 = vmatprep.subr.mxu0 0.0
    %1843 = vmatpush1.msra.mxu0 0.0
    %1844 = vmatprep.subr.mxu0 0.0
    %1845 = vmatpush1.msra.mxu0 0.0
    %1846 = vmatprep.mubr.f32.mxu0 0.0
    %1847 = vmatmul.mubr.f32.gmra.mrb[0].mxu0 %v1780
    %v1848 = vpop.f32.mrb[0].mxu0
    %v1849 = vadd.f32 0.0, %v1848
    %v1850 = vpop.f32.mrb[0].mxu0
    %1851 = vdwg.mxu0
    %v1852 = vadd.f32 %v1158, %v1849
    %v1853 = vxor.u32 %v1852, 2147483648
    %v1854 = vmul.f32 %v1853, 1.442695
    %v1855 = vpow.pop %v1854
    %v1856 = vadd.f32 %v1855, 1.0
    %v1857 = vrcp.pop %v1856
    %v1858 = vmul.f32 1.0, %v1857
    %v1859 = vtanh.pop %v1852
    %v1860 = vmul.f32 %v1858, %v1768
    %1862 = vrot.lane.b32.xlu0 %v1859, 64
    %v1863 = vpop.permute.xlu0 %1862
    %v1865 = vmul.f32 %v1858, %v1863
    %1867 = vrot.lane.b32.xlu0 %v1865, 32
    %v1868 = vpop.permute.xlu0 %1867
    %v1870 = vadd.f32 %v1860, %v1868
    %v1871 = vtanh.pop %v1870
    %1873 = vrot.lane.b32.xlu0 %v1871, 64
    %v1874 = vpop.permute.xlu0 %1873
    %v1876 = vmul.f32 %v1858, %v1874
    %1878 = vrot.lane.b32.xlu0 %v1876, 32
    %v1879 = vpop.permute.xlu0 %1878
    %1881 = vst.msk [vmem:[#allocation2 + $0x30] sm:$0xff] %vm200, %v1879
    %v1882 = vsel %vm200, %v1879, 0
    %1884 = vmatprep.subr.mxu0 0.0
    %1885 = vmatpush1.msra.mxu0 %v1166
    %1886 = vmatprep.subr.mxu0 0.0
    %1887 = vmatpush1.msra.mxu0 %v1167
    %1888 = vmatprep.subr.mxu0 0.0
    %1889 = vmatpush1.msra.mxu0 %v1168
    %1890 = vmatprep.subr.mxu0 0.0
    %1891 = vmatpush1.msra.mxu0 %v1169
    %1892 = vmatprep.subr.mxu0 0.0
    %1893 = vmatpush1.msra.mxu0 0.0
    %1894 = vmatprep.subr.mxu0 0.0
    %1895 = vmatpush1.msra.mxu0 0.0
    %1896 = vmatprep.subr.mxu0 0.0
    %1897 = vmatpush1.msra.mxu0 0.0
    %1898 = vmatprep.subr.mxu0 0.0
    %1899 = vmatpush1.msra.mxu0 0.0
    %1900 = vmatprep.subr.mxu0 0.0
    %1901 = vmatpush1.msra.mxu0 0.0
    %1902 = vmatprep.subr.mxu0 0.0
    %1903 = vmatpush1.msra.mxu0 0.0
    %1904 = vmatprep.subr.mxu0 0.0
    %1905 = vmatpush1.msra.mxu0 0.0
    %1906 = vmatprep.subr.mxu0 0.0
    %1907 = vmatpush1.msra.mxu0 0.0
    %1908 = vmatprep.subr.mxu0 0.0
    %1909 = vmatpush1.msra.mxu0 0.0
    %1910 = vmatprep.subr.mxu0 0.0
    %1911 = vmatpush1.msra.mxu0 0.0
    %1912 = vmatprep.subr.mxu0 0.0
    %1913 = vmatpush1.msra.mxu0 0.0
    %1914 = vmatprep.subr.mxu0 0.0
    %1915 = vmatpush1.msra.mxu0 0.0
    %1916 = vmatprep.subr.mxu0 0.0
    %1917 = vmatpush1.msra.mxu0 0.0
    %1918 = vmatprep.subr.mxu0 0.0
    %1919 = vmatpush1.msra.mxu0 0.0
    %1920 = vmatprep.subr.mxu0 0.0
    %1921 = vmatpush1.msra.mxu0 0.0
    %1922 = vmatprep.subr.mxu0 0.0
    %1923 = vmatpush1.msra.mxu0 0.0
    %1924 = vmatprep.subr.mxu0 0.0
    %1925 = vmatpush1.msra.mxu0 0.0
    %1926 = vmatprep.subr.mxu0 0.0
    %1927 = vmatpush1.msra.mxu0 0.0
    %1928 = vmatprep.subr.mxu0 0.0
    %1929 = vmatpush1.msra.mxu0 0.0
    %1930 = vmatprep.subr.mxu0 0.0
    %1931 = vmatpush1.msra.mxu0 0.0
    %1932 = vmatprep.subr.mxu0 0.0
    %1933 = vmatpush1.msra.mxu0 0.0
    %1934 = vmatprep.subr.mxu0 0.0
    %1935 = vmatpush1.msra.mxu0 0.0
    %1936 = vmatprep.subr.mxu0 0.0
    %1937 = vmatpush1.msra.mxu0 0.0
    %1938 = vmatprep.subr.mxu0 0.0
    %1939 = vmatpush1.msra.mxu0 0.0
    %1940 = vmatprep.subr.mxu0 0.0
    %1941 = vmatpush1.msra.mxu0 0.0
    %1942 = vmatprep.subr.mxu0 0.0
    %1943 = vmatpush1.msra.mxu0 0.0
    %1944 = vmatprep.subr.mxu0 0.0
    %1945 = vmatpush1.msra.mxu0 0.0
    %1946 = vmatprep.subr.mxu0 0.0
    %1947 = vmatpush1.msra.mxu0 0.0
    %1948 = vmatprep.mubr.f32.mxu0 0.0
    %1949 = vmatmul.mubr.f32.gmra.mrb[0].mxu0 %v1882
    %v1950 = vpop.f32.mrb[0].mxu0
    %v1951 = vadd.f32 0.0, %v1950
    %v1952 = vpop.f32.mrb[0].mxu0
    %1953 = vdwg.mxu0
    %v1954 = vadd.f32 %v1163, %v1951
    %v1955 = vxor.u32 %v1954, 2147483648
    %v1956 = vmul.f32 %v1955, 1.442695
    %v1957 = vpow.pop %v1956
    %v1958 = vadd.f32 %v1957, 1.0
    %v1959 = vrcp.pop %v1958
    %v1960 = vmul.f32 1.0, %v1959
    %v1961 = vtanh.pop %v1954
    %v1962 = vmul.f32 %v1960, %v1870
    %1964 = vrot.lane.b32.xlu0 %v1961, 64
    %v1965 = vpop.permute.xlu0 %1964
    %v1967 = vmul.f32 %v1960, %v1965
    %1969 = vrot.lane.b32.xlu0 %v1967, 32
    %v1970 = vpop.permute.xlu0 %1969
    %v1972 = vadd.f32 %v1962, %v1970
    %v1973 = vtanh.pop %v1972
    %1975 = vrot.lane.b32.xlu0 %v1973, 64
    %v1976 = vpop.permute.xlu0 %1975
    %v1978 = vmul.f32 %v1960, %v1976
    %1980 = vrot.lane.b32.xlu0 %v1978, 32
    %v1981 = vpop.permute.xlu0 %1980
    %1983 = vst.msk [vmem:[#allocation2 + $0x38] sm:$0xff] %vm200, %v1981
    %v1984 = vld [vmem:[#allocation2] sm:$0xff]
    %v1985 = vld [vmem:[#allocation2 + $0x8] sm:$0xff]
    %v1986 = vld [vmem:[#allocation2 + $0x10] sm:$0xff]
    %v1987 = vld [vmem:[#allocation2 + $0x18] sm:$0xff]
    %v1988 = vld [vmem:[#allocation2 + $0x20] sm:$0xff]
    %v1989 = vld [vmem:[#allocation2 + $0x28] sm:$0xff]
    %v1990 = vld [vmem:[#allocation2 + $0x30] sm:$0xff]
    %v1991 = vld [vmem:[#allocation2 + $0x38] sm:$0xff]
    %v1992 = vld [vmem:[%s7] sm:$0xff]
    %v1993 = vld [vmem:[%s7 + $0x8] sm:$0xff]
    %v1994 = vld [vmem:[%s7 + $0x10] sm:$0xff]
    %v1995 = vld [vmem:[%s7 + $0x18] sm:$0xff]
    %v1996 = vld [vmem:[%s8] sm:$0x1]
    %v1998 = vlaneseq
    %v1999 = vshrl.u32 %v1998, 7
    %v2000 = vsub.s32 0, %v1999
    %v2001 = vrot.slane %v1996, %v2000
    %v2004 = vsel %vm200, %v1984, 0
    %v2007 = vsel %vm200, %v1985, 0
    %v2010 = vsel %vm200, %v1986, 0
    %v2013 = vsel %vm200, %v1987, 0
    %v2016 = vsel %vm200, %v1988, 0
    %v2019 = vsel %vm200, %v1989, 0
    %v2022 = vsel %vm200, %v1990, 0
    %v2025 = vsel %vm200, %v1991, 0
    %2027 = vmatprep.subr.mxu0 0.0
    %2028 = vmatpush1.msra.mxu0 %v1992
    %2029 = vmatprep.subr.mxu0 0.0
    %2030 = vmatpush1.msra.mxu0 %v1993
    %2031 = vmatprep.subr.mxu0 0.0
    %2032 = vmatpush1.msra.mxu0 %v1994
    %2033 = vmatprep.subr.mxu0 0.0
    %2034 = vmatpush1.msra.mxu0 %v1995
    %2035 = vmatprep.subr.mxu0 0.0
    %2036 = vmatpush1.msra.mxu0 0.0
    %2037 = vmatprep.subr.mxu0 0.0
    %2038 = vmatpush1.msra.mxu0 0.0
    %2039 = vmatprep.subr.mxu0 0.0
    %2040 = vmatpush1.msra.mxu0 0.0
    %2041 = vmatprep.subr.mxu0 0.0
    %2042 = vmatpush1.msra.mxu0 0.0
    %2043 = vmatprep.subr.mxu0 0.0
    %2044 = vmatpush1.msra.mxu0 0.0
    %2045 = vmatprep.subr.mxu0 0.0
    %2046 = vmatpush1.msra.mxu0 0.0
    %2047 = vmatprep.subr.mxu0 0.0
    %2048 = vmatpush1.msra.mxu0 0.0
    %2049 = vmatprep.subr.mxu0 0.0
    %2050 = vmatpush1.msra.mxu0 0.0
    %2051 = vmatprep.subr.mxu0 0.0
    %2052 = vmatpush1.msra.mxu0 0.0
    %2053 = vmatprep.subr.mxu0 0.0
    %2054 = vmatpush1.msra.mxu0 0.0
    %2055 = vmatprep.subr.mxu0 0.0
    %2056 = vmatpush1.msra.mxu0 0.0
    %2057 = vmatprep.subr.mxu0 0.0
    %2058 = vmatpush1.msra.mxu0 0.0
    %2059 = vmatprep.subr.mxu0 0.0
    %2060 = vmatpush1.msra.mxu0 0.0
    %2061 = vmatprep.subr.mxu0 0.0
    %2062 = vmatpush1.msra.mxu0 0.0
    %2063 = vmatprep.subr.mxu0 0.0
    %2064 = vmatpush1.msra.mxu0 0.0
    %2065 = vmatprep.subr.mxu0 0.0
    %2066 = vmatpush1.msra.mxu0 0.0
    %2067 = vmatprep.subr.mxu0 0.0
    %2068 = vmatpush1.msra.mxu0 0.0
    %2069 = vmatprep.subr.mxu0 0.0
    %2070 = vmatpush1.msra.mxu0 0.0
    %2071 = vmatprep.subr.mxu0 0.0
    %2072 = vmatpush1.msra.mxu0 0.0
    %2073 = vmatprep.subr.mxu0 0.0
    %2074 = vmatpush1.msra.mxu0 0.0
    %2075 = vmatprep.subr.mxu0 0.0
    %2076 = vmatpush1.msra.mxu0 0.0
    %2077 = vmatprep.subr.mxu0 0.0
    %2078 = vmatpush1.msra.mxu0 0.0
    %2079 = vmatprep.subr.mxu0 0.0
    %2080 = vmatpush1.msra.mxu0 0.0
    %2081 = vmatprep.subr.mxu0 0.0
    %2082 = vmatpush1.msra.mxu0 0.0
    %2083 = vmatprep.subr.mxu0 0.0
    %2084 = vmatpush1.msra.mxu0 0.0
    %2085 = vmatprep.subr.mxu0 0.0
    %2086 = vmatpush1.msra.mxu0 0.0
    %2087 = vmatprep.subr.mxu0 0.0
    %2088 = vmatpush1.msra.mxu0 0.0
    %2089 = vmatprep.subr.mxu0 0.0
    %2090 = vmatpush1.msra.mxu0 0.0
    %2091 = vmatprep.mubr.f32.mxu0 0.0
    %2092 = vmatmul.mubr.f32.gmra.mrb[0].mxu0 %v2004
    %v2093 = vpop.f32.mrb[0].mxu0
    %v2094 = vadd.f32 %v2001, %v2093
    %v2095 = vpop.f32.mrb[0].mxu0
    %2096 = vmatprep.mubr.f32.mxu0 0.0
    %2097 = vmatmul.mubr.f32.gmra.mrb[0].mxu0 %v2007
    %v2098 = vpop.f32.mrb[0].mxu0
    %v2099 = vadd.f32 %v2001, %v2098
    %v2100 = vpop.f32.mrb[0].mxu0
    %2101 = vmatprep.mubr.f32.mxu0 0.0
    %2102 = vmatmul.mubr.f32.gmra.mrb[0].mxu0 %v2010
    %v2103 = vpop.f32.mrb[0].mxu0
    %v2104 = vadd.f32 %v2001, %v2103
    %v2105 = vpop.f32.mrb[0].mxu0
    %2106 = vmatprep.mubr.f32.mxu0 0.0
    %2107 = vmatmul.mubr.f32.gmra.mrb[0].mxu0 %v2013
    %v2108 = vpop.f32.mrb[0].mxu0
    %v2109 = vadd.f32 %v2001, %v2108
    %v2110 = vpop.f32.mrb[0].mxu0
    %2111 = vmatprep.mubr.f32.mxu0 0.0
    %2112 = vmatmul.mubr.f32.gmra.mrb[0].mxu0 %v2016
    %v2113 = vpop.f32.mrb[0].mxu0
    %v2114 = vadd.f32 %v2001, %v2113
    %v2115 = vpop.f32.mrb[0].mxu0
    %2116 = vmatprep.mubr.f32.mxu0 0.0
    %2117 = vmatmul.mubr.f32.gmra.mrb[0].mxu0 %v2019
    %v2118 = vpop.f32.mrb[0].mxu0
    %v2119 = vadd.f32 %v2001, %v2118
    %v2120 = vpop.f32.mrb[0].mxu0
    %2121 = vmatprep.mubr.f32.mxu0 0.0
    %2122 = vmatmul.mubr.f32.gmra.mrb[0].mxu0 %v2022
    %v2123 = vpop.f32.mrb[0].mxu0
    %v2124 = vadd.f32 %v2001, %v2123
    %v2125 = vpop.f32.mrb[0].mxu0
    %2126 = vmatprep.mubr.f32.mxu0 0.0
    %2127 = vmatmul.mubr.f32.gmra.mrb[0].mxu0 %v2025
    %v2128 = vpop.f32.mrb[0].mxu0
    %v2129 = vadd.f32 %v2001, %v2128
    %v2130 = vpop.f32.mrb[0].mxu0
    %2131 = vdwg.mxu0
    %v2132 = vmax.f32 %v2094, 0.0
    %v2133 = vmax.f32 %v2099, 0.0
    %v2134 = vmax.f32 %v2104, 0.0
    %v2135 = vmax.f32 %v2109, 0.0
    %v2136 = vmax.f32 %v2114, 0.0
    %v2137 = vmax.f32 %v2119, 0.0
    %v2138 = vmax.f32 %v2124, 0.0
    %v2139 = vmax.f32 %v2129, 0.0
    %v2140 = vld [vmem:[%s9] sm:$0xff]
    %v2141 = vld [vmem:[%s9 + $0x8] sm:$0xff]
    %v2142 = vld [vmem:[%s9 + $0x10] sm:$0xff]
    %v2143 = vld [vmem:[%s9 + $0x18] sm:$0xff]
    %v2144 = vld [vmem:[%s9 + $0x20] sm:$0xff]
    %v2145 = vld [vmem:[%s9 + $0x28] sm:$0xff]
    %v2146 = vld [vmem:[%s9 + $0x30] sm:$0xff]
    %v2147 = vld [vmem:[%s9 + $0x38] sm:$0xff]
    %v2148 = vld [vmem:[%s9 + $0x40] sm:$0xff]
    %v2149 = vld [vmem:[%s9 + $0x48] sm:$0xff]
    %v2150 = vld [vmem:[%s9 + $0x50] sm:$0xff]
    %v2151 = vld [vmem:[%s9 + $0x58] sm:$0xff]
    %v2152 = vld [vmem:[%s9 + $0x60] sm:$0xff]
    %v2153 = vld [vmem:[%s9 + $0x68] sm:$0xff]
    %v2154 = vld [vmem:[%s9 + $0x70] sm:$0xff]
    %v2155 = vld [vmem:[%s9 + $0x78] sm:$0xff]
    %s2156 = sld [smem:[#allocation3]]
    %v2157 = vstv %s2156
    %2158 = vmatprep.subr.mxu0 0.0
    %2159 = vmatpush1.msra.mxu0 %v2140
    %2160 = vmatprep.subr.mxu0 0.0
    %2161 = vmatpush1.msra.mxu0 %v2141
    %2162 = vmatprep.subr.mxu0 0.0
    %2163 = vmatpush1.msra.mxu0 %v2142
    %2164 = vmatprep.subr.mxu0 0.0
    %2165 = vmatpush1.msra.mxu0 %v2143
    %2166 = vmatprep.subr.mxu0 0.0
    %2167 = vmatpush1.msra.mxu0 %v2144
    %2168 = vmatprep.subr.mxu0 0.0
    %2169 = vmatpush1.msra.mxu0 %v2145
    %2170 = vmatprep.subr.mxu0 0.0
    %2171 = vmatpush1.msra.mxu0 %v2146
    %2172 = vmatprep.subr.mxu0 0.0
    %2173 = vmatpush1.msra.mxu0 %v2147
    %2174 = vmatprep.subr.mxu0 0.0
    %2175 = vmatpush1.msra.mxu0 %v2148
    %2176 = vmatprep.subr.mxu0 0.0
    %2177 = vmatpush1.msra.mxu0 %v2149
    %2178 = vmatprep.subr.mxu0 0.0
    %2179 = vmatpush1.msra.mxu0 %v2150
    %2180 = vmatprep.subr.mxu0 0.0
    %2181 = vmatpush1.msra.mxu0 %v2151
    %2182 = vmatprep.subr.mxu0 0.0
    %2183 = vmatpush1.msra.mxu0 %v2152
    %2184 = vmatprep.subr.mxu0 0.0
    %2185 = vmatpush1.msra.mxu0 %v2153
    %2186 = vmatprep.subr.mxu0 0.0
    %2187 = vmatpush1.msra.mxu0 %v2154
    %2188 = vmatprep.subr.mxu0 0.0
    %2189 = vmatpush1.msra.mxu0 %v2155
    %2190 = vmatprep.subr.mxu0 0.0
    %2191 = vmatpush1.msra.mxu0 0.0
    %2192 = vmatprep.subr.mxu0 0.0
    %2193 = vmatpush1.msra.mxu0 0.0
    %2194 = vmatprep.subr.mxu0 0.0
    %2195 = vmatpush1.msra.mxu0 0.0
    %2196 = vmatprep.subr.mxu0 0.0
    %2197 = vmatpush1.msra.mxu0 0.0
    %2198 = vmatprep.subr.mxu0 0.0
    %2199 = vmatpush1.msra.mxu0 0.0
    %2200 = vmatprep.subr.mxu0 0.0
    %2201 = vmatpush1.msra.mxu0 0.0
    %2202 = vmatprep.subr.mxu0 0.0
    %2203 = vmatpush1.msra.mxu0 0.0
    %2204 = vmatprep.subr.mxu0 0.0
    %2205 = vmatpush1.msra.mxu0 0.0
    %2206 = vmatprep.subr.mxu0 0.0
    %2207 = vmatpush1.msra.mxu0 0.0
    %2208 = vmatprep.subr.mxu0 0.0
    %2209 = vmatpush1.msra.mxu0 0.0
    %2210 = vmatprep.subr.mxu0 0.0
    %2211 = vmatpush1.msra.mxu0 0.0
    %2212 = vmatprep.subr.mxu0 0.0
    %2213 = vmatpush1.msra.mxu0 0.0
    %2214 = vmatprep.subr.mxu0 0.0
    %2215 = vmatpush1.msra.mxu0 0.0
    %2216 = vmatprep.subr.mxu0 0.0
    %2217 = vmatpush1.msra.mxu0 0.0
    %2218 = vmatprep.subr.mxu0 0.0
    %2219 = vmatpush1.msra.mxu0 0.0
    %2220 = vmatprep.subr.mxu0 0.0
    %2221 = vmatpush1.msra.mxu0 0.0
    %2222 = vmatprep.mubr.f32.mxu0 0.0
    %2223 = vmatmul.mubr.f32.gmra.mrb[0].mxu0 %v2132
    %v2224 = vpop.f32.mrb[0].mxu0
    %v2225 = vadd.f32 %v2157, %v2224
    %v2226 = vpop.f32.mrb[0].mxu0
    %2227 = vmatprep.mubr.f32.mxu0 0.0
    %2228 = vmatmul.mubr.f32.gmra.mrb[0].mxu0 %v2133
    %v2229 = vpop.f32.mrb[0].mxu0
    %v2230 = vadd.f32 %v2157, %v2229
    %v2231 = vpop.f32.mrb[0].mxu0
    %2232 = vmatprep.mubr.f32.mxu0 0.0
    %2233 = vmatmul.mubr.f32.gmra.mrb[0].mxu0 %v2134
    %v2234 = vpop.f32.mrb[0].mxu0
    %v2235 = vadd.f32 %v2157, %v2234
    %v2236 = vpop.f32.mrb[0].mxu0
    %2237 = vmatprep.mubr.f32.mxu0 0.0
    %2238 = vmatmul.mubr.f32.gmra.mrb[0].mxu0 %v2135
    %v2239 = vpop.f32.mrb[0].mxu0
    %v2240 = vadd.f32 %v2157, %v2239
    %v2241 = vpop.f32.mrb[0].mxu0
    %2242 = vmatprep.mubr.f32.mxu0 0.0
    %2243 = vmatmul.mubr.f32.gmra.mrb[0].mxu0 %v2136
    %v2244 = vpop.f32.mrb[0].mxu0
    %v2245 = vadd.f32 %v2157, %v2244
    %v2246 = vpop.f32.mrb[0].mxu0
    %2247 = vmatprep.mubr.f32.mxu0 0.0
    %2248 = vmatmul.mubr.f32.gmra.mrb[0].mxu0 %v2137
    %v2249 = vpop.f32.mrb[0].mxu0
    %v2250 = vadd.f32 %v2157, %v2249
    %v2251 = vpop.f32.mrb[0].mxu0
    %2252 = vmatprep.mubr.f32.mxu0 0.0
    %2253 = vmatmul.mubr.f32.gmra.mrb[0].mxu0 %v2138
    %v2254 = vpop.f32.mrb[0].mxu0
    %v2255 = vadd.f32 %v2157, %v2254
    %v2256 = vpop.f32.mrb[0].mxu0
    %2257 = vmatprep.mubr.f32.mxu0 0.0
    %2258 = vmatmul.mubr.f32.gmra.mrb[0].mxu0 %v2139
    %v2259 = vpop.f32.mrb[0].mxu0
    %v2260 = vadd.f32 %v2157, %v2259
    %v2261 = vpop.f32.mrb[0].mxu0
    %2262 = vdwg.mxu0
    %v2263 = vmax.f32 %v2225, %v2230
    %v2264 = vmax.f32 %v2263, %v2235
    %v2265 = vmax.f32 %v2264, %v2240
    %v2266 = vmax.f32 %v2265, %v2245
    %v2267 = vmax.f32 %v2266, %v2250
    %v2268 = vmax.f32 %v2267, %v2255
    %v2269 = vmax.f32 %v2268, %v2260
    %v2270 = vsub.f32 %v2225, %v2269
    %v2271 = vmul.f32 %v2270, 1.442695
    %v2272 = vpow.pop %v2271
    %v2273 = vadd.f32 %v2272, 0.0
    %2275 = vset.pattern.permute.xlu0 0
    %2276 = vperm.xlu0 %2275, %v2272
    %v2277 = vpop.permute.xlu0 %2276
    %v2279 = vmul.f32 %v2277, %v1984
    %v2280 = vadd.f32 %v2279, 0.0
    %v2281 = vsub.f32 %v2230, %v2269
    %v2282 = vmul.f32 %v2281, 1.442695
    %v2283 = vpow.pop %v2282
    %v2284 = vadd.f32 %v2273, %v2283
    %2286 = vset.pattern.permute.xlu0 0
    %2287 = vperm.xlu0 %2286, %v2283
    %v2288 = vpop.permute.xlu0 %2287
    %v2290 = vmul.f32 %v2288, %v1985
    %v2291 = vadd.f32 %v2280, %v2290
    %v2292 = vsub.f32 %v2235, %v2269
    %v2293 = vmul.f32 %v2292, 1.442695
    %v2294 = vpow.pop %v2293
    %v2295 = vadd.f32 %v2284, %v2294
    %2297 = vset.pattern.permute.xlu0 0
    %2298 = vperm.xlu0 %2297, %v2294
    %v2299 = vpop.permute.xlu0 %2298
    %v2301 = vmul.f32 %v2299, %v1986
    %v2302 = vadd.f32 %v2291, %v2301
    %v2303 = vsub.f32 %v2240, %v2269
    %v2304 = vmul.f32 %v2303, 1.442695
    %v2305 = vpow.pop %v2304
    %v2306 = vadd.f32 %v2295, %v2305
    %2308 = vset.pattern.permute.xlu0 0
    %2309 = vperm.xlu0 %2308, %v2305
    %v2310 = vpop.permute.xlu0 %2309
    %v2312 = vmul.f32 %v2310, %v1987
    %v2313 = vadd.f32 %v2302, %v2312
    %v2314 = vsub.f32 %v2245, %v2269
    %v2315 = vmul.f32 %v2314, 1.442695
    %v2316 = vpow.pop %v2315
    %v2317 = vadd.f32 %v2306, %v2316
    %2319 = vset.pattern.permute.xlu0 0
    %2320 = vperm.xlu0 %2319, %v2316
    %v2321 = vpop.permute.xlu0 %2320
    %v2323 = vmul.f32 %v2321, %v1988
    %v2324 = vadd.f32 %v2313, %v2323
    %v2325 = vsub.f32 %v2250, %v2269
    %v2326 = vmul.f32 %v2325, 1.442695
    %v2327 = vpow.pop %v2326
    %v2328 = vadd.f32 %v2317, %v2327
    %2330 = vset.pattern.permute.xlu0 0
    %2331 = vperm.xlu0 %2330, %v2327
    %v2332 = vpop.permute.xlu0 %2331
    %v2334 = vmul.f32 %v2332, %v1989
    %v2335 = vadd.f32 %v2324, %v2334
    %v2336 = vsub.f32 %v2255, %v2269
    %v2337 = vmul.f32 %v2336, 1.442695
    %v2338 = vpow.pop %v2337
    %v2339 = vadd.f32 %v2328, %v2338
    %2341 = vset.pattern.permute.xlu0 0
    %2342 = vperm.xlu0 %2341, %v2338
    %v2343 = vpop.permute.xlu0 %2342
    %v2345 = vmul.f32 %v2343, %v1990
    %v2346 = vadd.f32 %v2335, %v2345
    %v2347 = vsub.f32 %v2260, %v2269
    %v2348 = vmul.f32 %v2347, 1.442695
    %v2349 = vpow.pop %v2348
    %v2350 = vadd.f32 %v2339, %v2349
    %2352 = vset.pattern.permute.xlu0 0
    %2353 = vperm.xlu0 %2352, %v2349
    %v2354 = vpop.permute.xlu0 %2353
    %v2356 = vmul.f32 %v2354, %v1991
    %v2357 = vadd.f32 %v2346, %v2356
    %2359 = vset.pattern.permute.xlu0 0
    %2360 = vperm.xlu0 %2359, %v2350
    %v2361 = vpop.permute.xlu0 %2360
    %v2363 = vrcp.pop %v2361
    %v2364 = vmul.f32 %v2357, %v2363
    %v2365 = vld [vmem:[%s11] sm:$0xff]
    %v2366 = vld [vmem:[%s11 + $0x8] sm:$0xff]
    %v2367 = vld [vmem:[%s11 + $0x10] sm:$0xff]
    %v2368 = vld [vmem:[%s11 + $0x18] sm:$0xff]
    %v2369 = vld [vmem:[%s12] sm:$0x1]
    %v2371 = vlaneseq
    %v2372 = vshrl.u32 %v2371, 7
    %v2373 = vsub.s32 0, %v2372
    %v2374 = vrot.slane %v2369, %v2373
    %v2377 = vsel %vm200, %v2364, 0
    %2379 = vmatprep.subr.mxu0 0.0
    %2380 = vmatpush1.msra.mxu0 %v2365
    %2381 = vmatprep.subr.mxu0 0.0
    %2382 = vmatpush1.msra.mxu0 %v2366
    %2383 = vmatprep.subr.mxu0 0.0
    %2384 = vmatpush1.msra.mxu0 %v2367
    %2385 = vmatprep.subr.mxu0 0.0
    %2386 = vmatpush1.msra.mxu0 %v2368
    %2387 = vmatprep.subr.mxu0 0.0
    %2388 = vmatpush1.msra.mxu0 0.0
    %2389 = vmatprep.subr.mxu0 0.0
    %2390 = vmatpush1.msra.mxu0 0.0
    %2391 = vmatprep.subr.mxu0 0.0
    %2392 = vmatpush1.msra.mxu0 0.0
    %2393 = vmatprep.subr.mxu0 0.0
    %2394 = vmatpush1.msra.mxu0 0.0
    %2395 = vmatprep.subr.mxu0 0.0
    %2396 = vmatpush1.msra.mxu0 0.0
    %2397 = vmatprep.subr.mxu0 0.0
    %2398 = vmatpush1.msra.mxu0 0.0
    %2399 = vmatprep.subr.mxu0 0.0
    %2400 = vmatpush1.msra.mxu0 0.0
    %2401 = vmatprep.subr.mxu0 0.0
    %2402 = vmatpush1.msra.mxu0 0.0
    %2403 = vmatprep.subr.mxu0 0.0
    %2404 = vmatpush1.msra.mxu0 0.0
    %2405 = vmatprep.subr.mxu0 0.0
    %2406 = vmatpush1.msra.mxu0 0.0
    %2407 = vmatprep.subr.mxu0 0.0
    %2408 = vmatpush1.msra.mxu0 0.0
    %2409 = vmatprep.subr.mxu0 0.0
    %2410 = vmatpush1.msra.mxu0 0.0
    %2411 = vmatprep.subr.mxu0 0.0
    %2412 = vmatpush1.msra.mxu0 0.0
    %2413 = vmatprep.subr.mxu0 0.0
    %2414 = vmatpush1.msra.mxu0 0.0
    %2415 = vmatprep.subr.mxu0 0.0
    %2416 = vmatpush1.msra.mxu0 0.0
    %2417 = vmatprep.subr.mxu0 0.0
    %2418 = vmatpush1.msra.mxu0 0.0
    %2419 = vmatprep.subr.mxu0 0.0
    %2420 = vmatpush1.msra.mxu0 0.0
    %2421 = vmatprep.subr.mxu0 0.0
    %2422 = vmatpush1.msra.mxu0 0.0
    %2423 = vmatprep.subr.mxu0 0.0
    %2424 = vmatpush1.msra.mxu0 0.0
    %2425 = vmatprep.subr.mxu0 0.0
    %2426 = vmatpush1.msra.mxu0 0.0
    %2427 = vmatprep.subr.mxu0 0.0
    %2428 = vmatpush1.msra.mxu0 0.0
    %2429 = vmatprep.subr.mxu0 0.0
    %2430 = vmatpush1.msra.mxu0 0.0
    %2431 = vmatprep.subr.mxu0 0.0
    %2432 = vmatpush1.msra.mxu0 0.0
    %2433 = vmatprep.subr.mxu0 0.0
    %2434 = vmatpush1.msra.mxu0 0.0
    %2435 = vmatprep.subr.mxu0 0.0
    %2436 = vmatpush1.msra.mxu0 0.0
    %2437 = vmatprep.subr.mxu0 0.0
    %2438 = vmatpush1.msra.mxu0 0.0
    %2439 = vmatprep.subr.mxu0 0.0
    %2440 = vmatpush1.msra.mxu0 0.0
    %2441 = vmatprep.subr.mxu0 0.0
    %2442 = vmatpush1.msra.mxu0 0.0
    %2443 = vmatprep.mubr.f32.mxu0 0.0
    %2444 = vmatmul.mubr.f32.gmra.mrb[0].mxu0 %v2377
    %v2445 = vpop.f32.mrb[0].mxu0
    %v2446 = vadd.f32 %v2374, %v2445
    %v2447 = vpop.f32.mrb[0].mxu0
    %2448 = vdwg.mxu0
    %2449 = vst [vmem:[#allocation4] sm:$0xff] %v2446
    // Predicated region
    $region54: #{tpu_custom_call.1} parent=1 // pred_check
      _
    $region55: #{tpu_custom_call.1} parent=1 // pred_check_branch
      %2451 = sbr.rel (0) target = $region57
    $region56: #{tpu_custom_call.1} parent=1 // pred_region
      %s2453 = ssub.s32 128, 128
      %2454 = vsyncadd [#allocation5], %s2453
      %s2456 = sshll.u32 [#allocation4], 4
      %s2457 = int_to_ptr.vmem [resolvable:$true] %s2456
      %2459 = dma.vmem_to_hbm [thread:$0]  %s2457, 128, %s13, [#allocation5]
    $region57: #{tpu_custom_call.1} parent=1 // pred_fallthru
      _
    // Predicated region
    $region58: #{tpu_custom_call.1} parent=1 // pred_check
      _
    $region59: #{tpu_custom_call.1} parent=1 // pred_check_branch
      %2461 = sbr.rel (0) target = $region61
    $region60: #{tpu_custom_call.1} parent=1 // pred_region
      %2462 = dma.done [#allocation5], 128
    $region61: #{tpu_custom_call.1} parent=1 // pred_fallthru
      _
    %2463 = vsyncpa [#allocation5], 1

</llo_original>
